<compile_context>
chip_gen: v7x
topology: tpu7x:2x2x1
jax: 0.10.0
libtpu: 0.0.40
codegen_flags: <defaults>
</compile_context>

<pallas_src>
import functools

import numpy as np
import jax
import jax.numpy as jnp
from jax.experimental import pallas as pl
from jax.experimental.pallas import tpu as pltpu


# --------------------------------------------------------------------------
# Fused CBAM kernel: one grid step per block of Nb images.
#   x_ref     : (Nb, C, HW) f32
#   w1t_ref   : (Cr, C)   b1_ref: (Cr, 1)   w2t_ref: (C, Cr)   b2_ref: (C, 1)
#   wsp_ref   : (K, 2K) f32 tap matrix, wsp[kh, 2*kw + ch] = conv_w[ch, kh, kw]
#   validw_ref: (K, HW) f32 0/1   validh_ref: (K, HW) f32 0/1
#   o_ref     : (Nb, C, HW) f32
# --------------------------------------------------------------------------
def _cbam_kernel(x_ref, w1t_ref, b1_ref, w2t_ref, b2_ref, wsp_ref,
                 validw_ref, validh_ref, o_ref, *, H, W, K, PAD):
    HW = H * W
    hp = jax.lax.Precision.HIGHEST

    x = x_ref[...]                                                  # (Nb, C, HW)
    nb = x.shape[0]

    # ---------------- channel gate (batched over the Nb images) -------------
    max_p = jnp.max(x, axis=2, keepdims=True)                       # (Nb, C, 1)
    avg_p = jnp.mean(x, axis=2, keepdims=True)                      # (Nb, C, 1)
    lp_p = jnp.sqrt(jnp.sum(x * x, axis=2, keepdims=True))          # (Nb, C, 1)  lp_pool2d, p=2
    lse_p = max_p + jnp.log(
        jnp.sum(jnp.exp(x - max_p), axis=2, keepdims=True))         # (Nb, C, 1)
    pools = jnp.concatenate([avg_p, max_p, lp_p, lse_p], axis=2)    # (Nb, C, 4)

    # Shared MLP applied to all four pooled descriptors of every image at once
    # (canonical batched matmuls; the weights are tiny so the broadcast is free).
    w1t = jnp.broadcast_to(w1t_ref[...], (nb,) + w1t_ref.shape)     # (Nb, Cr, C)
    w2t = jnp.broadcast_to(w2t_ref[...], (nb,) + w2t_ref.shape)     # (Nb, C, Cr)
    hmid = jnp.einsum('nrc,ncp->nrp', w1t, pools,
                      preferred_element_type=jnp.float32,
                      precision=hp) + b1_ref[...]                   # (Nb, Cr, 4)
    hmid = jnp.maximum(hmid, 0.0)
    att = jnp.einsum('ncr,nrp->ncp', w2t, hmid,
                     preferred_element_type=jnp.float32,
                     precision=hp) + b2_ref[...]                    # (Nb, C, 4)
    scale_c = jax.nn.sigmoid(jnp.sum(att, axis=2, keepdims=True))   # (Nb, C, 1)

    x_ca = x * scale_c                                              # (Nb, C, HW)

    # ---------------- spatial gate ----------------
    # Channel-wise max/mean: sublane (axis=1) reductions over C.
    cmax = jnp.max(x_ca, axis=1, keepdims=True)                     # (Nb, 1, HW)
    cmean = jnp.mean(x_ca, axis=1, keepdims=True)                   # (Nb, 1, HW)
    comp = jnp.concatenate([cmax, cmean], axis=1)                   # (Nb, 2, HW)

    # K W-shifted copies of (max, mean), masked at the W boundary, stacked on
    # the sublane axis.  Each roll handles both maps and all Nb images at once.
    pieces = []
    for kw in range(K):
        dw = kw - PAD
        if dw == 0:
            r = comp
        else:
            r = pltpu.roll(comp, (-dw) % HW, axis=2)                # out[p] = in[p + dw]
        vw_k = validw_ref[kw:kw + 1, :]                             # (1, HW) 0/1
        pieces.append(r * vw_k)                                     # (Nb, 2, HW)
    s_taps = jnp.concatenate(pieces, axis=1)                        # (Nb, 2K, HW), row = 2*kw + ch

    # All 2*K*K tap MACs in one small MXU matmul (per image, batched over Nb).
    wsp = jnp.broadcast_to(wsp_ref[...], (nb,) + wsp_ref.shape)     # (Nb, K, 2K)
    g = jnp.einsum('nks,nsh->nkh', wsp, s_taps,
                   preferred_element_type=jnp.float32,
                   precision=hp)                                    # (Nb, K, HW)

    # H-offset shift of the per-kh partial sums, masked at the H boundary, summed.
    acc = jnp.zeros((nb, 1, HW), dtype=jnp.float32)
    for kh in range(K):
        dh = kh - PAD
        gk = g[:, kh:kh + 1, :]                                     # (Nb, 1, HW)
        if dh == 0:
            gs = gk
        else:
            gs = pltpu.roll(gk, (-dh * W) % HW, axis=2)             # out[p] = g[p + dh*W]
        vh_k = validh_ref[kh:kh + 1, :]                             # (1, HW) 0/1
        acc = acc + gs * vh_k

    # BatchNorm2d(1), eval mode with default running stats:
    #   mean=0, var=1, gamma=1, beta=0  ->  y = x / sqrt(1 + eps)
    bn_inv = 1.0 / float(np.sqrt(1.0 + 1e-5))
    scale_s = jax.nn.sigmoid(acc * bn_inv)                          # (Nb, 1, HW)

    o_ref[...] = x_ca * scale_s                                     # broadcast over C


# --------------------------------------------------------------------------
# Block-size heuristic: largest per-step batch Nb (dividing N) that keeps the
# block <= ~4 MiB, only shrinking the grid below 2 steps while blocks are still
# small (<512 KiB).  4 MiB blocks double-buffered (in+out) stay well inside
# v7x's 64 MiB VMEM; on v5e/v6e (1 TC, 128 MiB) fatter blocks / short grids win.
# --------------------------------------------------------------------------
def _pick_batch_block(n, per_image_bytes,
                      min_block_bytes=512 * 1024,
                      max_block_bytes=4 * 1024 * 1024):
    nb = 1
    for d in range(1, n + 1):
        if n % d:
            continue
        if d * per_image_bytes > max_block_bytes:
            break
        if n // d < 2 and nb * per_image_bytes >= min_block_bytes:
            break  # keep >= 2 'parallel' steps (v7x megacore) once blocks are big
        nb = d
    return nb


# --------------------------------------------------------------------------
# Wrapper: NCHW in -> NCHW out (reshapes only, no transposes of x).
# --------------------------------------------------------------------------
def cbam_forward(x_nchw, params, *, kernel_size, padding, stride):
    # TODO(synk): stride != 1 changes the spatial-gate map size and cannot be
    # broadcast back onto x; only stride == 1 is supported here.
    assert stride == 1, "only stride == 1 is supported"
    assert kernel_size % 2 == 1 and padding == kernel_size // 2, \
        "spatial gate assumes a 'same' conv (odd kernel, padding == kernel_size // 2)"

    w1, b1, w2, b2, w_sp = params
    N, C, H, W = x_nchw.shape
    Cr = w1.shape[1]
    K = kernel_size
    HW = H * W

    x_flat = x_nchw.reshape(N, C, HW).astype(jnp.float32)           # free reshape of NCHW

    # Tiny MLP weights, pre-transposed for the (C, HW) layout.
    w1_t = jnp.transpose(w1).astype(jnp.float32)                    # (Cr, C)
    b1_c = b1.reshape(Cr, 1).astype(jnp.float32)                    # (Cr, 1)
    w2_t = jnp.transpose(w2).astype(jnp.float32)                    # (C, Cr)
    b2_c = b2.reshape(C, 1).astype(jnp.float32)                     # (C, 1)
    # (K, 2K) tap matrix: wsp_mat[kh, 2*kw + ch] = w_sp[ch, kh, kw]
    wsp_mat = jnp.transpose(w_sp, (1, 2, 0)).reshape(K, 2 * K).astype(jnp.float32)

    # Boundary masks, precomputed once from the static geometry.
    pos = np.arange(HW)
    wi, hi = pos % W, pos // W
    offs = np.arange(K) - padding
    valid_w = ((wi[None, :] + offs[:, None] >= 0)
               & (wi[None, :] + offs[:, None] < W)).astype(np.float32)   # (K, HW)
    valid_h = ((hi[None, :] + offs[:, None] >= 0)
               & (hi[None, :] + offs[:, None] < H)).astype(np.float32)   # (K, HW)
    valid_w = jnp.asarray(valid_w)
    valid_h = jnp.asarray(valid_h)

    per_image_bytes = C * HW * 4
    nb = _pick_batch_block(N, per_image_bytes)
    grid = (N // nb,)

    kernel = functools.partial(_cbam_kernel, H=H, W=W, K=K, PAD=padding)

    out_flat = pl.pallas_call(
        kernel,
        out_shape=jax.ShapeDtypeStruct((N, C, HW), jnp.float32),
        grid_spec=pltpu.PrefetchScalarGridSpec(
            num_scalar_prefetch=0,
            grid=grid,
            in_specs=[
                pl.BlockSpec((nb, C, HW), lambda n: (n, 0, 0)),
                pl.BlockSpec((Cr, C), lambda n: (0, 0)),
                pl.BlockSpec((Cr, 1), lambda n: (0, 0)),
                pl.BlockSpec((C, Cr), lambda n: (0, 0)),
                pl.BlockSpec((C, 1), lambda n: (0, 0)),
                pl.BlockSpec((K, 2 * K), lambda n: (0, 0)),
                pl.BlockSpec((K, HW), lambda n: (0, 0)),
                pl.BlockSpec((K, HW), lambda n: (0, 0)),
            ],
            out_specs=pl.BlockSpec((nb, C, HW), lambda n: (n, 0, 0)),
        ),
        compiler_params=pltpu.CompilerParams(
            dimension_semantics=("parallel",),
            # <= 4 MiB blocks, double-buffered in+out, plus tiny weights/masks:
            # comfortably within this limit on v5e/v6e/v7x.
            vmem_limit_bytes=32 * 1024 * 1024,
        ),
        # Output block n overwrites input block n after it has been fully read:
        # safe to alias, saving one N*C*HW*4-byte HBM buffer.
        input_output_aliases={0: 0},
    )(x_flat, w1_t, b1_c, w2_t, b2_c, wsp_mat, valid_w, valid_h)

    return out_flat.reshape(N, C, H, W)


# --------------------------------------------------------------------------
# Pure-JAX reference (for correctness check).
# --------------------------------------------------------------------------
def cbam_reference(x_nchw, params, *, kernel_size, padding, stride):
    w1, b1, w2, b2, w_sp = params
    N, C, H, W = x_nchw.shape
    x = x_nchw.astype(jnp.float32)
    hp = jax.lax.Precision.HIGHEST

    xf = x.reshape(N, C, H * W)
    avg_p = xf.mean(-1)
    max_p = xf.max(-1)
    lp_p = jnp.sqrt((xf * xf).sum(-1))
    m = xf.max(-1, keepdims=True)
    lse_p = m[..., 0] + jnp.log(jnp.exp(xf - m).sum(-1))

    att = jnp.zeros((N, C), jnp.float32)
    for p in (avg_p, max_p, lp_p, lse_p):
        hmid = jnp.maximum(jnp.dot(p, w1, precision=hp) + b1, 0.0)
        att = att + (jnp.dot(hmid, w2, precision=hp) + b2)
    x_ca = x * jax.nn.sigmoid(att)[:, :, None, None]

    cmax = x_ca.max(axis=1, keepdims=True)
    cmean = x_ca.mean(axis=1, keepdims=True)
    comp = jnp.concatenate([cmax, cmean], axis=1)                   # (N, 2, H, W)
    conv = jax.lax.conv_general_dilated(
        comp,
        w_sp.reshape(1, 2, kernel_size, kernel_size),
        window_strides=(stride, stride),
        padding=[(padding, padding), (padding, padding)],
        dimension_numbers=("NCHW", "OIHW", "NCHW"),
        precision=hp,
    )
    y = conv / jnp.sqrt(1.0 + 1e-5)
    return x_ca * jax.nn.sigmoid(y)


if __name__ == "__main__":
    N, C, H, W = 2, 16, 16, 16
    K, PADDING, STRIDE = 7, 3, 1
    REDUCTION = 8
    Cr = C // REDUCTION

    key = jax.random.PRNGKey(0)
    k_x, k1, k2, k3, k4, k5 = jax.random.split(key, 6)
    x = jax.random.normal(k_x, (N, C, H, W), jnp.float32)

    # Deterministic synthetic parameters (shapes match the PyTorch module).
    w1 = jax.random.normal(k1, (C, Cr), jnp.float32) * 0.2      # Linear(C -> C/r) weight^T
    b1 = jax.random.normal(k2, (1, Cr), jnp.float32) * 0.1
    w2 = jax.random.normal(k3, (Cr, C), jnp.float32) * 0.2      # Linear(C/r -> C) weight^T
    b2 = jax.random.normal(k4, (1, C), jnp.float32) * 0.1
    w_sp = jax.random.normal(k5, (2, K, K), jnp.float32) * 0.1  # conv(2 -> 1), bias=False

    params = (w1, b1, w2, b2, w_sp)

    fwd = jax.jit(functools.partial(
        cbam_forward, kernel_size=K, padding=PADDING, stride=STRIDE))
    out = jax.block_until_ready(fwd(x, params))

    ref = cbam_reference(x, params, kernel_size=K, padding=PADDING, stride=STRIDE)
    assert out.shape == (N, C, H, W)
    np.testing.assert_allclose(np.asarray(out), np.asarray(ref), rtol=2e-5, atol=2e-5)

    print("KERNEL_OK")
</pallas_src>

<mosaic_0001>
module attributes {stable_mosaic.version = 11 : i64} {
  func.func @_cbam_kernel(%arg0: i32, %arg1: memref<2x16x256xf32, #tpu.memory_space<vmem>>, %arg2: memref<2x16xf32, #tpu.memory_space<vmem>>, %arg3: memref<2x1xf32, #tpu.memory_space<vmem>>, %arg4: memref<16x2xf32, #tpu.memory_space<vmem>>, %arg5: memref<16x1xf32, #tpu.memory_space<vmem>>, %arg6: memref<7x14xf32, #tpu.memory_space<vmem>>, %arg7: memref<7x256xf32, #tpu.memory_space<vmem>>, %arg8: memref<7x256xf32, #tpu.memory_space<vmem>>, %arg9: memref<2x16x256xf32, #tpu.memory_space<vmem>>) attributes {dimension_semantics = [#tpu.dimension_semantics<parallel>], iteration_bounds = array<i64: 1>, scalar_prefetch = 0 : i64, scratch_operands = 0 : i64, tpu.core_type = #tpu.core_type<tc>, window_params = [{transform_indices = @transform_0, window_bounds = array<i64: 2, 16, 256>}, {pipeline_mode = #tpu.pipeline_mode<synchronous>, transform_indices = @transform_1, window_bounds = array<i64: 2, 16>}, {pipeline_mode = #tpu.pipeline_mode<synchronous>, transform_indices = @transform_2, window_bounds = array<i64: 2, 1>}, {pipeline_mode = #tpu.pipeline_mode<synchronous>, transform_indices = @transform_3, window_bounds = array<i64: 16, 2>}, {pipeline_mode = #tpu.pipeline_mode<synchronous>, transform_indices = @transform_4, window_bounds = array<i64: 16, 1>}, {pipeline_mode = #tpu.pipeline_mode<synchronous>, transform_indices = @transform_5, window_bounds = array<i64: 7, 14>}, {pipeline_mode = #tpu.pipeline_mode<synchronous>, transform_indices = @transform_6, window_bounds = array<i64: 7, 256>}, {pipeline_mode = #tpu.pipeline_mode<synchronous>, transform_indices = @transform_7, window_bounds = array<i64: 7, 256>}, {transform_indices = @transform_8, window_bounds = array<i64: 2, 16, 256>}]} {
    %c0 = arith.constant 0 : index
    %c0_0 = arith.constant 0 : index
    %c0_1 = arith.constant 0 : index
    %0 = vector.load %arg1[%c0, %c0_0, %c0_1] : memref<2x16x256xf32, #tpu.memory_space<vmem>>, vector<2x16x256xf32>
    %cst = arith.constant dense<0xFF800000> : vector<2x16xf32>
    %1 = vector.multi_reduction <maximumf>, %0, %cst [2] : vector<2x16x256xf32> to vector<2x16xf32>
    %2 = vector.shape_cast %1 : vector<2x16xf32> to vector<2x16x1xf32>
    %cst_2 = arith.constant dense<0.000000e+00> : vector<2x16xf32>
    %3 = vector.multi_reduction <add>, %0, %cst_2 [2] : vector<2x16x256xf32> to vector<2x16xf32>
    %4 = vector.shape_cast %3 : vector<2x16xf32> to vector<2x16x1xf32>
    %cst_3 = arith.constant 2.560000e+02 : f32
    %5 = vector.broadcast %cst_3 : f32 to vector<2x16x1xf32>
    %6 = arith.divf %4, %5 : vector<2x16x1xf32>
    %7 = arith.mulf %0, %0 : vector<2x16x256xf32>
    %cst_4 = arith.constant dense<0.000000e+00> : vector<2x16xf32>
    %8 = vector.multi_reduction <add>, %7, %cst_4 [2] : vector<2x16x256xf32> to vector<2x16xf32>
    %9 = vector.shape_cast %8 : vector<2x16xf32> to vector<2x16x1xf32>
    %10 = math.sqrt %9 : vector<2x16x1xf32>
    %11 = vector.broadcast %2 : vector<2x16x1xf32> to vector<2x16x256xf32>
    %12 = arith.subf %0, %11 : vector<2x16x256xf32>
    %13 = math.exp %12 : vector<2x16x256xf32>
    %cst_5 = arith.constant dense<0.000000e+00> : vector<2x16xf32>
    %14 = vector.multi_reduction <add>, %13, %cst_5 [2] : vector<2x16x256xf32> to vector<2x16xf32>
    %15 = vector.shape_cast %14 : vector<2x16xf32> to vector<2x16x1xf32>
    %16 = math.log %15 : vector<2x16x1xf32>
    %17 = arith.addf %2, %16 : vector<2x16x1xf32>
    %18 = tpu.concatenate %6, %2, %10, %17 in 2 : vector<2x16x1xf32>, vector<2x16x1xf32>, vector<2x16x1xf32>, vector<2x16x1xf32> -> vector<2x16x4xf32>
    %c0_6 = arith.constant 0 : index
    %c0_7 = arith.constant 0 : index
    %19 = vector.load %arg2[%c0_6, %c0_7] : memref<2x16xf32, #tpu.memory_space<vmem>>, vector<2x16xf32>
    %20 = vector.shape_cast %19 : vector<2x16xf32> to vector<1x2x16xf32>
    %21 = vector.broadcast %20 : vector<1x2x16xf32> to vector<2x2x16xf32>
    %c0_8 = arith.constant 0 : index
    %c0_9 = arith.constant 0 : index
    %22 = vector.load %arg4[%c0_8, %c0_9] : memref<16x2xf32, #tpu.memory_space<vmem>>, vector<16x2xf32>
    %23 = vector.shape_cast %22 : vector<16x2xf32> to vector<1x16x2xf32>
    %24 = vector.broadcast %23 : vector<1x16x2xf32> to vector<2x16x2xf32>
    "tpu.trace_start"() <{level = 10 : i32, message = "nrc,ncp->nrp"}> : () -> ()
    %cst_10 = arith.constant dense<0.000000e+00> : vector<2x2x4xf32>
    %25 = tpu.matmul %21, %18, %cst_10 {dimension_numbers = #tpu.dot_dimension_numbers<[2], [1], [1], [2], [0, 0, 0, 1, 1, 2], [0], [0]>, precision = #tpu.contract_precision<fp32>} : vector<2x2x16xf32>, vector<2x16x4xf32>, vector<2x2x4xf32> -> vector<2x2x4xf32>
    "tpu.trace_stop"() : () -> ()
    %c0_11 = arith.constant 0 : index
    %c0_12 = arith.constant 0 : index
    %26 = vector.load %arg3[%c0_11, %c0_12] : memref<2x1xf32, #tpu.memory_space<vmem>>, vector<2x1xf32>
    %27 = vector.shape_cast %26 : vector<2x1xf32> to vector<1x2x1xf32>
    %28 = vector.broadcast %27 : vector<1x2x1xf32> to vector<2x2x4xf32>
    %29 = arith.addf %25, %28 : vector<2x2x4xf32>
    %cst_13 = arith.constant 0.000000e+00 : f32
    %30 = vector.broadcast %cst_13 : f32 to vector<2x2x4xf32>
    %31 = arith.maximumf %29, %30 : vector<2x2x4xf32>
    "tpu.trace_start"() <{level = 10 : i32, message = "ncr,nrp->ncp"}> : () -> ()
    %cst_14 = arith.constant dense<0.000000e+00> : vector<2x16x4xf32>
    %32 = tpu.matmul %24, %31, %cst_14 {dimension_numbers = #tpu.dot_dimension_numbers<[2], [1], [1], [2], [0, 0, 0, 1, 1, 2], [0], [0]>, precision = #tpu.contract_precision<fp32>} : vector<2x16x2xf32>, vector<2x2x4xf32>, vector<2x16x4xf32> -> vector<2x16x4xf32>
    "tpu.trace_stop"() : () -> ()
    %c0_15 = arith.constant 0 : index
    %c0_16 = arith.constant 0 : index
    %33 = vector.load %arg5[%c0_15, %c0_16] : memref<16x1xf32, #tpu.memory_space<vmem>>, vector<16x1xf32>
    %34 = vector.shape_cast %33 : vector<16x1xf32> to vector<1x16x1xf32>
    %35 = vector.broadcast %34 : vector<1x16x1xf32> to vector<2x16x4xf32>
    %36 = arith.addf %32, %35 : vector<2x16x4xf32>
    %cst_17 = arith.constant dense<0.000000e+00> : vector<2x16xf32>
    %37 = vector.multi_reduction <add>, %36, %cst_17 [2] : vector<2x16x4xf32> to vector<2x16xf32>
    %38 = vector.shape_cast %37 : vector<2x16xf32> to vector<2x16x1xf32>
    %39 = arith.negf %38 : vector<2x16x1xf32>
    %40 = math.exp %39 : vector<2x16x1xf32>
    %cst_18 = arith.constant 1.000000e+00 : f32
    %41 = vector.broadcast %cst_18 : f32 to vector<2x16x1xf32>
    %42 = arith.addf %41, %40 : vector<2x16x1xf32>
    %43 = arith.divf %41, %42 : vector<2x16x1xf32>
    %44 = vector.broadcast %43 : vector<2x16x1xf32> to vector<2x16x256xf32>
    %45 = arith.mulf %0, %44 : vector<2x16x256xf32>
    %cst_19 = arith.constant dense<0xFF800000> : vector<2x256xf32>
    %46 = vector.multi_reduction <maximumf>, %45, %cst_19 [1] : vector<2x16x256xf32> to vector<2x256xf32>
    %47 = vector.shape_cast %46 : vector<2x256xf32> to vector<2x1x256xf32>
    %cst_20 = arith.constant dense<0.000000e+00> : vector<2x256xf32>
    %48 = vector.multi_reduction <add>, %45, %cst_20 [1] : vector<2x16x256xf32> to vector<2x256xf32>
    %49 = vector.shape_cast %48 : vector<2x256xf32> to vector<2x1x256xf32>
    %cst_21 = arith.constant 1.600000e+01 : f32
    %50 = vector.broadcast %cst_21 : f32 to vector<2x1x256xf32>
    %51 = arith.divf %49, %50 : vector<2x1x256xf32>
    %52 = tpu.concatenate %47, %51 in 1 : vector<2x1x256xf32>, vector<2x1x256xf32> -> vector<2x2x256xf32>
    %c3_i32 = arith.constant 3 : i32
    %53 = tpu.dynamic_rotate %52 by %c3_i32 dim 2 : vector<2x2x256xf32>, i32 -> vector<2x2x256xf32>
    %c0_22 = arith.constant 0 : index
    %c0_23 = arith.constant 0 : index
    %54 = vector.load %arg7[%c0_22, %c0_23] : memref<7x256xf32, #tpu.memory_space<vmem>>, vector<1x256xf32>
    %55 = vector.shape_cast %54 : vector<1x256xf32> to vector<1x1x256xf32>
    %56 = vector.broadcast %55 : vector<1x1x256xf32> to vector<2x2x256xf32>
    %57 = arith.mulf %53, %56 : vector<2x2x256xf32>
    %c2_i32 = arith.constant 2 : i32
    %58 = tpu.dynamic_rotate %52 by %c2_i32 dim 2 : vector<2x2x256xf32>, i32 -> vector<2x2x256xf32>
    %c1 = arith.constant 1 : index
    %c0_24 = arith.constant 0 : index
    %59 = vector.load %arg7[%c1, %c0_24] : memref<7x256xf32, #tpu.memory_space<vmem>>, vector<1x256xf32>
    %60 = vector.shape_cast %59 : vector<1x256xf32> to vector<1x1x256xf32>
    %61 = vector.broadcast %60 : vector<1x1x256xf32> to vector<2x2x256xf32>
    %62 = arith.mulf %58, %61 : vector<2x2x256xf32>
    %c1_i32 = arith.constant 1 : i32
    %63 = tpu.dynamic_rotate %52 by %c1_i32 dim 2 : vector<2x2x256xf32>, i32 -> vector<2x2x256xf32>
    %c2 = arith.constant 2 : index
    %c0_25 = arith.constant 0 : index
    %64 = vector.load %arg7[%c2, %c0_25] : memref<7x256xf32, #tpu.memory_space<vmem>>, vector<1x256xf32>
    %65 = vector.shape_cast %64 : vector<1x256xf32> to vector<1x1x256xf32>
    %66 = vector.broadcast %65 : vector<1x1x256xf32> to vector<2x2x256xf32>
    %67 = arith.mulf %63, %66 : vector<2x2x256xf32>
    %c3 = arith.constant 3 : index
    %c0_26 = arith.constant 0 : index
    %68 = vector.load %arg7[%c3, %c0_26] : memref<7x256xf32, #tpu.memory_space<vmem>>, vector<1x256xf32>
    %69 = vector.shape_cast %68 : vector<1x256xf32> to vector<1x1x256xf32>
    %70 = vector.broadcast %69 : vector<1x1x256xf32> to vector<2x2x256xf32>
    %71 = arith.mulf %52, %70 : vector<2x2x256xf32>
    %c255_i32 = arith.constant 255 : i32
    %72 = tpu.dynamic_rotate %52 by %c255_i32 dim 2 : vector<2x2x256xf32>, i32 -> vector<2x2x256xf32>
    %c4 = arith.constant 4 : index
    %c0_27 = arith.constant 0 : index
    %73 = vector.load %arg7[%c4, %c0_27] : memref<7x256xf32, #tpu.memory_space<vmem>>, vector<1x256xf32>
    %74 = vector.shape_cast %73 : vector<1x256xf32> to vector<1x1x256xf32>
    %75 = vector.broadcast %74 : vector<1x1x256xf32> to vector<2x2x256xf32>
    %76 = arith.mulf %72, %75 : vector<2x2x256xf32>
    %c254_i32 = arith.constant 254 : i32
    %77 = tpu.dynamic_rotate %52 by %c254_i32 dim 2 : vector<2x2x256xf32>, i32 -> vector<2x2x256xf32>
    %c5 = arith.constant 5 : index
    %c0_28 = arith.constant 0 : index
    %78 = vector.load %arg7[%c5, %c0_28] : memref<7x256xf32, #tpu.memory_space<vmem>>, vector<1x256xf32>
    %79 = vector.shape_cast %78 : vector<1x256xf32> to vector<1x1x256xf32>
    %80 = vector.broadcast %79 : vector<1x1x256xf32> to vector<2x2x256xf32>
    %81 = arith.mulf %77, %80 : vector<2x2x256xf32>
    %c253_i32 = arith.constant 253 : i32
    %82 = tpu.dynamic_rotate %52 by %c253_i32 dim 2 : vector<2x2x256xf32>, i32 -> vector<2x2x256xf32>
    %c6 = arith.constant 6 : index
    %c0_29 = arith.constant 0 : index
    %83 = vector.load %arg7[%c6, %c0_29] : memref<7x256xf32, #tpu.memory_space<vmem>>, vector<1x256xf32>
    %84 = vector.shape_cast %83 : vector<1x256xf32> to vector<1x1x256xf32>
    %85 = vector.broadcast %84 : vector<1x1x256xf32> to vector<2x2x256xf32>
    %86 = arith.mulf %82, %85 : vector<2x2x256xf32>
    %87 = tpu.concatenate %57, %62, %67, %71, %76, %81, %86 in 1 : vector<2x2x256xf32>, vector<2x2x256xf32>, vector<2x2x256xf32>, vector<2x2x256xf32>, vector<2x2x256xf32>, vector<2x2x256xf32>, vector<2x2x256xf32> -> vector<2x14x256xf32>
    %c0_30 = arith.constant 0 : index
    %c0_31 = arith.constant 0 : index
    %88 = vector.load %arg6[%c0_30, %c0_31] : memref<7x14xf32, #tpu.memory_space<vmem>>, vector<7x14xf32>
    %89 = vector.shape_cast %88 : vector<7x14xf32> to vector<1x7x14xf32>
    %90 = vector.broadcast %89 : vector<1x7x14xf32> to vector<2x7x14xf32>
    "tpu.trace_start"() <{level = 10 : i32, message = "nks,nsh->nkh"}> : () -> ()
    %cst_32 = arith.constant dense<0.000000e+00> : vector<2x7x256xf32>
    %91 = tpu.matmul %90, %87, %cst_32 {dimension_numbers = #tpu.dot_dimension_numbers<[2], [1], [1], [2], [0, 0, 0, 1, 1, 2], [0], [0]>, precision = #tpu.contract_precision<fp32>} : vector<2x7x14xf32>, vector<2x14x256xf32>, vector<2x7x256xf32> -> vector<2x7x256xf32>
    %cst_33 = arith.constant 0.000000e+00 : f32
    "tpu.trace_stop"() : () -> ()
    %92 = vector.broadcast %cst_33 : f32 to vector<2x1x256xf32>
    %93 = vector.extract_strided_slice %91 {offsets = [0, 0, 0], sizes = [2, 1, 256], strides = [1, 1, 1]} : vector<2x7x256xf32> to vector<2x1x256xf32>
    %c48_i32 = arith.constant 48 : i32
    %94 = tpu.dynamic_rotate %93 by %c48_i32 dim 2 : vector<2x1x256xf32>, i32 -> vector<2x1x256xf32>
    %c0_34 = arith.constant 0 : index
    %c0_35 = arith.constant 0 : index
    %95 = vector.load %arg8[%c0_34, %c0_35] : memref<7x256xf32, #tpu.memory_space<vmem>>, vector<1x256xf32>
    %96 = vector.shape_cast %95 : vector<1x256xf32> to vector<1x1x256xf32>
    %97 = vector.broadcast %96 : vector<1x1x256xf32> to vector<2x1x256xf32>
    %98 = arith.mulf %94, %97 : vector<2x1x256xf32>
    %99 = arith.addf %92, %98 : vector<2x1x256xf32>
    %100 = vector.extract_strided_slice %91 {offsets = [0, 1, 0], sizes = [2, 1, 256], strides = [1, 1, 1]} : vector<2x7x256xf32> to vector<2x1x256xf32>
    %c32_i32 = arith.constant 32 : i32
    %101 = tpu.dynamic_rotate %100 by %c32_i32 dim 2 : vector<2x1x256xf32>, i32 -> vector<2x1x256xf32>
    %c1_36 = arith.constant 1 : index
    %c0_37 = arith.constant 0 : index
    %102 = vector.load %arg8[%c1_36, %c0_37] : memref<7x256xf32, #tpu.memory_space<vmem>>, vector<1x256xf32>
    %103 = vector.shape_cast %102 : vector<1x256xf32> to vector<1x1x256xf32>
    %104 = vector.broadcast %103 : vector<1x1x256xf32> to vector<2x1x256xf32>
    %105 = arith.mulf %101, %104 : vector<2x1x256xf32>
    %106 = arith.addf %99, %105 : vector<2x1x256xf32>
    %107 = vector.extract_strided_slice %91 {offsets = [0, 2, 0], sizes = [2, 1, 256], strides = [1, 1, 1]} : vector<2x7x256xf32> to vector<2x1x256xf32>
    %c16_i32 = arith.constant 16 : i32
    %108 = tpu.dynamic_rotate %107 by %c16_i32 dim 2 : vector<2x1x256xf32>, i32 -> vector<2x1x256xf32>
    %c2_38 = arith.constant 2 : index
    %c0_39 = arith.constant 0 : index
    %109 = vector.load %arg8[%c2_38, %c0_39] : memref<7x256xf32, #tpu.memory_space<vmem>>, vector<1x256xf32>
    %110 = vector.shape_cast %109 : vector<1x256xf32> to vector<1x1x256xf32>
    %111 = vector.broadcast %110 : vector<1x1x256xf32> to vector<2x1x256xf32>
    %112 = arith.mulf %108, %111 : vector<2x1x256xf32>
    %113 = arith.addf %106, %112 : vector<2x1x256xf32>
    %114 = vector.extract_strided_slice %91 {offsets = [0, 3, 0], sizes = [2, 1, 256], strides = [1, 1, 1]} : vector<2x7x256xf32> to vector<2x1x256xf32>
    %c3_40 = arith.constant 3 : index
    %c0_41 = arith.constant 0 : index
    %115 = vector.load %arg8[%c3_40, %c0_41] : memref<7x256xf32, #tpu.memory_space<vmem>>, vector<1x256xf32>
    %116 = vector.shape_cast %115 : vector<1x256xf32> to vector<1x1x256xf32>
    %117 = vector.broadcast %116 : vector<1x1x256xf32> to vector<2x1x256xf32>
    %118 = arith.mulf %114, %117 : vector<2x1x256xf32>
    %119 = arith.addf %113, %118 : vector<2x1x256xf32>
    %120 = vector.extract_strided_slice %91 {offsets = [0, 4, 0], sizes = [2, 1, 256], strides = [1, 1, 1]} : vector<2x7x256xf32> to vector<2x1x256xf32>
    %c240_i32 = arith.constant 240 : i32
    %121 = tpu.dynamic_rotate %120 by %c240_i32 dim 2 : vector<2x1x256xf32>, i32 -> vector<2x1x256xf32>
    %c4_42 = arith.constant 4 : index
    %c0_43 = arith.constant 0 : index
    %122 = vector.load %arg8[%c4_42, %c0_43] : memref<7x256xf32, #tpu.memory_space<vmem>>, vector<1x256xf32>
    %123 = vector.shape_cast %122 : vector<1x256xf32> to vector<1x1x256xf32>
    %124 = vector.broadcast %123 : vector<1x1x256xf32> to vector<2x1x256xf32>
    %125 = arith.mulf %121, %124 : vector<2x1x256xf32>
    %126 = arith.addf %119, %125 : vector<2x1x256xf32>
    %127 = vector.extract_strided_slice %91 {offsets = [0, 5, 0], sizes = [2, 1, 256], strides = [1, 1, 1]} : vector<2x7x256xf32> to vector<2x1x256xf32>
    %c224_i32 = arith.constant 224 : i32
    %128 = tpu.dynamic_rotate %127 by %c224_i32 dim 2 : vector<2x1x256xf32>, i32 -> vector<2x1x256xf32>
    %c5_44 = arith.constant 5 : index
    %c0_45 = arith.constant 0 : index
    %129 = vector.load %arg8[%c5_44, %c0_45] : memref<7x256xf32, #tpu.memory_space<vmem>>, vector<1x256xf32>
    %130 = vector.shape_cast %129 : vector<1x256xf32> to vector<1x1x256xf32>
    %131 = vector.broadcast %130 : vector<1x1x256xf32> to vector<2x1x256xf32>
    %132 = arith.mulf %128, %131 : vector<2x1x256xf32>
    %133 = arith.addf %126, %132 : vector<2x1x256xf32>
    %134 = vector.extract_strided_slice %91 {offsets = [0, 6, 0], sizes = [2, 1, 256], strides = [1, 1, 1]} : vector<2x7x256xf32> to vector<2x1x256xf32>
    %c208_i32 = arith.constant 208 : i32
    %135 = tpu.dynamic_rotate %134 by %c208_i32 dim 2 : vector<2x1x256xf32>, i32 -> vector<2x1x256xf32>
    %c6_46 = arith.constant 6 : index
    %c0_47 = arith.constant 0 : index
    %136 = vector.load %arg8[%c6_46, %c0_47] : memref<7x256xf32, #tpu.memory_space<vmem>>, vector<1x256xf32>
    %137 = vector.shape_cast %136 : vector<1x256xf32> to vector<1x1x256xf32>
    %138 = vector.broadcast %137 : vector<1x1x256xf32> to vector<2x1x256xf32>
    %139 = arith.mulf %135, %138 : vector<2x1x256xf32>
    %140 = arith.addf %133, %139 : vector<2x1x256xf32>
    %cst_48 = arith.constant 0.999994993 : f32
    %141 = vector.broadcast %cst_48 : f32 to vector<2x1x256xf32>
    %142 = arith.mulf %140, %141 : vector<2x1x256xf32>
    %143 = arith.negf %142 : vector<2x1x256xf32>
    %144 = math.exp %143 : vector<2x1x256xf32>
    %cst_49 = arith.constant 1.000000e+00 : f32
    %145 = vector.broadcast %cst_49 : f32 to vector<2x1x256xf32>
    %146 = arith.addf %145, %144 : vector<2x1x256xf32>
    %147 = arith.divf %145, %146 : vector<2x1x256xf32>
    %148 = vector.broadcast %147 : vector<2x1x256xf32> to vector<2x16x256xf32>
    %149 = arith.mulf %45, %148 : vector<2x16x256xf32>
    %c0_50 = arith.constant 0 : index
    %c0_51 = arith.constant 0 : index
    %c0_52 = arith.constant 0 : index
    %150 = vector.load %arg9[%c0_50, %c0_51, %c0_52] : memref<2x16x256xf32, #tpu.memory_space<vmem>>, vector<2x16x256xf32>
    tpu.vector_store %arg9[%c0_50, %c0_51, %c0_52], %149 {strides = array<i32>} : memref<2x16x256xf32, #tpu.memory_space<vmem>>, vector<2x16x256xf32>,
    return
  }
  func.func @transform_0(%arg0: i32) -> (i32, i32, i32) {
    %c0_i32 = arith.constant 0 : i32
    %c0_i32_0 = arith.constant 0 : i32
    %c0_i32_1 = arith.constant 0 : i32
    return %arg0, %c0_i32, %c0_i32_0 : i32, i32, i32
  }
  func.func @transform_1(%arg0: i32) -> (i32, i32) {
    %c0_i32 = arith.constant 0 : i32
    %c0_i32_0 = arith.constant 0 : i32
    %c0_i32_1 = arith.constant 0 : i32
    return %c0_i32, %c0_i32_0 : i32, i32
  }
  func.func @transform_2(%arg0: i32) -> (i32, i32) {
    %c0_i32 = arith.constant 0 : i32
    %c0_i32_0 = arith.constant 0 : i32
    %c0_i32_1 = arith.constant 0 : i32
    return %c0_i32, %c0_i32_0 : i32, i32
  }
  func.func @transform_3(%arg0: i32) -> (i32, i32) {
    %c0_i32 = arith.constant 0 : i32
    %c0_i32_0 = arith.constant 0 : i32
    %c0_i32_1 = arith.constant 0 : i32
    return %c0_i32, %c0_i32_0 : i32, i32
  }
  func.func @transform_4(%arg0: i32) -> (i32, i32) {
    %c0_i32 = arith.constant 0 : i32
    %c0_i32_0 = arith.constant 0 : i32
    %c0_i32_1 = arith.constant 0 : i32
    return %c0_i32, %c0_i32_0 : i32, i32
  }
  func.func @transform_5(%arg0: i32) -> (i32, i32) {
    %c0_i32 = arith.constant 0 : i32
    %c0_i32_0 = arith.constant 0 : i32
    %c0_i32_1 = arith.constant 0 : i32
    return %c0_i32, %c0_i32_0 : i32, i32
  }
  func.func @transform_6(%arg0: i32) -> (i32, i32) {
    %c0_i32 = arith.constant 0 : i32
    %c0_i32_0 = arith.constant 0 : i32
    %c0_i32_1 = arith.constant 0 : i32
    return %c0_i32, %c0_i32_0 : i32, i32
  }
  func.func @transform_7(%arg0: i32) -> (i32, i32) {
    %c0_i32 = arith.constant 0 : i32
    %c0_i32_0 = arith.constant 0 : i32
    %c0_i32_1 = arith.constant 0 : i32
    return %c0_i32, %c0_i32_0 : i32, i32
  }
  func.func @transform_8(%arg0: i32) -> (i32, i32, i32) {
    %c0_i32 = arith.constant 0 : i32
    %c0_i32_0 = arith.constant 0 : i32
    %c0_i32_1 = arith.constant 0 : i32
    return %arg0, %c0_i32, %c0_i32_0 : i32, i32, i32
  }
}

</mosaic_0001>

<llo_original>
// kernel: cbam_forward.1
$region0: #{cbam_forward.1}
  #allocation0 [shape = 'u32[]', space=smem, size = 0x4, offset = 0x4, fixed_abs, tag = 'smem constant byte address 0x4 - core index']
  #allocation1 [shape = 'u32[144,128]{1,0:T(1,128)}', space=vmem, size = 0x12000, scoped, tag = 'internal scratch']
  %s0 = inlined_call_operand.vmem [shape: f32[2,16,256], index: 0, kind: input, shape index: {}, may-alias: {0,8}]
  %s1 = inlined_call_operand.vmem [shape: f32[2,16], index: 1, kind: input, shape index: {}]
  %s2 = inlined_call_operand.vmem [shape: f32[2,1], index: 2, kind: input, shape index: {}]
  %s3 = inlined_call_operand.vmem [shape: f32[16,2], index: 3, kind: input, shape index: {}]
  %s4 = inlined_call_operand.vmem [shape: f32[16,1], index: 4, kind: input, shape index: {}]
  %s5 = inlined_call_operand.vmem [shape: f32[7,14], index: 5, kind: input, shape index: {}]
  %s6 = inlined_call_operand.vmem [shape: f32[7,256], index: 6, kind: input, shape index: {}]
  %s7 = inlined_call_operand.vmem [shape: f32[7,256], index: 7, kind: input, shape index: {}]
  %s8 = inlined_call_operand.vmem [shape: f32[2,16,256], index: 8, kind: output, shape index: {}, may-alias: {0,8}]
  %s9 = sld [smem:[#allocation0]]
  $region42: #{cbam_forward.1} parent=0
    _
  %s11 = ssub.s32 1, %s9
  %s12 = scalar_select 0, %s11, %s9
  // Predicated region
  $region2: #{cbam_forward.1} parent=0 // pred_check
    _
  $region3: #{cbam_forward.1} parent=0 // pred_check_branch
    %14 = sbr.rel (0) target = $region5
  $region4: #{cbam_forward.1} parent=0 // pred_region
    _
  $region5: #{cbam_forward.1} parent=0 // pred_fallthru
    _
  // Predicated region
  $region6: #{cbam_forward.1} parent=0 // pred_check
    _
  $region7: #{cbam_forward.1} parent=0 // pred_check_branch
    %16 = sbr.rel (0) target = $region9
  $region8: #{cbam_forward.1} parent=0 // pred_region
    _
  $region9: #{cbam_forward.1} parent=0 // pred_fallthru
    _
  // Predicated region
  $region10: #{cbam_forward.1} parent=0 // pred_check
    _
  $region11: #{cbam_forward.1} parent=0 // pred_check_branch
    %18 = sbr.rel (0) target = $region13
  $region12: #{cbam_forward.1} parent=0 // pred_region
    _
  $region13: #{cbam_forward.1} parent=0 // pred_fallthru
    _
  // Predicated region
  $region14: #{cbam_forward.1} parent=0 // pred_check
    _
  $region15: #{cbam_forward.1} parent=0 // pred_check_branch
    %20 = sbr.rel (0) target = $region17
  $region16: #{cbam_forward.1} parent=0 // pred_region
    _
  $region17: #{cbam_forward.1} parent=0 // pred_fallthru
    _
  // Predicated region
  $region18: #{cbam_forward.1} parent=0 // pred_check
    _
  $region19: #{cbam_forward.1} parent=0 // pred_check_branch
    %22 = sbr.rel (0) target = $region21
  $region20: #{cbam_forward.1} parent=0 // pred_region
    _
  $region21: #{cbam_forward.1} parent=0 // pred_fallthru
    _
  // Predicated region
  $region22: #{cbam_forward.1} parent=0 // pred_check
    _
  $region23: #{cbam_forward.1} parent=0 // pred_check_branch
    %24 = sbr.rel (0) target = $region25
  $region24: #{cbam_forward.1} parent=0 // pred_region
    _
  $region25: #{cbam_forward.1} parent=0 // pred_fallthru
    _
  // Predicated region
  $region26: #{cbam_forward.1} parent=0 // pred_check
    _
  $region27: #{cbam_forward.1} parent=0 // pred_check_branch
    %26 = sbr.rel (0) target = $region29
  $region28: #{cbam_forward.1} parent=0 // pred_region
    _
  $region29: #{cbam_forward.1} parent=0 // pred_fallthru
    _
  // Predicated region
  $region30: #{cbam_forward.1} parent=0 // pred_check
    _
  $region31: #{cbam_forward.1} parent=0 // pred_check_branch
    %28 = sbr.rel (0) target = $region33
  $region32: #{cbam_forward.1} parent=0 // pred_region
    _
  $region33: #{cbam_forward.1} parent=0 // pred_fallthru
    _
  %v29 = vld [vmem:[%s0] sm:$0xff]
  %v30 = vld [vmem:[%s0 + $0x8] sm:$0xff]
  %v31 = vld [vmem:[%s0 + $0x10] sm:$0xff]
  %v32 = vld [vmem:[%s0 + $0x18] sm:$0xff]
  %v33 = vld [vmem:[%s0 + $0x20] sm:$0xff]
  %v34 = vld [vmem:[%s0 + $0x28] sm:$0xff]
  %v35 = vld [vmem:[%s0 + $0x30] sm:$0xff]
  %v36 = vld [vmem:[%s0 + $0x38] sm:$0xff]
  %v37 = vmax.f32 %v29, %v30
  %38 = vmax.xlane.f32.xlu0 %v37
  %v39 = vpop.xlane.xlu0 %38
  %v40 = vmax.f32 %v31, %v32
  %41 = vmax.xlane.f32.xlu0 %v40
  %v42 = vpop.xlane.xlu0 %41
  %v43 = vmax.f32 %v33, %v34
  %44 = vmax.xlane.f32.xlu0 %v43
  %v45 = vpop.xlane.xlu0 %44
  %v46 = vmax.f32 %v35, %v36
  %47 = vmax.xlane.f32.xlu0 %v46
  %v48 = vpop.xlane.xlu0 %47
  %v49 = vadd.f32 %v29, %v30
  %50 = vadd.xlane.f32.xlu0 %v49
  %v51 = vpop.xlane.xlu0 %50
  %v52 = vadd.f32 %v31, %v32
  %53 = vadd.xlane.f32.xlu0 %v52
  %v54 = vpop.xlane.xlu0 %53
  %v55 = vadd.f32 %v33, %v34
  %56 = vadd.xlane.f32.xlu0 %v55
  %v57 = vpop.xlane.xlu0 %56
  %v58 = vadd.f32 %v35, %v36
  %59 = vadd.xlane.f32.xlu0 %v58
  %v60 = vpop.xlane.xlu0 %59
  %v61 = vrcp.pop 256.0
  %v62 = vmul.f32 %v51, %v61
  %v63 = vmul.f32 %v54, %v61
  %v64 = vmul.f32 %v57, %v61
  %v65 = vmul.f32 %v60, %v61
  %v66 = vmul.f32 %v29, %v29
  %v67 = vmul.f32 %v30, %v30
  %v68 = vmul.f32 %v31, %v31
  %v69 = vmul.f32 %v32, %v32
  %v70 = vmul.f32 %v33, %v33
  %v71 = vmul.f32 %v34, %v34
  %v72 = vmul.f32 %v35, %v35
  %v73 = vmul.f32 %v36, %v36
  %v74 = vadd.f32 %v66, %v67
  %75 = vadd.xlane.f32.xlu0 %v74
  %v76 = vpop.xlane.xlu0 %75
  %v77 = vadd.f32 %v68, %v69
  %78 = vadd.xlane.f32.xlu0 %v77
  %v79 = vpop.xlane.xlu0 %78
  %v80 = vadd.f32 %v70, %v71
  %81 = vadd.xlane.f32.xlu0 %v80
  %v82 = vpop.xlane.xlu0 %81
  %v83 = vadd.f32 %v72, %v73
  %84 = vadd.xlane.f32.xlu0 %v83
  %v85 = vpop.xlane.xlu0 %84
  %v86 = vrsqrt.pop %v76
  %v87 = vmul.f32 %v76, %v86
  %vm88 = vcmp.eq.f32.partialorder %v76, inf
  %v89 = vsel %vm88, %v76, %v87
  %vm90 = vcmp.eq.f32.partialorder %v76, 0.0
  %v91 = vand.u32 %v76, 2147483648
  %v92 = vsel %vm90, %v91, %v89
  %v93 = vrsqrt.pop %v79
  %v94 = vmul.f32 %v79, %v93
  %vm95 = vcmp.eq.f32.partialorder %v79, inf
  %v96 = vsel %vm95, %v79, %v94
  %vm97 = vcmp.eq.f32.partialorder %v79, 0.0
  %v98 = vand.u32 %v79, 2147483648
  %v99 = vsel %vm97, %v98, %v96
  %v100 = vrsqrt.pop %v82
  %v101 = vmul.f32 %v82, %v100
  %vm102 = vcmp.eq.f32.partialorder %v82, inf
  %v103 = vsel %vm102, %v82, %v101
  %vm104 = vcmp.eq.f32.partialorder %v82, 0.0
  %v105 = vand.u32 %v82, 2147483648
  %v106 = vsel %vm104, %v105, %v103
  %v107 = vrsqrt.pop %v85
  %v108 = vmul.f32 %v85, %v107
  %vm109 = vcmp.eq.f32.partialorder %v85, inf
  %v110 = vsel %vm109, %v85, %v108
  %vm111 = vcmp.eq.f32.partialorder %v85, 0.0
  %v112 = vand.u32 %v85, 2147483648
  %v113 = vsel %vm111, %v112, %v110
  %v114 = vsub.f32 %v29, %v39
  %v115 = vsub.f32 %v30, %v39
  %v116 = vsub.f32 %v31, %v42
  %v117 = vsub.f32 %v32, %v42
  %v118 = vsub.f32 %v33, %v45
  %v119 = vsub.f32 %v34, %v45
  %v120 = vsub.f32 %v35, %v48
  %v121 = vsub.f32 %v36, %v48
  %v122 = vmul.f32 %v114, 1.442695
  %v123 = vpow.pop %v122
  %v124 = vmul.f32 %v115, 1.442695
  %v125 = vpow.pop %v124
  %v126 = vmul.f32 %v116, 1.442695
  %v127 = vpow.pop %v126
  %v128 = vmul.f32 %v117, 1.442695
  %v129 = vpow.pop %v128
  %v130 = vmul.f32 %v118, 1.442695
  %v131 = vpow.pop %v130
  %v132 = vmul.f32 %v119, 1.442695
  %v133 = vpow.pop %v132
  %v134 = vmul.f32 %v120, 1.442695
  %v135 = vpow.pop %v134
  %v136 = vmul.f32 %v121, 1.442695
  %v137 = vpow.pop %v136
  %v138 = vadd.f32 %v123, %v125
  %139 = vadd.xlane.f32.xlu0 %v138
  %v140 = vpop.xlane.xlu0 %139
  %v141 = vadd.f32 %v127, %v129
  %142 = vadd.xlane.f32.xlu0 %v141
  %v143 = vpop.xlane.xlu0 %142
  %v144 = vadd.f32 %v131, %v133
  %145 = vadd.xlane.f32.xlu0 %v144
  %v146 = vpop.xlane.xlu0 %145
  %v147 = vadd.f32 %v135, %v137
  %148 = vadd.xlane.f32.xlu0 %v147
  %v149 = vpop.xlane.xlu0 %148
  %v150 = vlog2.pop %v140
  %v151 = vmul.f32 %v150, 0.6931472
  %v152 = vlog2.pop %v143
  %v153 = vmul.f32 %v152, 0.6931472
  %v154 = vlog2.pop %v146
  %v155 = vmul.f32 %v154, 0.6931472
  %v156 = vlog2.pop %v149
  %v157 = vmul.f32 %v156, 0.6931472
  %v158 = vadd.f32 %v39, %v151
  %v159 = vadd.f32 %v42, %v153
  %v160 = vadd.f32 %v45, %v155
  %v161 = vadd.f32 %v48, %v157
  %vm162 = vcmask 7168
  %v163 = vsel %vm162, %v62, %v39
  %v164 = vsel %vm162, %v63, %v42
  %v165 = vsel %vm162, %v64, %v45
  %v166 = vsel %vm162, %v65, %v48
  %vm167 = vcmask 15360
  %v168 = vsel %vm167, %v163, %v92
  %v169 = vsel %vm167, %v164, %v99
  %v170 = vsel %vm167, %v165, %v106
  %v171 = vsel %vm167, %v166, %v113
  %vm172 = vcmask 23552
  %v173 = vsel %vm172, %v168, %v158
  %v174 = vsel %vm172, %v169, %v159
  %v175 = vsel %vm172, %v170, %v160
  %v176 = vsel %vm172, %v171, %v161
  %v177 = vld [vmem:[%s1] sm:$0x3]
  %v178 = vld [vmem:[%s3] sm:$0xff]
  %v179 = vld [vmem:[%s3 + $0x8] sm:$0xff]
  %v180 = vld [vmem:[%s2] sm:$0x3]
  %182 = vset.pattern.permute.xlu0 0
  %183 = vperm.xlu0 %182, %v180
  %v184 = vpop.permute.xlu0 %183
  %vm186 = vcmask 130048
  %v188 = vsel %vm186, %v177, 0
  %190 = vmatprep.subr.mxu0 0.0
  %v191 = vand.u32 %v173, 4294901760
  %192 = vmatpush1.msra.mxu0 %v191
  %193 = vmatprep.subr.mxu0 0.0
  %v194 = vand.u32 %v174, 4294901760
  %195 = vmatpush1.msra.mxu0 %v194
  %196 = vmatprep.subr.mxu0 0.0
  %197 = vmatpush1.msra.mxu0 0.0
  %198 = vmatprep.subr.mxu0 0.0
  %199 = vmatpush1.msra.mxu0 0.0
  %200 = vmatprep.subr.mxu0 0.0
  %201 = vmatpush1.msra.mxu0 0.0
  %202 = vmatprep.subr.mxu0 0.0
  %203 = vmatpush1.msra.mxu0 0.0
  %204 = vmatprep.subr.mxu0 0.0
  %205 = vmatpush1.msra.mxu0 0.0
  %206 = vmatprep.subr.mxu0 0.0
  %207 = vmatpush1.msra.mxu0 0.0
  %208 = vmatprep.subr.mxu0 0.0
  %209 = vmatpush1.msra.mxu0 0.0
  %210 = vmatprep.subr.mxu0 0.0
  %211 = vmatpush1.msra.mxu0 0.0
  %212 = vmatprep.subr.mxu0 0.0
  %213 = vmatpush1.msra.mxu0 0.0
  %214 = vmatprep.subr.mxu0 0.0
  %215 = vmatpush1.msra.mxu0 0.0
  %216 = vmatprep.subr.mxu0 0.0
  %217 = vmatpush1.msra.mxu0 0.0
  %218 = vmatprep.subr.mxu0 0.0
  %219 = vmatpush1.msra.mxu0 0.0
  %220 = vmatprep.subr.mxu0 0.0
  %221 = vmatpush1.msra.mxu0 0.0
  %222 = vmatprep.subr.mxu0 0.0
  %223 = vmatpush1.msra.mxu0 0.0
  %224 = vmatprep.subr.mxu0 0.0
  %225 = vmatpush1.msra.mxu0 0.0
  %226 = vmatprep.subr.mxu0 0.0
  %227 = vmatpush1.msra.mxu0 0.0
  %228 = vmatprep.subr.mxu0 0.0
  %229 = vmatpush1.msra.mxu0 0.0
  %230 = vmatprep.subr.mxu0 0.0
  %231 = vmatpush1.msra.mxu0 0.0
  %232 = vmatprep.subr.mxu0 0.0
  %233 = vmatpush1.msra.mxu0 0.0
  %234 = vmatprep.subr.mxu0 0.0
  %235 = vmatpush1.msra.mxu0 0.0
  %236 = vmatprep.subr.mxu0 0.0
  %237 = vmatpush1.msra.mxu0 0.0
  %238 = vmatprep.subr.mxu0 0.0
  %239 = vmatpush1.msra.mxu0 0.0
  %240 = vmatprep.subr.mxu0 0.0
  %241 = vmatpush1.msra.mxu0 0.0
  %242 = vmatprep.subr.mxu0 0.0
  %243 = vmatpush1.msra.mxu0 0.0
  %244 = vmatprep.subr.mxu0 0.0
  %245 = vmatpush1.msra.mxu0 0.0
  %246 = vmatprep.subr.mxu0 0.0
  %247 = vmatpush1.msra.mxu0 0.0
  %248 = vmatprep.subr.mxu0 0.0
  %249 = vmatpush1.msra.mxu0 0.0
  %250 = vmatprep.subr.mxu0 0.0
  %251 = vmatpush1.msra.mxu0 0.0
  %252 = vmatprep.subr.mxu0 0.0
  %253 = vmatpush1.msra.mxu0 0.0
  %254 = vmatprep.subr.mxu0 0.0
  %255 = vmatpush1.msra.mxu0 0.0
  %256 = vmatprep.mubr.f32.mxu0 0.0
  %v257 = vand.u32 %v188, 4294901760
  %v258 = vsub.f32 %v188, %v257
  %v259 = vand.u32 %v258, 4294901760
  %v260 = vsub.f32 %v258, %v259
  %v261 = vand.u32 %v260, 4294901760
  %262 = vmatmul.mubr.f32.gmra.mrb[0].mxu0 %v261
  %v263 = vpop.f32.mrb[0].mxu0
  %v264 = vadd.f32 %v184, %v263
  %v265 = vpop.f32.mrb[0].mxu0
  %266 = vdwg.mxu0
  %267 = vmatprep.subr.mxu0 0.0
  %v268 = vand.u32 %v173, 4294901760
  %v269 = vsub.f32 %v173, %v268
  %v270 = vand.u32 %v269, 4294901760
  %v271 = vsub.f32 %v269, %v270
  %v272 = vand.u32 %v271, 4294901760
  %273 = vmatpush1.msra.mxu0 %v272
  %274 = vmatprep.subr.mxu0 0.0
  %v275 = vand.u32 %v174, 4294901760
  %v276 = vsub.f32 %v174, %v275
  %v277 = vand.u32 %v276, 4294901760
  %v278 = vsub.f32 %v276, %v277
  %v279 = vand.u32 %v278, 4294901760
  %280 = vmatpush1.msra.mxu0 %v279
  %281 = vmatprep.subr.mxu0 0.0
  %282 = vmatpush1.msra.mxu0 0.0
  %283 = vmatprep.subr.mxu0 0.0
  %284 = vmatpush1.msra.mxu0 0.0
  %285 = vmatprep.subr.mxu0 0.0
  %286 = vmatpush1.msra.mxu0 0.0
  %287 = vmatprep.subr.mxu0 0.0
  %288 = vmatpush1.msra.mxu0 0.0
  %289 = vmatprep.subr.mxu0 0.0
  %290 = vmatpush1.msra.mxu0 0.0
  %291 = vmatprep.subr.mxu0 0.0
  %292 = vmatpush1.msra.mxu0 0.0
  %293 = vmatprep.subr.mxu0 0.0
  %294 = vmatpush1.msra.mxu0 0.0
  %295 = vmatprep.subr.mxu0 0.0
  %296 = vmatpush1.msra.mxu0 0.0
  %297 = vmatprep.subr.mxu0 0.0
  %298 = vmatpush1.msra.mxu0 0.0
  %299 = vmatprep.subr.mxu0 0.0
  %300 = vmatpush1.msra.mxu0 0.0
  %301 = vmatprep.subr.mxu0 0.0
  %302 = vmatpush1.msra.mxu0 0.0
  %303 = vmatprep.subr.mxu0 0.0
  %304 = vmatpush1.msra.mxu0 0.0
  %305 = vmatprep.subr.mxu0 0.0
  %306 = vmatpush1.msra.mxu0 0.0
  %307 = vmatprep.subr.mxu0 0.0
  %308 = vmatpush1.msra.mxu0 0.0
  %309 = vmatprep.subr.mxu0 0.0
  %310 = vmatpush1.msra.mxu0 0.0
  %311 = vmatprep.subr.mxu0 0.0
  %312 = vmatpush1.msra.mxu0 0.0
  %313 = vmatprep.subr.mxu0 0.0
  %314 = vmatpush1.msra.mxu0 0.0
  %315 = vmatprep.subr.mxu0 0.0
  %316 = vmatpush1.msra.mxu0 0.0
  %317 = vmatprep.subr.mxu0 0.0
  %318 = vmatpush1.msra.mxu0 0.0
  %319 = vmatprep.subr.mxu0 0.0
  %320 = vmatpush1.msra.mxu0 0.0
  %321 = vmatprep.subr.mxu0 0.0
  %322 = vmatpush1.msra.mxu0 0.0
  %323 = vmatprep.subr.mxu0 0.0
  %324 = vmatpush1.msra.mxu0 0.0
  %325 = vmatprep.subr.mxu0 0.0
  %326 = vmatpush1.msra.mxu0 0.0
  %327 = vmatprep.subr.mxu0 0.0
  %328 = vmatpush1.msra.mxu0 0.0
  %329 = vmatprep.subr.mxu0 0.0
  %330 = vmatpush1.msra.mxu0 0.0
  %331 = vmatprep.subr.mxu0 0.0
  %332 = vmatpush1.msra.mxu0 0.0
  %333 = vmatprep.subr.mxu0 0.0
  %334 = vmatpush1.msra.mxu0 0.0
  %335 = vmatprep.subr.mxu0 0.0
  %336 = vmatpush1.msra.mxu0 0.0
  %337 = vmatprep.subr.mxu0 0.0
  %338 = vmatpush1.msra.mxu0 0.0
  %339 = vmatprep.subr.mxu0 0.0
  %340 = vmatpush1.msra.mxu0 0.0
  %341 = vmatprep.mubr.f32.mxu0 0.0
  %v342 = vand.u32 %v188, 4294901760
  %343 = vmatmul.mubr.f32.gmra.mrb[0].mxu0 %v342
  %v344 = vpop.f32.mrb[0].mxu0
  %v345 = vadd.f32 %v264, %v344
  %v346 = vpop.f32.mrb[0].mxu0
  %347 = vdwg.mxu0
  %348 = vmatprep.subr.mxu0 0.0
  %v349 = vand.u32 %v173, 4294901760
  %v350 = vsub.f32 %v173, %v349
  %351 = vmatpush1.msra.mxu0 %v350
  %352 = vmatprep.subr.mxu0 0.0
  %v353 = vand.u32 %v174, 4294901760
  %v354 = vsub.f32 %v174, %v353
  %355 = vmatpush1.msra.mxu0 %v354
  %356 = vmatprep.subr.mxu0 0.0
  %357 = vmatpush1.msra.mxu0 0.0
  %358 = vmatprep.subr.mxu0 0.0
  %359 = vmatpush1.msra.mxu0 0.0
  %360 = vmatprep.subr.mxu0 0.0
  %361 = vmatpush1.msra.mxu0 0.0
  %362 = vmatprep.subr.mxu0 0.0
  %363 = vmatpush1.msra.mxu0 0.0
  %364 = vmatprep.subr.mxu0 0.0
  %365 = vmatpush1.msra.mxu0 0.0
  %366 = vmatprep.subr.mxu0 0.0
  %367 = vmatpush1.msra.mxu0 0.0
  %368 = vmatprep.subr.mxu0 0.0
  %369 = vmatpush1.msra.mxu0 0.0
  %370 = vmatprep.subr.mxu0 0.0
  %371 = vmatpush1.msra.mxu0 0.0
  %372 = vmatprep.subr.mxu0 0.0
  %373 = vmatpush1.msra.mxu0 0.0
  %374 = vmatprep.subr.mxu0 0.0
  %375 = vmatpush1.msra.mxu0 0.0
  %376 = vmatprep.subr.mxu0 0.0
  %377 = vmatpush1.msra.mxu0 0.0
  %378 = vmatprep.subr.mxu0 0.0
  %379 = vmatpush1.msra.mxu0 0.0
  %380 = vmatprep.subr.mxu0 0.0
  %381 = vmatpush1.msra.mxu0 0.0
  %382 = vmatprep.subr.mxu0 0.0
  %383 = vmatpush1.msra.mxu0 0.0
  %384 = vmatprep.subr.mxu0 0.0
  %385 = vmatpush1.msra.mxu0 0.0
  %386 = vmatprep.subr.mxu0 0.0
  %387 = vmatpush1.msra.mxu0 0.0
  %388 = vmatprep.subr.mxu0 0.0
  %389 = vmatpush1.msra.mxu0 0.0
  %390 = vmatprep.subr.mxu0 0.0
  %391 = vmatpush1.msra.mxu0 0.0
  %392 = vmatprep.subr.mxu0 0.0
  %393 = vmatpush1.msra.mxu0 0.0
  %394 = vmatprep.subr.mxu0 0.0
  %395 = vmatpush1.msra.mxu0 0.0
  %396 = vmatprep.subr.mxu0 0.0
  %397 = vmatpush1.msra.mxu0 0.0
  %398 = vmatprep.subr.mxu0 0.0
  %399 = vmatpush1.msra.mxu0 0.0
  %400 = vmatprep.subr.mxu0 0.0
  %401 = vmatpush1.msra.mxu0 0.0
  %402 = vmatprep.subr.mxu0 0.0
  %403 = vmatpush1.msra.mxu0 0.0
  %404 = vmatprep.subr.mxu0 0.0
  %405 = vmatpush1.msra.mxu0 0.0
  %406 = vmatprep.subr.mxu0 0.0
  %407 = vmatpush1.msra.mxu0 0.0
  %408 = vmatprep.subr.mxu0 0.0
  %409 = vmatpush1.msra.mxu0 0.0
  %410 = vmatprep.subr.mxu0 0.0
  %411 = vmatpush1.msra.mxu0 0.0
  %412 = vmatprep.subr.mxu0 0.0
  %413 = vmatpush1.msra.mxu0 0.0
  %414 = vmatprep.subr.mxu0 0.0
  %415 = vmatpush1.msra.mxu0 0.0
  %416 = vmatprep.mubr.f32.mxu0 0.0
  %v417 = vand.u32 %v188, 4294901760
  %v418 = vsub.f32 %v188, %v417
  %419 = vmatmul.mubr.f32.gmra.mrb[0].mxu0 %v418
  %v420 = vpop.f32.mrb[0].mxu0
  %v421 = vadd.f32 %v345, %v420
  %v422 = vpop.f32.mrb[0].mxu0
  %423 = vdwg.mxu0
  %424 = vmatprep.subr.mxu0 0.0
  %v425 = vand.u32 %v173, 4294901760
  %426 = vmatpush1.msra.mxu0 %v425
  %427 = vmatprep.subr.mxu0 0.0
  %v428 = vand.u32 %v174, 4294901760
  %429 = vmatpush1.msra.mxu0 %v428
  %430 = vmatprep.subr.mxu0 0.0
  %431 = vmatpush1.msra.mxu0 0.0
  %432 = vmatprep.subr.mxu0 0.0
  %433 = vmatpush1.msra.mxu0 0.0
  %434 = vmatprep.subr.mxu0 0.0
  %435 = vmatpush1.msra.mxu0 0.0
  %436 = vmatprep.subr.mxu0 0.0
  %437 = vmatpush1.msra.mxu0 0.0
  %438 = vmatprep.subr.mxu0 0.0
  %439 = vmatpush1.msra.mxu0 0.0
  %440 = vmatprep.subr.mxu0 0.0
  %441 = vmatpush1.msra.mxu0 0.0
  %442 = vmatprep.subr.mxu0 0.0
  %443 = vmatpush1.msra.mxu0 0.0
  %444 = vmatprep.subr.mxu0 0.0
  %445 = vmatpush1.msra.mxu0 0.0
  %446 = vmatprep.subr.mxu0 0.0
  %447 = vmatpush1.msra.mxu0 0.0
  %448 = vmatprep.subr.mxu0 0.0
  %449 = vmatpush1.msra.mxu0 0.0
  %450 = vmatprep.subr.mxu0 0.0
  %451 = vmatpush1.msra.mxu0 0.0
  %452 = vmatprep.subr.mxu0 0.0
  %453 = vmatpush1.msra.mxu0 0.0
  %454 = vmatprep.subr.mxu0 0.0
  %455 = vmatpush1.msra.mxu0 0.0
  %456 = vmatprep.subr.mxu0 0.0
  %457 = vmatpush1.msra.mxu0 0.0
  %458 = vmatprep.subr.mxu0 0.0
  %459 = vmatpush1.msra.mxu0 0.0
  %460 = vmatprep.subr.mxu0 0.0
  %461 = vmatpush1.msra.mxu0 0.0
  %462 = vmatprep.subr.mxu0 0.0
  %463 = vmatpush1.msra.mxu0 0.0
  %464 = vmatprep.subr.mxu0 0.0
  %465 = vmatpush1.msra.mxu0 0.0
  %466 = vmatprep.subr.mxu0 0.0
  %467 = vmatpush1.msra.mxu0 0.0
  %468 = vmatprep.subr.mxu0 0.0
  %469 = vmatpush1.msra.mxu0 0.0
  %470 = vmatprep.subr.mxu0 0.0
  %471 = vmatpush1.msra.mxu0 0.0
  %472 = vmatprep.subr.mxu0 0.0
  %473 = vmatpush1.msra.mxu0 0.0
  %474 = vmatprep.subr.mxu0 0.0
  %475 = vmatpush1.msra.mxu0 0.0
  %476 = vmatprep.subr.mxu0 0.0
  %477 = vmatpush1.msra.mxu0 0.0
  %478 = vmatprep.subr.mxu0 0.0
  %479 = vmatpush1.msra.mxu0 0.0
  %480 = vmatprep.subr.mxu0 0.0
  %481 = vmatpush1.msra.mxu0 0.0
  %482 = vmatprep.subr.mxu0 0.0
  %483 = vmatpush1.msra.mxu0 0.0
  %484 = vmatprep.subr.mxu0 0.0
  %485 = vmatpush1.msra.mxu0 0.0
  %486 = vmatprep.subr.mxu0 0.0
  %487 = vmatpush1.msra.mxu0 0.0
  %488 = vmatprep.subr.mxu0 0.0
  %489 = vmatpush1.msra.mxu0 0.0
  %490 = vmatprep.mubr.f32.mxu0 0.0
  %v491 = vand.u32 %v188, 4294901760
  %v492 = vsub.f32 %v188, %v491
  %v493 = vand.u32 %v492, 4294901760
  %494 = vmatmul.mubr.f32.gmra.mrb[0].mxu0 %v493
  %v495 = vpop.f32.mrb[0].mxu0
  %v496 = vadd.f32 %v421, %v495
  %v497 = vpop.f32.mrb[0].mxu0
  %498 = vdwg.mxu0
  %499 = vmatprep.subr.mxu0 0.0
  %v500 = vand.u32 %v173, 4294901760
  %v501 = vsub.f32 %v173, %v500
  %v502 = vand.u32 %v501, 4294901760
  %503 = vmatpush1.msra.mxu0 %v502
  %504 = vmatprep.subr.mxu0 0.0
  %v505 = vand.u32 %v174, 4294901760
  %v506 = vsub.f32 %v174, %v505
  %v507 = vand.u32 %v506, 4294901760
  %508 = vmatpush1.msra.mxu0 %v507
  %509 = vmatprep.subr.mxu0 0.0
  %510 = vmatpush1.msra.mxu0 0.0
  %511 = vmatprep.subr.mxu0 0.0
  %512 = vmatpush1.msra.mxu0 0.0
  %513 = vmatprep.subr.mxu0 0.0
  %514 = vmatpush1.msra.mxu0 0.0
  %515 = vmatprep.subr.mxu0 0.0
  %516 = vmatpush1.msra.mxu0 0.0
  %517 = vmatprep.subr.mxu0 0.0
  %518 = vmatpush1.msra.mxu0 0.0
  %519 = vmatprep.subr.mxu0 0.0
  %520 = vmatpush1.msra.mxu0 0.0
  %521 = vmatprep.subr.mxu0 0.0
  %522 = vmatpush1.msra.mxu0 0.0
  %523 = vmatprep.subr.mxu0 0.0
  %524 = vmatpush1.msra.mxu0 0.0
  %525 = vmatprep.subr.mxu0 0.0
  %526 = vmatpush1.msra.mxu0 0.0
  %527 = vmatprep.subr.mxu0 0.0
  %528 = vmatpush1.msra.mxu0 0.0
  %529 = vmatprep.subr.mxu0 0.0
  %530 = vmatpush1.msra.mxu0 0.0
  %531 = vmatprep.subr.mxu0 0.0
  %532 = vmatpush1.msra.mxu0 0.0
  %533 = vmatprep.subr.mxu0 0.0
  %534 = vmatpush1.msra.mxu0 0.0
  %535 = vmatprep.subr.mxu0 0.0
  %536 = vmatpush1.msra.mxu0 0.0
  %537 = vmatprep.subr.mxu0 0.0
  %538 = vmatpush1.msra.mxu0 0.0
  %539 = vmatprep.subr.mxu0 0.0
  %540 = vmatpush1.msra.mxu0 0.0
  %541 = vmatprep.subr.mxu0 0.0
  %542 = vmatpush1.msra.mxu0 0.0
  %543 = vmatprep.subr.mxu0 0.0
  %544 = vmatpush1.msra.mxu0 0.0
  %545 = vmatprep.subr.mxu0 0.0
  %546 = vmatpush1.msra.mxu0 0.0
  %547 = vmatprep.subr.mxu0 0.0
  %548 = vmatpush1.msra.mxu0 0.0
  %549 = vmatprep.subr.mxu0 0.0
  %550 = vmatpush1.msra.mxu0 0.0
  %551 = vmatprep.subr.mxu0 0.0
  %552 = vmatpush1.msra.mxu0 0.0
  %553 = vmatprep.subr.mxu0 0.0
  %554 = vmatpush1.msra.mxu0 0.0
  %555 = vmatprep.subr.mxu0 0.0
  %556 = vmatpush1.msra.mxu0 0.0
  %557 = vmatprep.subr.mxu0 0.0
  %558 = vmatpush1.msra.mxu0 0.0
  %559 = vmatprep.subr.mxu0 0.0
  %560 = vmatpush1.msra.mxu0 0.0
  %561 = vmatprep.subr.mxu0 0.0
  %562 = vmatpush1.msra.mxu0 0.0
  %563 = vmatprep.subr.mxu0 0.0
  %564 = vmatpush1.msra.mxu0 0.0
  %565 = vmatprep.subr.mxu0 0.0
  %566 = vmatpush1.msra.mxu0 0.0
  %567 = vmatprep.subr.mxu0 0.0
  %568 = vmatpush1.msra.mxu0 0.0
  %569 = vmatprep.mubr.f32.mxu0 0.0
  %v570 = vand.u32 %v188, 4294901760
  %571 = vmatmul.mubr.f32.gmra.mrb[0].mxu0 %v570
  %v572 = vpop.f32.mrb[0].mxu0
  %v573 = vadd.f32 %v496, %v572
  %v574 = vpop.f32.mrb[0].mxu0
  %575 = vdwg.mxu0
  %576 = vmatprep.subr.mxu0 0.0
  %v577 = vand.u32 %v173, 4294901760
  %578 = vmatpush1.msra.mxu0 %v577
  %579 = vmatprep.subr.mxu0 0.0
  %v580 = vand.u32 %v174, 4294901760
  %581 = vmatpush1.msra.mxu0 %v580
  %582 = vmatprep.subr.mxu0 0.0
  %583 = vmatpush1.msra.mxu0 0.0
  %584 = vmatprep.subr.mxu0 0.0
  %585 = vmatpush1.msra.mxu0 0.0
  %586 = vmatprep.subr.mxu0 0.0
  %587 = vmatpush1.msra.mxu0 0.0
  %588 = vmatprep.subr.mxu0 0.0
  %589 = vmatpush1.msra.mxu0 0.0
  %590 = vmatprep.subr.mxu0 0.0
  %591 = vmatpush1.msra.mxu0 0.0
  %592 = vmatprep.subr.mxu0 0.0
  %593 = vmatpush1.msra.mxu0 0.0
  %594 = vmatprep.subr.mxu0 0.0
  %595 = vmatpush1.msra.mxu0 0.0
  %596 = vmatprep.subr.mxu0 0.0
  %597 = vmatpush1.msra.mxu0 0.0
  %598 = vmatprep.subr.mxu0 0.0
  %599 = vmatpush1.msra.mxu0 0.0
  %600 = vmatprep.subr.mxu0 0.0
  %601 = vmatpush1.msra.mxu0 0.0
  %602 = vmatprep.subr.mxu0 0.0
  %603 = vmatpush1.msra.mxu0 0.0
  %604 = vmatprep.subr.mxu0 0.0
  %605 = vmatpush1.msra.mxu0 0.0
  %606 = vmatprep.subr.mxu0 0.0
  %607 = vmatpush1.msra.mxu0 0.0
  %608 = vmatprep.subr.mxu0 0.0
  %609 = vmatpush1.msra.mxu0 0.0
  %610 = vmatprep.subr.mxu0 0.0
  %611 = vmatpush1.msra.mxu0 0.0
  %612 = vmatprep.subr.mxu0 0.0
  %613 = vmatpush1.msra.mxu0 0.0
  %614 = vmatprep.subr.mxu0 0.0
  %615 = vmatpush1.msra.mxu0 0.0
  %616 = vmatprep.subr.mxu0 0.0
  %617 = vmatpush1.msra.mxu0 0.0
  %618 = vmatprep.subr.mxu0 0.0
  %619 = vmatpush1.msra.mxu0 0.0
  %620 = vmatprep.subr.mxu0 0.0
  %621 = vmatpush1.msra.mxu0 0.0
  %622 = vmatprep.subr.mxu0 0.0
  %623 = vmatpush1.msra.mxu0 0.0
  %624 = vmatprep.subr.mxu0 0.0
  %625 = vmatpush1.msra.mxu0 0.0
  %626 = vmatprep.subr.mxu0 0.0
  %627 = vmatpush1.msra.mxu0 0.0
  %628 = vmatprep.subr.mxu0 0.0
  %629 = vmatpush1.msra.mxu0 0.0
  %630 = vmatprep.subr.mxu0 0.0
  %631 = vmatpush1.msra.mxu0 0.0
  %632 = vmatprep.subr.mxu0 0.0
  %633 = vmatpush1.msra.mxu0 0.0
  %634 = vmatprep.subr.mxu0 0.0
  %635 = vmatpush1.msra.mxu0 0.0
  %636 = vmatprep.subr.mxu0 0.0
  %637 = vmatpush1.msra.mxu0 0.0
  %638 = vmatprep.subr.mxu0 0.0
  %639 = vmatpush1.msra.mxu0 0.0
  %640 = vmatprep.subr.mxu0 0.0
  %641 = vmatpush1.msra.mxu0 0.0
  %642 = vmatprep.mubr.f32.mxu0 0.0
  %v643 = vand.u32 %v188, 4294901760
  %644 = vmatmul.mubr.f32.gmra.mrb[0].mxu0 %v643
  %v645 = vpop.f32.mrb[0].mxu0
  %v646 = vadd.f32 %v573, %v645
  %v647 = vpop.f32.mrb[0].mxu0
  %648 = vdwg.mxu0
  %649 = vmatprep.subr.mxu0 0.0
  %v650 = vand.u32 %v175, 4294901760
  %651 = vmatpush1.msra.mxu0 %v650
  %652 = vmatprep.subr.mxu0 0.0
  %v653 = vand.u32 %v176, 4294901760
  %654 = vmatpush1.msra.mxu0 %v653
  %655 = vmatprep.subr.mxu0 0.0
  %656 = vmatpush1.msra.mxu0 0.0
  %657 = vmatprep.subr.mxu0 0.0
  %658 = vmatpush1.msra.mxu0 0.0
  %659 = vmatprep.subr.mxu0 0.0
  %660 = vmatpush1.msra.mxu0 0.0
  %661 = vmatprep.subr.mxu0 0.0
  %662 = vmatpush1.msra.mxu0 0.0
  %663 = vmatprep.subr.mxu0 0.0
  %664 = vmatpush1.msra.mxu0 0.0
  %665 = vmatprep.subr.mxu0 0.0
  %666 = vmatpush1.msra.mxu0 0.0
  %667 = vmatprep.subr.mxu0 0.0
  %668 = vmatpush1.msra.mxu0 0.0
  %669 = vmatprep.subr.mxu0 0.0
  %670 = vmatpush1.msra.mxu0 0.0
  %671 = vmatprep.subr.mxu0 0.0
  %672 = vmatpush1.msra.mxu0 0.0
  %673 = vmatprep.subr.mxu0 0.0
  %674 = vmatpush1.msra.mxu0 0.0
  %675 = vmatprep.subr.mxu0 0.0
  %676 = vmatpush1.msra.mxu0 0.0
  %677 = vmatprep.subr.mxu0 0.0
  %678 = vmatpush1.msra.mxu0 0.0
  %679 = vmatprep.subr.mxu0 0.0
  %680 = vmatpush1.msra.mxu0 0.0
  %681 = vmatprep.subr.mxu0 0.0
  %682 = vmatpush1.msra.mxu0 0.0
  %683 = vmatprep.subr.mxu0 0.0
  %684 = vmatpush1.msra.mxu0 0.0
  %685 = vmatprep.subr.mxu0 0.0
  %686 = vmatpush1.msra.mxu0 0.0
  %687 = vmatprep.subr.mxu0 0.0
  %688 = vmatpush1.msra.mxu0 0.0
  %689 = vmatprep.subr.mxu0 0.0
  %690 = vmatpush1.msra.mxu0 0.0
  %691 = vmatprep.subr.mxu0 0.0
  %692 = vmatpush1.msra.mxu0 0.0
  %693 = vmatprep.subr.mxu0 0.0
  %694 = vmatpush1.msra.mxu0 0.0
  %695 = vmatprep.subr.mxu0 0.0
  %696 = vmatpush1.msra.mxu0 0.0
  %697 = vmatprep.subr.mxu0 0.0
  %698 = vmatpush1.msra.mxu0 0.0
  %699 = vmatprep.subr.mxu0 0.0
  %700 = vmatpush1.msra.mxu0 0.0
  %701 = vmatprep.subr.mxu0 0.0
  %702 = vmatpush1.msra.mxu0 0.0
  %703 = vmatprep.subr.mxu0 0.0
  %704 = vmatpush1.msra.mxu0 0.0
  %705 = vmatprep.subr.mxu0 0.0
  %706 = vmatpush1.msra.mxu0 0.0
  %707 = vmatprep.subr.mxu0 0.0
  %708 = vmatpush1.msra.mxu0 0.0
  %709 = vmatprep.subr.mxu0 0.0
  %710 = vmatpush1.msra.mxu0 0.0
  %711 = vmatprep.subr.mxu0 0.0
  %712 = vmatpush1.msra.mxu0 0.0
  %713 = vmatprep.subr.mxu0 0.0
  %714 = vmatpush1.msra.mxu0 0.0
  %715 = vmatprep.mubr.f32.mxu0 0.0
  %v716 = vand.u32 %v188, 4294901760
  %v717 = vsub.f32 %v188, %v716
  %v718 = vand.u32 %v717, 4294901760
  %v719 = vsub.f32 %v717, %v718
  %v720 = vand.u32 %v719, 4294901760
  %721 = vmatmul.mubr.f32.gmra.mrb[0].mxu0 %v720
  %v722 = vpop.f32.mrb[0].mxu0
  %v723 = vadd.f32 %v184, %v722
  %v724 = vpop.f32.mrb[0].mxu0
  %725 = vdwg.mxu0
  %726 = vmatprep.subr.mxu0 0.0
  %v727 = vand.u32 %v175, 4294901760
  %v728 = vsub.f32 %v175, %v727
  %v729 = vand.u32 %v728, 4294901760
  %v730 = vsub.f32 %v728, %v729
  %v731 = vand.u32 %v730, 4294901760
  %732 = vmatpush1.msra.mxu0 %v731
  %733 = vmatprep.subr.mxu0 0.0
  %v734 = vand.u32 %v176, 4294901760
  %v735 = vsub.f32 %v176, %v734
  %v736 = vand.u32 %v735, 4294901760
  %v737 = vsub.f32 %v735, %v736
  %v738 = vand.u32 %v737, 4294901760
  %739 = vmatpush1.msra.mxu0 %v738
  %740 = vmatprep.subr.mxu0 0.0
  %741 = vmatpush1.msra.mxu0 0.0
  %742 = vmatprep.subr.mxu0 0.0
  %743 = vmatpush1.msra.mxu0 0.0
  %744 = vmatprep.subr.mxu0 0.0
  %745 = vmatpush1.msra.mxu0 0.0
  %746 = vmatprep.subr.mxu0 0.0
  %747 = vmatpush1.msra.mxu0 0.0
  %748 = vmatprep.subr.mxu0 0.0
  %749 = vmatpush1.msra.mxu0 0.0
  %750 = vmatprep.subr.mxu0 0.0
  %751 = vmatpush1.msra.mxu0 0.0
  %752 = vmatprep.subr.mxu0 0.0
  %753 = vmatpush1.msra.mxu0 0.0
  %754 = vmatprep.subr.mxu0 0.0
  %755 = vmatpush1.msra.mxu0 0.0
  %756 = vmatprep.subr.mxu0 0.0
  %757 = vmatpush1.msra.mxu0 0.0
  %758 = vmatprep.subr.mxu0 0.0
  %759 = vmatpush1.msra.mxu0 0.0
  %760 = vmatprep.subr.mxu0 0.0
  %761 = vmatpush1.msra.mxu0 0.0
  %762 = vmatprep.subr.mxu0 0.0
  %763 = vmatpush1.msra.mxu0 0.0
  %764 = vmatprep.subr.mxu0 0.0
  %765 = vmatpush1.msra.mxu0 0.0
  %766 = vmatprep.subr.mxu0 0.0
  %767 = vmatpush1.msra.mxu0 0.0
  %768 = vmatprep.subr.mxu0 0.0
  %769 = vmatpush1.msra.mxu0 0.0
  %770 = vmatprep.subr.mxu0 0.0
  %771 = vmatpush1.msra.mxu0 0.0
  %772 = vmatprep.subr.mxu0 0.0
  %773 = vmatpush1.msra.mxu0 0.0
  %774 = vmatprep.subr.mxu0 0.0
  %775 = vmatpush1.msra.mxu0 0.0
  %776 = vmatprep.subr.mxu0 0.0
  %777 = vmatpush1.msra.mxu0 0.0
  %778 = vmatprep.subr.mxu0 0.0
  %779 = vmatpush1.msra.mxu0 0.0
  %780 = vmatprep.subr.mxu0 0.0
  %781 = vmatpush1.msra.mxu0 0.0
  %782 = vmatprep.subr.mxu0 0.0
  %783 = vmatpush1.msra.mxu0 0.0
  %784 = vmatprep.subr.mxu0 0.0
  %785 = vmatpush1.msra.mxu0 0.0
  %786 = vmatprep.subr.mxu0 0.0
  %787 = vmatpush1.msra.mxu0 0.0
  %788 = vmatprep.subr.mxu0 0.0
  %789 = vmatpush1.msra.mxu0 0.0
  %790 = vmatprep.subr.mxu0 0.0
  %791 = vmatpush1.msra.mxu0 0.0
  %792 = vmatprep.subr.mxu0 0.0
  %793 = vmatpush1.msra.mxu0 0.0
  %794 = vmatprep.subr.mxu0 0.0
  %795 = vmatpush1.msra.mxu0 0.0
  %796 = vmatprep.subr.mxu0 0.0
  %797 = vmatpush1.msra.mxu0 0.0
  %798 = vmatprep.subr.mxu0 0.0
  %799 = vmatpush1.msra.mxu0 0.0
  %800 = vmatprep.mubr.f32.mxu0 0.0
  %v801 = vand.u32 %v188, 4294901760
  %802 = vmatmul.mubr.f32.gmra.mrb[0].mxu0 %v801
  %v803 = vpop.f32.mrb[0].mxu0
  %v804 = vadd.f32 %v723, %v803
  %v805 = vpop.f32.mrb[0].mxu0
  %806 = vdwg.mxu0
  %807 = vmatprep.subr.mxu0 0.0
  %v808 = vand.u32 %v175, 4294901760
  %v809 = vsub.f32 %v175, %v808
  %810 = vmatpush1.msra.mxu0 %v809
  %811 = vmatprep.subr.mxu0 0.0
  %v812 = vand.u32 %v176, 4294901760
  %v813 = vsub.f32 %v176, %v812
  %814 = vmatpush1.msra.mxu0 %v813
  %815 = vmatprep.subr.mxu0 0.0
  %816 = vmatpush1.msra.mxu0 0.0
  %817 = vmatprep.subr.mxu0 0.0
  %818 = vmatpush1.msra.mxu0 0.0
  %819 = vmatprep.subr.mxu0 0.0
  %820 = vmatpush1.msra.mxu0 0.0
  %821 = vmatprep.subr.mxu0 0.0
  %822 = vmatpush1.msra.mxu0 0.0
  %823 = vmatprep.subr.mxu0 0.0
  %824 = vmatpush1.msra.mxu0 0.0
  %825 = vmatprep.subr.mxu0 0.0
  %826 = vmatpush1.msra.mxu0 0.0
  %827 = vmatprep.subr.mxu0 0.0
  %828 = vmatpush1.msra.mxu0 0.0
  %829 = vmatprep.subr.mxu0 0.0
  %830 = vmatpush1.msra.mxu0 0.0
  %831 = vmatprep.subr.mxu0 0.0
  %832 = vmatpush1.msra.mxu0 0.0
  %833 = vmatprep.subr.mxu0 0.0
  %834 = vmatpush1.msra.mxu0 0.0
  %835 = vmatprep.subr.mxu0 0.0
  %836 = vmatpush1.msra.mxu0 0.0
  %837 = vmatprep.subr.mxu0 0.0
  %838 = vmatpush1.msra.mxu0 0.0
  %839 = vmatprep.subr.mxu0 0.0
  %840 = vmatpush1.msra.mxu0 0.0
  %841 = vmatprep.subr.mxu0 0.0
  %842 = vmatpush1.msra.mxu0 0.0
  %843 = vmatprep.subr.mxu0 0.0
  %844 = vmatpush1.msra.mxu0 0.0
  %845 = vmatprep.subr.mxu0 0.0
  %846 = vmatpush1.msra.mxu0 0.0
  %847 = vmatprep.subr.mxu0 0.0
  %848 = vmatpush1.msra.mxu0 0.0
  %849 = vmatprep.subr.mxu0 0.0
  %850 = vmatpush1.msra.mxu0 0.0
  %851 = vmatprep.subr.mxu0 0.0
  %852 = vmatpush1.msra.mxu0 0.0
  %853 = vmatprep.subr.mxu0 0.0
  %854 = vmatpush1.msra.mxu0 0.0
  %855 = vmatprep.subr.mxu0 0.0
  %856 = vmatpush1.msra.mxu0 0.0
  %857 = vmatprep.subr.mxu0 0.0
  %858 = vmatpush1.msra.mxu0 0.0
  %859 = vmatprep.subr.mxu0 0.0
  %860 = vmatpush1.msra.mxu0 0.0
  %861 = vmatprep.subr.mxu0 0.0
  %862 = vmatpush1.msra.mxu0 0.0
  %863 = vmatprep.subr.mxu0 0.0
  %864 = vmatpush1.msra.mxu0 0.0
  %865 = vmatprep.subr.mxu0 0.0
  %866 = vmatpush1.msra.mxu0 0.0
  %867 = vmatprep.subr.mxu0 0.0
  %868 = vmatpush1.msra.mxu0 0.0
  %869 = vmatprep.subr.mxu0 0.0
  %870 = vmatpush1.msra.mxu0 0.0
  %871 = vmatprep.subr.mxu0 0.0
  %872 = vmatpush1.msra.mxu0 0.0
  %873 = vmatprep.subr.mxu0 0.0
  %874 = vmatpush1.msra.mxu0 0.0
  %875 = vmatprep.mubr.f32.mxu0 0.0
  %v876 = vand.u32 %v188, 4294901760
  %v877 = vsub.f32 %v188, %v876
  %878 = vmatmul.mubr.f32.gmra.mrb[0].mxu0 %v877
  %v879 = vpop.f32.mrb[0].mxu0
  %v880 = vadd.f32 %v804, %v879
  %v881 = vpop.f32.mrb[0].mxu0
  %882 = vdwg.mxu0
  %883 = vmatprep.subr.mxu0 0.0
  %v884 = vand.u32 %v175, 4294901760
  %885 = vmatpush1.msra.mxu0 %v884
  %886 = vmatprep.subr.mxu0 0.0
  %v887 = vand.u32 %v176, 4294901760
  %888 = vmatpush1.msra.mxu0 %v887
  %889 = vmatprep.subr.mxu0 0.0
  %890 = vmatpush1.msra.mxu0 0.0
  %891 = vmatprep.subr.mxu0 0.0
  %892 = vmatpush1.msra.mxu0 0.0
  %893 = vmatprep.subr.mxu0 0.0
  %894 = vmatpush1.msra.mxu0 0.0
  %895 = vmatprep.subr.mxu0 0.0
  %896 = vmatpush1.msra.mxu0 0.0
  %897 = vmatprep.subr.mxu0 0.0
  %898 = vmatpush1.msra.mxu0 0.0
  %899 = vmatprep.subr.mxu0 0.0
  %900 = vmatpush1.msra.mxu0 0.0
  %901 = vmatprep.subr.mxu0 0.0
  %902 = vmatpush1.msra.mxu0 0.0
  %903 = vmatprep.subr.mxu0 0.0
  %904 = vmatpush1.msra.mxu0 0.0
  %905 = vmatprep.subr.mxu0 0.0
  %906 = vmatpush1.msra.mxu0 0.0
  %907 = vmatprep.subr.mxu0 0.0
  %908 = vmatpush1.msra.mxu0 0.0
  %909 = vmatprep.subr.mxu0 0.0
  %910 = vmatpush1.msra.mxu0 0.0
  %911 = vmatprep.subr.mxu0 0.0
  %912 = vmatpush1.msra.mxu0 0.0
  %913 = vmatprep.subr.mxu0 0.0
  %914 = vmatpush1.msra.mxu0 0.0
  %915 = vmatprep.subr.mxu0 0.0
  %916 = vmatpush1.msra.mxu0 0.0
  %917 = vmatprep.subr.mxu0 0.0
  %918 = vmatpush1.msra.mxu0 0.0
  %919 = vmatprep.subr.mxu0 0.0
  %920 = vmatpush1.msra.mxu0 0.0
  %921 = vmatprep.subr.mxu0 0.0
  %922 = vmatpush1.msra.mxu0 0.0
  %923 = vmatprep.subr.mxu0 0.0
  %924 = vmatpush1.msra.mxu0 0.0
  %925 = vmatprep.subr.mxu0 0.0
  %926 = vmatpush1.msra.mxu0 0.0
  %927 = vmatprep.subr.mxu0 0.0
  %928 = vmatpush1.msra.mxu0 0.0
  %929 = vmatprep.subr.mxu0 0.0
  %930 = vmatpush1.msra.mxu0 0.0
  %931 = vmatprep.subr.mxu0 0.0
  %932 = vmatpush1.msra.mxu0 0.0
  %933 = vmatprep.subr.mxu0 0.0
  %934 = vmatpush1.msra.mxu0 0.0
  %935 = vmatprep.subr.mxu0 0.0
  %936 = vmatpush1.msra.mxu0 0.0
  %937 = vmatprep.subr.mxu0 0.0
  %938 = vmatpush1.msra.mxu0 0.0
  %939 = vmatprep.subr.mxu0 0.0
  %940 = vmatpush1.msra.mxu0 0.0
  %941 = vmatprep.subr.mxu0 0.0
  %942 = vmatpush1.msra.mxu0 0.0
  %943 = vmatprep.subr.mxu0 0.0
  %944 = vmatpush1.msra.mxu0 0.0
  %945 = vmatprep.subr.mxu0 0.0
  %946 = vmatpush1.msra.mxu0 0.0
  %947 = vmatprep.subr.mxu0 0.0
  %948 = vmatpush1.msra.mxu0 0.0
  %949 = vmatprep.mubr.f32.mxu0 0.0
  %v950 = vand.u32 %v188, 4294901760
  %v951 = vsub.f32 %v188, %v950
  %v952 = vand.u32 %v951, 4294901760
  %953 = vmatmul.mubr.f32.gmra.mrb[0].mxu0 %v952
  %v954 = vpop.f32.mrb[0].mxu0
  %v955 = vadd.f32 %v880, %v954
  %v956 = vpop.f32.mrb[0].mxu0
  %957 = vdwg.mxu0
  %958 = vmatprep.subr.mxu0 0.0
  %v959 = vand.u32 %v175, 4294901760
  %v960 = vsub.f32 %v175, %v959
  %v961 = vand.u32 %v960, 4294901760
  %962 = vmatpush1.msra.mxu0 %v961
  %963 = vmatprep.subr.mxu0 0.0
  %v964 = vand.u32 %v176, 4294901760
  %v965 = vsub.f32 %v176, %v964
  %v966 = vand.u32 %v965, 4294901760
  %967 = vmatpush1.msra.mxu0 %v966
  %968 = vmatprep.subr.mxu0 0.0
  %969 = vmatpush1.msra.mxu0 0.0
  %970 = vmatprep.subr.mxu0 0.0
  %971 = vmatpush1.msra.mxu0 0.0
  %972 = vmatprep.subr.mxu0 0.0
  %973 = vmatpush1.msra.mxu0 0.0
  %974 = vmatprep.subr.mxu0 0.0
  %975 = vmatpush1.msra.mxu0 0.0
  %976 = vmatprep.subr.mxu0 0.0
  %977 = vmatpush1.msra.mxu0 0.0
  %978 = vmatprep.subr.mxu0 0.0
  %979 = vmatpush1.msra.mxu0 0.0
  %980 = vmatprep.subr.mxu0 0.0
  %981 = vmatpush1.msra.mxu0 0.0
  %982 = vmatprep.subr.mxu0 0.0
  %983 = vmatpush1.msra.mxu0 0.0
  %984 = vmatprep.subr.mxu0 0.0
  %985 = vmatpush1.msra.mxu0 0.0
  %986 = vmatprep.subr.mxu0 0.0
  %987 = vmatpush1.msra.mxu0 0.0
  %988 = vmatprep.subr.mxu0 0.0
  %989 = vmatpush1.msra.mxu0 0.0
  %990 = vmatprep.subr.mxu0 0.0
  %991 = vmatpush1.msra.mxu0 0.0
  %992 = vmatprep.subr.mxu0 0.0
  %993 = vmatpush1.msra.mxu0 0.0
  %994 = vmatprep.subr.mxu0 0.0
  %995 = vmatpush1.msra.mxu0 0.0
  %996 = vmatprep.subr.mxu0 0.0
  %997 = vmatpush1.msra.mxu0 0.0
  %998 = vmatprep.subr.mxu0 0.0
  %999 = vmatpush1.msra.mxu0 0.0
  %1000 = vmatprep.subr.mxu0 0.0
  %1001 = vmatpush1.msra.mxu0 0.0
  %1002 = vmatprep.subr.mxu0 0.0
  %1003 = vmatpush1.msra.mxu0 0.0
  %1004 = vmatprep.subr.mxu0 0.0
  %1005 = vmatpush1.msra.mxu0 0.0
  %1006 = vmatprep.subr.mxu0 0.0
  %1007 = vmatpush1.msra.mxu0 0.0
  %1008 = vmatprep.subr.mxu0 0.0
  %1009 = vmatpush1.msra.mxu0 0.0
  %1010 = vmatprep.subr.mxu0 0.0
  %1011 = vmatpush1.msra.mxu0 0.0
  %1012 = vmatprep.subr.mxu0 0.0
  %1013 = vmatpush1.msra.mxu0 0.0
  %1014 = vmatprep.subr.mxu0 0.0
  %1015 = vmatpush1.msra.mxu0 0.0
  %1016 = vmatprep.subr.mxu0 0.0
  %1017 = vmatpush1.msra.mxu0 0.0
  %1018 = vmatprep.subr.mxu0 0.0
  %1019 = vmatpush1.msra.mxu0 0.0
  %1020 = vmatprep.subr.mxu0 0.0
  %1021 = vmatpush1.msra.mxu0 0.0
  %1022 = vmatprep.subr.mxu0 0.0
  %1023 = vmatpush1.msra.mxu0 0.0
  %1024 = vmatprep.subr.mxu0 0.0
  %1025 = vmatpush1.msra.mxu0 0.0
  %1026 = vmatprep.subr.mxu0 0.0
  %1027 = vmatpush1.msra.mxu0 0.0
  %1028 = vmatprep.mubr.f32.mxu0 0.0
  %v1029 = vand.u32 %v188, 4294901760
  %1030 = vmatmul.mubr.f32.gmra.mrb[0].mxu0 %v1029
  %v1031 = vpop.f32.mrb[0].mxu0
  %v1032 = vadd.f32 %v955, %v1031
  %v1033 = vpop.f32.mrb[0].mxu0
  %1034 = vdwg.mxu0
  %1035 = vmatprep.subr.mxu0 0.0
  %v1036 = vand.u32 %v175, 4294901760
  %1037 = vmatpush1.msra.mxu0 %v1036
  %1038 = vmatprep.subr.mxu0 0.0
  %v1039 = vand.u32 %v176, 4294901760
  %1040 = vmatpush1.msra.mxu0 %v1039
  %1041 = vmatprep.subr.mxu0 0.0
  %1042 = vmatpush1.msra.mxu0 0.0
  %1043 = vmatprep.subr.mxu0 0.0
  %1044 = vmatpush1.msra.mxu0 0.0
  %1045 = vmatprep.subr.mxu0 0.0
  %1046 = vmatpush1.msra.mxu0 0.0
  %1047 = vmatprep.subr.mxu0 0.0
  %1048 = vmatpush1.msra.mxu0 0.0
  %1049 = vmatprep.subr.mxu0 0.0
  %1050 = vmatpush1.msra.mxu0 0.0
  %1051 = vmatprep.subr.mxu0 0.0
  %1052 = vmatpush1.msra.mxu0 0.0
  %1053 = vmatprep.subr.mxu0 0.0
  %1054 = vmatpush1.msra.mxu0 0.0
  %1055 = vmatprep.subr.mxu0 0.0
  %1056 = vmatpush1.msra.mxu0 0.0
  %1057 = vmatprep.subr.mxu0 0.0
  %1058 = vmatpush1.msra.mxu0 0.0
  %1059 = vmatprep.subr.mxu0 0.0
  %1060 = vmatpush1.msra.mxu0 0.0
  %1061 = vmatprep.subr.mxu0 0.0
  %1062 = vmatpush1.msra.mxu0 0.0
  %1063 = vmatprep.subr.mxu0 0.0
  %1064 = vmatpush1.msra.mxu0 0.0
  %1065 = vmatprep.subr.mxu0 0.0
  %1066 = vmatpush1.msra.mxu0 0.0
  %1067 = vmatprep.subr.mxu0 0.0
  %1068 = vmatpush1.msra.mxu0 0.0
  %1069 = vmatprep.subr.mxu0 0.0
  %1070 = vmatpush1.msra.mxu0 0.0
  %1071 = vmatprep.subr.mxu0 0.0
  %1072 = vmatpush1.msra.mxu0 0.0
  %1073 = vmatprep.subr.mxu0 0.0
  %1074 = vmatpush1.msra.mxu0 0.0
  %1075 = vmatprep.subr.mxu0 0.0
  %1076 = vmatpush1.msra.mxu0 0.0
  %1077 = vmatprep.subr.mxu0 0.0
  %1078 = vmatpush1.msra.mxu0 0.0
  %1079 = vmatprep.subr.mxu0 0.0
  %1080 = vmatpush1.msra.mxu0 0.0
  %1081 = vmatprep.subr.mxu0 0.0
  %1082 = vmatpush1.msra.mxu0 0.0
  %1083 = vmatprep.subr.mxu0 0.0
  %1084 = vmatpush1.msra.mxu0 0.0
  %1085 = vmatprep.subr.mxu0 0.0
  %1086 = vmatpush1.msra.mxu0 0.0
  %1087 = vmatprep.subr.mxu0 0.0
  %1088 = vmatpush1.msra.mxu0 0.0
  %1089 = vmatprep.subr.mxu0 0.0
  %1090 = vmatpush1.msra.mxu0 0.0
  %1091 = vmatprep.subr.mxu0 0.0
  %1092 = vmatpush1.msra.mxu0 0.0
  %1093 = vmatprep.subr.mxu0 0.0
  %1094 = vmatpush1.msra.mxu0 0.0
  %1095 = vmatprep.subr.mxu0 0.0
  %1096 = vmatpush1.msra.mxu0 0.0
  %1097 = vmatprep.subr.mxu0 0.0
  %1098 = vmatpush1.msra.mxu0 0.0
  %1099 = vmatprep.subr.mxu0 0.0
  %1100 = vmatpush1.msra.mxu0 0.0
  %1101 = vmatprep.mubr.f32.mxu0 0.0
  %v1102 = vand.u32 %v188, 4294901760
  %1103 = vmatmul.mubr.f32.gmra.mrb[0].mxu0 %v1102
  %v1104 = vpop.f32.mrb[0].mxu0
  %v1105 = vadd.f32 %v1032, %v1104
  %v1106 = vpop.f32.mrb[0].mxu0
  %1107 = vdwg.mxu0
  %v1108 = vmax.f32 %v646, 0.0
  %v1109 = vmax.f32 %v1105, 0.0
  %v1110 = vld [vmem:[%s4] sm:$0xff]
  %v1111 = vld [vmem:[%s4 + $0x8] sm:$0xff]
  %1113 = vset.pattern.permute.xlu0 0
  %1114 = vperm.xlu0 %1113, %v1110
  %v1115 = vpop.permute.xlu0 %1114
  %1118 = vset.pattern.permute.xlu0 0
  %1119 = vperm.xlu0 %1118, %v1111
  %v1120 = vpop.permute.xlu0 %1119
  %v1123 = vsel %vm167, %v178, 0
  %v1126 = vsel %vm167, %v179, 0
  %vm1128 = vcmask 1041408
  %v1130 = vsel %vm1128, %v1108, 0
  %1132 = vmatprep.subr.mxu0 0.0
  %v1133 = vand.u32 %v1130, 4294901760
  %1134 = vmatpush1.msra.mxu0 %v1133
  %1135 = vmatprep.subr.mxu0 0.0
  %1136 = vmatpush1.msra.mxu0 0.0
  %1137 = vmatprep.subr.mxu0 0.0
  %1138 = vmatpush1.msra.mxu0 0.0
  %1139 = vmatprep.subr.mxu0 0.0
  %1140 = vmatpush1.msra.mxu0 0.0
  %1141 = vmatprep.subr.mxu0 0.0
  %1142 = vmatpush1.msra.mxu0 0.0
  %1143 = vmatprep.subr.mxu0 0.0
  %1144 = vmatpush1.msra.mxu0 0.0
  %1145 = vmatprep.subr.mxu0 0.0
  %1146 = vmatpush1.msra.mxu0 0.0
  %1147 = vmatprep.subr.mxu0 0.0
  %1148 = vmatpush1.msra.mxu0 0.0
  %1149 = vmatprep.subr.mxu0 0.0
  %1150 = vmatpush1.msra.mxu0 0.0
  %1151 = vmatprep.subr.mxu0 0.0
  %1152 = vmatpush1.msra.mxu0 0.0
  %1153 = vmatprep.subr.mxu0 0.0
  %1154 = vmatpush1.msra.mxu0 0.0
  %1155 = vmatprep.subr.mxu0 0.0
  %1156 = vmatpush1.msra.mxu0 0.0
  %1157 = vmatprep.subr.mxu0 0.0
  %1158 = vmatpush1.msra.mxu0 0.0
  %1159 = vmatprep.subr.mxu0 0.0
  %1160 = vmatpush1.msra.mxu0 0.0
  %1161 = vmatprep.subr.mxu0 0.0
  %1162 = vmatpush1.msra.mxu0 0.0
  %1163 = vmatprep.subr.mxu0 0.0
  %1164 = vmatpush1.msra.mxu0 0.0
  %1165 = vmatprep.subr.mxu0 0.0
  %1166 = vmatpush1.msra.mxu0 0.0
  %1167 = vmatprep.subr.mxu0 0.0
  %1168 = vmatpush1.msra.mxu0 0.0
  %1169 = vmatprep.subr.mxu0 0.0
  %1170 = vmatpush1.msra.mxu0 0.0
  %1171 = vmatprep.subr.mxu0 0.0
  %1172 = vmatpush1.msra.mxu0 0.0
  %1173 = vmatprep.subr.mxu0 0.0
  %1174 = vmatpush1.msra.mxu0 0.0
  %1175 = vmatprep.subr.mxu0 0.0
  %1176 = vmatpush1.msra.mxu0 0.0
  %1177 = vmatprep.subr.mxu0 0.0
  %1178 = vmatpush1.msra.mxu0 0.0
  %1179 = vmatprep.subr.mxu0 0.0
  %1180 = vmatpush1.msra.mxu0 0.0
  %1181 = vmatprep.subr.mxu0 0.0
  %1182 = vmatpush1.msra.mxu0 0.0
  %1183 = vmatprep.subr.mxu0 0.0
  %1184 = vmatpush1.msra.mxu0 0.0
  %1185 = vmatprep.subr.mxu0 0.0
  %1186 = vmatpush1.msra.mxu0 0.0
  %1187 = vmatprep.subr.mxu0 0.0
  %1188 = vmatpush1.msra.mxu0 0.0
  %1189 = vmatprep.subr.mxu0 0.0
  %1190 = vmatpush1.msra.mxu0 0.0
  %1191 = vmatprep.subr.mxu0 0.0
  %1192 = vmatpush1.msra.mxu0 0.0
  %1193 = vmatprep.subr.mxu0 0.0
  %1194 = vmatpush1.msra.mxu0 0.0
  %1195 = vmatprep.subr.mxu0 0.0
  %1196 = vmatpush1.msra.mxu0 0.0
  %1197 = vmatprep.mubr.f32.mxu0 0.0
  %v1198 = vand.u32 %v1123, 4294901760
  %v1199 = vsub.f32 %v1123, %v1198
  %v1200 = vand.u32 %v1199, 4294901760
  %v1201 = vsub.f32 %v1199, %v1200
  %v1202 = vand.u32 %v1201, 4294901760
  %1203 = vmatmul.mubr.f32.gmra.mrb[0].mxu0 %v1202
  %v1204 = vpop.f32.mrb[0].mxu0
  %v1205 = vadd.f32 %v1115, %v1204
  %v1206 = vpop.f32.mrb[0].mxu0
  %1207 = vmatprep.mubr.f32.mxu0 0.0
  %v1208 = vand.u32 %v1126, 4294901760
  %v1209 = vsub.f32 %v1126, %v1208
  %v1210 = vand.u32 %v1209, 4294901760
  %v1211 = vsub.f32 %v1209, %v1210
  %v1212 = vand.u32 %v1211, 4294901760
  %1213 = vmatmul.mubr.f32.gmra.mrb[0].mxu0 %v1212
  %v1214 = vpop.f32.mrb[0].mxu0
  %v1215 = vadd.f32 %v1120, %v1214
  %v1216 = vpop.f32.mrb[0].mxu0
  %1217 = vdwg.mxu0
  %1218 = vmatprep.subr.mxu0 0.0
  %v1219 = vand.u32 %v1130, 4294901760
  %v1220 = vsub.f32 %v1130, %v1219
  %v1221 = vand.u32 %v1220, 4294901760
  %v1222 = vsub.f32 %v1220, %v1221
  %v1223 = vand.u32 %v1222, 4294901760
  %1224 = vmatpush1.msra.mxu0 %v1223
  %1225 = vmatprep.subr.mxu0 0.0
  %1226 = vmatpush1.msra.mxu0 0.0
  %1227 = vmatprep.subr.mxu0 0.0
  %1228 = vmatpush1.msra.mxu0 0.0
  %1229 = vmatprep.subr.mxu0 0.0
  %1230 = vmatpush1.msra.mxu0 0.0
  %1231 = vmatprep.subr.mxu0 0.0
  %1232 = vmatpush1.msra.mxu0 0.0
  %1233 = vmatprep.subr.mxu0 0.0
  %1234 = vmatpush1.msra.mxu0 0.0
  %1235 = vmatprep.subr.mxu0 0.0
  %1236 = vmatpush1.msra.mxu0 0.0
  %1237 = vmatprep.subr.mxu0 0.0
  %1238 = vmatpush1.msra.mxu0 0.0
  %1239 = vmatprep.subr.mxu0 0.0
  %1240 = vmatpush1.msra.mxu0 0.0
  %1241 = vmatprep.subr.mxu0 0.0
  %1242 = vmatpush1.msra.mxu0 0.0
  %1243 = vmatprep.subr.mxu0 0.0
  %1244 = vmatpush1.msra.mxu0 0.0
  %1245 = vmatprep.subr.mxu0 0.0
  %1246 = vmatpush1.msra.mxu0 0.0
  %1247 = vmatprep.subr.mxu0 0.0
  %1248 = vmatpush1.msra.mxu0 0.0
  %1249 = vmatprep.subr.mxu0 0.0
  %1250 = vmatpush1.msra.mxu0 0.0
  %1251 = vmatprep.subr.mxu0 0.0
  %1252 = vmatpush1.msra.mxu0 0.0
  %1253 = vmatprep.subr.mxu0 0.0
  %1254 = vmatpush1.msra.mxu0 0.0
  %1255 = vmatprep.subr.mxu0 0.0
  %1256 = vmatpush1.msra.mxu0 0.0
  %1257 = vmatprep.subr.mxu0 0.0
  %1258 = vmatpush1.msra.mxu0 0.0
  %1259 = vmatprep.subr.mxu0 0.0
  %1260 = vmatpush1.msra.mxu0 0.0
  %1261 = vmatprep.subr.mxu0 0.0
  %1262 = vmatpush1.msra.mxu0 0.0
  %1263 = vmatprep.subr.mxu0 0.0
  %1264 = vmatpush1.msra.mxu0 0.0
  %1265 = vmatprep.subr.mxu0 0.0
  %1266 = vmatpush1.msra.mxu0 0.0
  %1267 = vmatprep.subr.mxu0 0.0
  %1268 = vmatpush1.msra.mxu0 0.0
  %1269 = vmatprep.subr.mxu0 0.0
  %1270 = vmatpush1.msra.mxu0 0.0
  %1271 = vmatprep.subr.mxu0 0.0
  %1272 = vmatpush1.msra.mxu0 0.0
  %1273 = vmatprep.subr.mxu0 0.0
  %1274 = vmatpush1.msra.mxu0 0.0
  %1275 = vmatprep.subr.mxu0 0.0
  %1276 = vmatpush1.msra.mxu0 0.0
  %1277 = vmatprep.subr.mxu0 0.0
  %1278 = vmatpush1.msra.mxu0 0.0
  %1279 = vmatprep.subr.mxu0 0.0
  %1280 = vmatpush1.msra.mxu0 0.0
  %1281 = vmatprep.subr.mxu0 0.0
  %1282 = vmatpush1.msra.mxu0 0.0
  %1283 = vmatprep.subr.mxu0 0.0
  %1284 = vmatpush1.msra.mxu0 0.0
  %1285 = vmatprep.subr.mxu0 0.0
  %1286 = vmatpush1.msra.mxu0 0.0
  %1287 = vmatprep.mubr.f32.mxu0 0.0
  %v1288 = vand.u32 %v1123, 4294901760
  %1289 = vmatmul.mubr.f32.gmra.mrb[0].mxu0 %v1288
  %v1290 = vpop.f32.mrb[0].mxu0
  %v1291 = vadd.f32 %v1205, %v1290
  %v1292 = vpop.f32.mrb[0].mxu0
  %1293 = vmatprep.mubr.f32.mxu0 0.0
  %v1294 = vand.u32 %v1126, 4294901760
  %1295 = vmatmul.mubr.f32.gmra.mrb[0].mxu0 %v1294
  %v1296 = vpop.f32.mrb[0].mxu0
  %v1297 = vadd.f32 %v1215, %v1296
  %v1298 = vpop.f32.mrb[0].mxu0
  %1299 = vdwg.mxu0
  %1300 = vmatprep.subr.mxu0 0.0
  %v1301 = vand.u32 %v1130, 4294901760
  %v1302 = vsub.f32 %v1130, %v1301
  %1303 = vmatpush1.msra.mxu0 %v1302
  %1304 = vmatprep.subr.mxu0 0.0
  %1305 = vmatpush1.msra.mxu0 0.0
  %1306 = vmatprep.subr.mxu0 0.0
  %1307 = vmatpush1.msra.mxu0 0.0
  %1308 = vmatprep.subr.mxu0 0.0
  %1309 = vmatpush1.msra.mxu0 0.0
  %1310 = vmatprep.subr.mxu0 0.0
  %1311 = vmatpush1.msra.mxu0 0.0
  %1312 = vmatprep.subr.mxu0 0.0
  %1313 = vmatpush1.msra.mxu0 0.0
  %1314 = vmatprep.subr.mxu0 0.0
  %1315 = vmatpush1.msra.mxu0 0.0
  %1316 = vmatprep.subr.mxu0 0.0
  %1317 = vmatpush1.msra.mxu0 0.0
  %1318 = vmatprep.subr.mxu0 0.0
  %1319 = vmatpush1.msra.mxu0 0.0
  %1320 = vmatprep.subr.mxu0 0.0
  %1321 = vmatpush1.msra.mxu0 0.0
  %1322 = vmatprep.subr.mxu0 0.0
  %1323 = vmatpush1.msra.mxu0 0.0
  %1324 = vmatprep.subr.mxu0 0.0
  %1325 = vmatpush1.msra.mxu0 0.0
  %1326 = vmatprep.subr.mxu0 0.0
  %1327 = vmatpush1.msra.mxu0 0.0
  %1328 = vmatprep.subr.mxu0 0.0
  %1329 = vmatpush1.msra.mxu0 0.0
  %1330 = vmatprep.subr.mxu0 0.0
  %1331 = vmatpush1.msra.mxu0 0.0
  %1332 = vmatprep.subr.mxu0 0.0
  %1333 = vmatpush1.msra.mxu0 0.0
  %1334 = vmatprep.subr.mxu0 0.0
  %1335 = vmatpush1.msra.mxu0 0.0
  %1336 = vmatprep.subr.mxu0 0.0
  %1337 = vmatpush1.msra.mxu0 0.0
  %1338 = vmatprep.subr.mxu0 0.0
  %1339 = vmatpush1.msra.mxu0 0.0
  %1340 = vmatprep.subr.mxu0 0.0
  %1341 = vmatpush1.msra.mxu0 0.0
  %1342 = vmatprep.subr.mxu0 0.0
  %1343 = vmatpush1.msra.mxu0 0.0
  %1344 = vmatprep.subr.mxu0 0.0
  %1345 = vmatpush1.msra.mxu0 0.0
  %1346 = vmatprep.subr.mxu0 0.0
  %1347 = vmatpush1.msra.mxu0 0.0
  %1348 = vmatprep.subr.mxu0 0.0
  %1349 = vmatpush1.msra.mxu0 0.0
  %1350 = vmatprep.subr.mxu0 0.0
  %1351 = vmatpush1.msra.mxu0 0.0
  %1352 = vmatprep.subr.mxu0 0.0
  %1353 = vmatpush1.msra.mxu0 0.0
  %1354 = vmatprep.subr.mxu0 0.0
  %1355 = vmatpush1.msra.mxu0 0.0
  %1356 = vmatprep.subr.mxu0 0.0
  %1357 = vmatpush1.msra.mxu0 0.0
  %1358 = vmatprep.subr.mxu0 0.0
  %1359 = vmatpush1.msra.mxu0 0.0
  %1360 = vmatprep.subr.mxu0 0.0
  %1361 = vmatpush1.msra.mxu0 0.0
  %1362 = vmatprep.subr.mxu0 0.0
  %1363 = vmatpush1.msra.mxu0 0.0
  %1364 = vmatprep.subr.mxu0 0.0
  %1365 = vmatpush1.msra.mxu0 0.0
  %1366 = vmatprep.mubr.f32.mxu0 0.0
  %v1367 = vand.u32 %v1123, 4294901760
  %v1368 = vsub.f32 %v1123, %v1367
  %1369 = vmatmul.mubr.f32.gmra.mrb[0].mxu0 %v1368
  %v1370 = vpop.f32.mrb[0].mxu0
  %v1371 = vadd.f32 %v1291, %v1370
  %v1372 = vpop.f32.mrb[0].mxu0
  %1373 = vmatprep.mubr.f32.mxu0 0.0
  %v1374 = vand.u32 %v1126, 4294901760
  %v1375 = vsub.f32 %v1126, %v1374
  %1376 = vmatmul.mubr.f32.gmra.mrb[0].mxu0 %v1375
  %v1377 = vpop.f32.mrb[0].mxu0
  %v1378 = vadd.f32 %v1297, %v1377
  %v1379 = vpop.f32.mrb[0].mxu0
  %1380 = vdwg.mxu0
  %1381 = vmatprep.subr.mxu0 0.0
  %v1382 = vand.u32 %v1130, 4294901760
  %1383 = vmatpush1.msra.mxu0 %v1382
  %1384 = vmatprep.subr.mxu0 0.0
  %1385 = vmatpush1.msra.mxu0 0.0
  %1386 = vmatprep.subr.mxu0 0.0
  %1387 = vmatpush1.msra.mxu0 0.0
  %1388 = vmatprep.subr.mxu0 0.0
  %1389 = vmatpush1.msra.mxu0 0.0
  %1390 = vmatprep.subr.mxu0 0.0
  %1391 = vmatpush1.msra.mxu0 0.0
  %1392 = vmatprep.subr.mxu0 0.0
  %1393 = vmatpush1.msra.mxu0 0.0
  %1394 = vmatprep.subr.mxu0 0.0
  %1395 = vmatpush1.msra.mxu0 0.0
  %1396 = vmatprep.subr.mxu0 0.0
  %1397 = vmatpush1.msra.mxu0 0.0
  %1398 = vmatprep.subr.mxu0 0.0
  %1399 = vmatpush1.msra.mxu0 0.0
  %1400 = vmatprep.subr.mxu0 0.0
  %1401 = vmatpush1.msra.mxu0 0.0
  %1402 = vmatprep.subr.mxu0 0.0
  %1403 = vmatpush1.msra.mxu0 0.0
  %1404 = vmatprep.subr.mxu0 0.0
  %1405 = vmatpush1.msra.mxu0 0.0
  %1406 = vmatprep.subr.mxu0 0.0
  %1407 = vmatpush1.msra.mxu0 0.0
  %1408 = vmatprep.subr.mxu0 0.0
  %1409 = vmatpush1.msra.mxu0 0.0
  %1410 = vmatprep.subr.mxu0 0.0
  %1411 = vmatpush1.msra.mxu0 0.0
  %1412 = vmatprep.subr.mxu0 0.0
  %1413 = vmatpush1.msra.mxu0 0.0
  %1414 = vmatprep.subr.mxu0 0.0
  %1415 = vmatpush1.msra.mxu0 0.0
  %1416 = vmatprep.subr.mxu0 0.0
  %1417 = vmatpush1.msra.mxu0 0.0
  %1418 = vmatprep.subr.mxu0 0.0
  %1419 = vmatpush1.msra.mxu0 0.0
  %1420 = vmatprep.subr.mxu0 0.0
  %1421 = vmatpush1.msra.mxu0 0.0
  %1422 = vmatprep.subr.mxu0 0.0
  %1423 = vmatpush1.msra.mxu0 0.0
  %1424 = vmatprep.subr.mxu0 0.0
  %1425 = vmatpush1.msra.mxu0 0.0
  %1426 = vmatprep.subr.mxu0 0.0
  %1427 = vmatpush1.msra.mxu0 0.0
  %1428 = vmatprep.subr.mxu0 0.0
  %1429 = vmatpush1.msra.mxu0 0.0
  %1430 = vmatprep.subr.mxu0 0.0
  %1431 = vmatpush1.msra.mxu0 0.0
  %1432 = vmatprep.subr.mxu0 0.0
  %1433 = vmatpush1.msra.mxu0 0.0
  %1434 = vmatprep.subr.mxu0 0.0
  %1435 = vmatpush1.msra.mxu0 0.0
  %1436 = vmatprep.subr.mxu0 0.0
  %1437 = vmatpush1.msra.mxu0 0.0
  %1438 = vmatprep.subr.mxu0 0.0
  %1439 = vmatpush1.msra.mxu0 0.0
  %1440 = vmatprep.subr.mxu0 0.0
  %1441 = vmatpush1.msra.mxu0 0.0
  %1442 = vmatprep.subr.mxu0 0.0
  %1443 = vmatpush1.msra.mxu0 0.0
  %1444 = vmatprep.subr.mxu0 0.0
  %1445 = vmatpush1.msra.mxu0 0.0
  %1446 = vmatprep.mubr.f32.mxu0 0.0
  %v1447 = vand.u32 %v1123, 4294901760
  %v1448 = vsub.f32 %v1123, %v1447
  %v1449 = vand.u32 %v1448, 4294901760
  %1450 = vmatmul.mubr.f32.gmra.mrb[0].mxu0 %v1449
  %v1451 = vpop.f32.mrb[0].mxu0
  %v1452 = vadd.f32 %v1371, %v1451
  %v1453 = vpop.f32.mrb[0].mxu0
  %1454 = vmatprep.mubr.f32.mxu0 0.0
  %v1455 = vand.u32 %v1126, 4294901760
  %v1456 = vsub.f32 %v1126, %v1455
  %v1457 = vand.u32 %v1456, 4294901760
  %1458 = vmatmul.mubr.f32.gmra.mrb[0].mxu0 %v1457
  %v1459 = vpop.f32.mrb[0].mxu0
  %v1460 = vadd.f32 %v1378, %v1459
  %v1461 = vpop.f32.mrb[0].mxu0
  %1462 = vdwg.mxu0
  %1463 = vmatprep.subr.mxu0 0.0
  %v1464 = vand.u32 %v1130, 4294901760
  %v1465 = vsub.f32 %v1130, %v1464
  %v1466 = vand.u32 %v1465, 4294901760
  %1467 = vmatpush1.msra.mxu0 %v1466
  %1468 = vmatprep.subr.mxu0 0.0
  %1469 = vmatpush1.msra.mxu0 0.0
  %1470 = vmatprep.subr.mxu0 0.0
  %1471 = vmatpush1.msra.mxu0 0.0
  %1472 = vmatprep.subr.mxu0 0.0
  %1473 = vmatpush1.msra.mxu0 0.0
  %1474 = vmatprep.subr.mxu0 0.0
  %1475 = vmatpush1.msra.mxu0 0.0
  %1476 = vmatprep.subr.mxu0 0.0
  %1477 = vmatpush1.msra.mxu0 0.0
  %1478 = vmatprep.subr.mxu0 0.0
  %1479 = vmatpush1.msra.mxu0 0.0
  %1480 = vmatprep.subr.mxu0 0.0
  %1481 = vmatpush1.msra.mxu0 0.0
  %1482 = vmatprep.subr.mxu0 0.0
  %1483 = vmatpush1.msra.mxu0 0.0
  %1484 = vmatprep.subr.mxu0 0.0
  %1485 = vmatpush1.msra.mxu0 0.0
  %1486 = vmatprep.subr.mxu0 0.0
  %1487 = vmatpush1.msra.mxu0 0.0
  %1488 = vmatprep.subr.mxu0 0.0
  %1489 = vmatpush1.msra.mxu0 0.0
  %1490 = vmatprep.subr.mxu0 0.0
  %1491 = vmatpush1.msra.mxu0 0.0
  %1492 = vmatprep.subr.mxu0 0.0
  %1493 = vmatpush1.msra.mxu0 0.0
  %1494 = vmatprep.subr.mxu0 0.0
  %1495 = vmatpush1.msra.mxu0 0.0
  %1496 = vmatprep.subr.mxu0 0.0
  %1497 = vmatpush1.msra.mxu0 0.0
  %1498 = vmatprep.subr.mxu0 0.0
  %1499 = vmatpush1.msra.mxu0 0.0
  %1500 = vmatprep.subr.mxu0 0.0
  %1501 = vmatpush1.msra.mxu0 0.0
  %1502 = vmatprep.subr.mxu0 0.0
  %1503 = vmatpush1.msra.mxu0 0.0
  %1504 = vmatprep.subr.mxu0 0.0
  %1505 = vmatpush1.msra.mxu0 0.0
  %1506 = vmatprep.subr.mxu0 0.0
  %1507 = vmatpush1.msra.mxu0 0.0
  %1508 = vmatprep.subr.mxu0 0.0
  %1509 = vmatpush1.msra.mxu0 0.0
  %1510 = vmatprep.subr.mxu0 0.0
  %1511 = vmatpush1.msra.mxu0 0.0
  %1512 = vmatprep.subr.mxu0 0.0
  %1513 = vmatpush1.msra.mxu0 0.0
  %1514 = vmatprep.subr.mxu0 0.0
  %1515 = vmatpush1.msra.mxu0 0.0
  %1516 = vmatprep.subr.mxu0 0.0
  %1517 = vmatpush1.msra.mxu0 0.0
  %1518 = vmatprep.subr.mxu0 0.0
  %1519 = vmatpush1.msra.mxu0 0.0
  %1520 = vmatprep.subr.mxu0 0.0
  %1521 = vmatpush1.msra.mxu0 0.0
  %1522 = vmatprep.subr.mxu0 0.0
  %1523 = vmatpush1.msra.mxu0 0.0
  %1524 = vmatprep.subr.mxu0 0.0
  %1525 = vmatpush1.msra.mxu0 0.0
  %1526 = vmatprep.subr.mxu0 0.0
  %1527 = vmatpush1.msra.mxu0 0.0
  %1528 = vmatprep.subr.mxu0 0.0
  %1529 = vmatpush1.msra.mxu0 0.0
  %1530 = vmatprep.mubr.f32.mxu0 0.0
  %v1531 = vand.u32 %v1123, 4294901760
  %1532 = vmatmul.mubr.f32.gmra.mrb[0].mxu0 %v1531
  %v1533 = vpop.f32.mrb[0].mxu0
  %v1534 = vadd.f32 %v1452, %v1533
  %v1535 = vpop.f32.mrb[0].mxu0
  %1536 = vmatprep.mubr.f32.mxu0 0.0
  %v1537 = vand.u32 %v1126, 4294901760
  %1538 = vmatmul.mubr.f32.gmra.mrb[0].mxu0 %v1537
  %v1539 = vpop.f32.mrb[0].mxu0
  %v1540 = vadd.f32 %v1460, %v1539
  %v1541 = vpop.f32.mrb[0].mxu0
  %1542 = vdwg.mxu0
  %1543 = vmatprep.subr.mxu0 0.0
  %v1544 = vand.u32 %v1130, 4294901760
  %1545 = vmatpush1.msra.mxu0 %v1544
  %1546 = vmatprep.subr.mxu0 0.0
  %1547 = vmatpush1.msra.mxu0 0.0
  %1548 = vmatprep.subr.mxu0 0.0
  %1549 = vmatpush1.msra.mxu0 0.0
  %1550 = vmatprep.subr.mxu0 0.0
  %1551 = vmatpush1.msra.mxu0 0.0
  %1552 = vmatprep.subr.mxu0 0.0
  %1553 = vmatpush1.msra.mxu0 0.0
  %1554 = vmatprep.subr.mxu0 0.0
  %1555 = vmatpush1.msra.mxu0 0.0
  %1556 = vmatprep.subr.mxu0 0.0
  %1557 = vmatpush1.msra.mxu0 0.0
  %1558 = vmatprep.subr.mxu0 0.0
  %1559 = vmatpush1.msra.mxu0 0.0
  %1560 = vmatprep.subr.mxu0 0.0
  %1561 = vmatpush1.msra.mxu0 0.0
  %1562 = vmatprep.subr.mxu0 0.0
  %1563 = vmatpush1.msra.mxu0 0.0
  %1564 = vmatprep.subr.mxu0 0.0
  %1565 = vmatpush1.msra.mxu0 0.0
  %1566 = vmatprep.subr.mxu0 0.0
  %1567 = vmatpush1.msra.mxu0 0.0
  %1568 = vmatprep.subr.mxu0 0.0
  %1569 = vmatpush1.msra.mxu0 0.0
  %1570 = vmatprep.subr.mxu0 0.0
  %1571 = vmatpush1.msra.mxu0 0.0
  %1572 = vmatprep.subr.mxu0 0.0
  %1573 = vmatpush1.msra.mxu0 0.0
  %1574 = vmatprep.subr.mxu0 0.0
  %1575 = vmatpush1.msra.mxu0 0.0
  %1576 = vmatprep.subr.mxu0 0.0
  %1577 = vmatpush1.msra.mxu0 0.0
  %1578 = vmatprep.subr.mxu0 0.0
  %1579 = vmatpush1.msra.mxu0 0.0
  %1580 = vmatprep.subr.mxu0 0.0
  %1581 = vmatpush1.msra.mxu0 0.0
  %1582 = vmatprep.subr.mxu0 0.0
  %1583 = vmatpush1.msra.mxu0 0.0
  %1584 = vmatprep.subr.mxu0 0.0
  %1585 = vmatpush1.msra.mxu0 0.0
  %1586 = vmatprep.subr.mxu0 0.0
  %1587 = vmatpush1.msra.mxu0 0.0
  %1588 = vmatprep.subr.mxu0 0.0
  %1589 = vmatpush1.msra.mxu0 0.0
  %1590 = vmatprep.subr.mxu0 0.0
  %1591 = vmatpush1.msra.mxu0 0.0
  %1592 = vmatprep.subr.mxu0 0.0
  %1593 = vmatpush1.msra.mxu0 0.0
  %1594 = vmatprep.subr.mxu0 0.0
  %1595 = vmatpush1.msra.mxu0 0.0
  %1596 = vmatprep.subr.mxu0 0.0
  %1597 = vmatpush1.msra.mxu0 0.0
  %1598 = vmatprep.subr.mxu0 0.0
  %1599 = vmatpush1.msra.mxu0 0.0
  %1600 = vmatprep.subr.mxu0 0.0
  %1601 = vmatpush1.msra.mxu0 0.0
  %1602 = vmatprep.subr.mxu0 0.0
  %1603 = vmatpush1.msra.mxu0 0.0
  %1604 = vmatprep.subr.mxu0 0.0
  %1605 = vmatpush1.msra.mxu0 0.0
  %1606 = vmatprep.subr.mxu0 0.0
  %1607 = vmatpush1.msra.mxu0 0.0
  %1608 = vmatprep.mubr.f32.mxu0 0.0
  %v1609 = vand.u32 %v1123, 4294901760
  %1610 = vmatmul.mubr.f32.gmra.mrb[0].mxu0 %v1609
  %v1611 = vpop.f32.mrb[0].mxu0
  %v1612 = vadd.f32 %v1534, %v1611
  %v1613 = vpop.f32.mrb[0].mxu0
  %1614 = vmatprep.mubr.f32.mxu0 0.0
  %v1615 = vand.u32 %v1126, 4294901760
  %1616 = vmatmul.mubr.f32.gmra.mrb[0].mxu0 %v1615
  %v1617 = vpop.f32.mrb[0].mxu0
  %v1618 = vadd.f32 %v1540, %v1617
  %v1619 = vpop.f32.mrb[0].mxu0
  %1620 = vdwg.mxu0
  %v1622 = vsel %vm1128, %v1109, 0
  %1624 = vmatprep.subr.mxu0 0.0
  %v1625 = vand.u32 %v1622, 4294901760
  %1626 = vmatpush1.msra.mxu0 %v1625
  %1627 = vmatprep.subr.mxu0 0.0
  %1628 = vmatpush1.msra.mxu0 0.0
  %1629 = vmatprep.subr.mxu0 0.0
  %1630 = vmatpush1.msra.mxu0 0.0
  %1631 = vmatprep.subr.mxu0 0.0
  %1632 = vmatpush1.msra.mxu0 0.0
  %1633 = vmatprep.subr.mxu0 0.0
  %1634 = vmatpush1.msra.mxu0 0.0
  %1635 = vmatprep.subr.mxu0 0.0
  %1636 = vmatpush1.msra.mxu0 0.0
  %1637 = vmatprep.subr.mxu0 0.0
  %1638 = vmatpush1.msra.mxu0 0.0
  %1639 = vmatprep.subr.mxu0 0.0
  %1640 = vmatpush1.msra.mxu0 0.0
  %1641 = vmatprep.subr.mxu0 0.0
  %1642 = vmatpush1.msra.mxu0 0.0
  %1643 = vmatprep.subr.mxu0 0.0
  %1644 = vmatpush1.msra.mxu0 0.0
  %1645 = vmatprep.subr.mxu0 0.0
  %1646 = vmatpush1.msra.mxu0 0.0
  %1647 = vmatprep.subr.mxu0 0.0
  %1648 = vmatpush1.msra.mxu0 0.0
  %1649 = vmatprep.subr.mxu0 0.0
  %1650 = vmatpush1.msra.mxu0 0.0
  %1651 = vmatprep.subr.mxu0 0.0
  %1652 = vmatpush1.msra.mxu0 0.0
  %1653 = vmatprep.subr.mxu0 0.0
  %1654 = vmatpush1.msra.mxu0 0.0
  %1655 = vmatprep.subr.mxu0 0.0
  %1656 = vmatpush1.msra.mxu0 0.0
  %1657 = vmatprep.subr.mxu0 0.0
  %1658 = vmatpush1.msra.mxu0 0.0
  %1659 = vmatprep.subr.mxu0 0.0
  %1660 = vmatpush1.msra.mxu0 0.0
  %1661 = vmatprep.subr.mxu0 0.0
  %1662 = vmatpush1.msra.mxu0 0.0
  %1663 = vmatprep.subr.mxu0 0.0
  %1664 = vmatpush1.msra.mxu0 0.0
  %1665 = vmatprep.subr.mxu0 0.0
  %1666 = vmatpush1.msra.mxu0 0.0
  %1667 = vmatprep.subr.mxu0 0.0
  %1668 = vmatpush1.msra.mxu0 0.0
  %1669 = vmatprep.subr.mxu0 0.0
  %1670 = vmatpush1.msra.mxu0 0.0
  %1671 = vmatprep.subr.mxu0 0.0
  %1672 = vmatpush1.msra.mxu0 0.0
  %1673 = vmatprep.subr.mxu0 0.0
  %1674 = vmatpush1.msra.mxu0 0.0
  %1675 = vmatprep.subr.mxu0 0.0
  %1676 = vmatpush1.msra.mxu0 0.0
  %1677 = vmatprep.subr.mxu0 0.0
  %1678 = vmatpush1.msra.mxu0 0.0
  %1679 = vmatprep.subr.mxu0 0.0
  %1680 = vmatpush1.msra.mxu0 0.0
  %1681 = vmatprep.subr.mxu0 0.0
  %1682 = vmatpush1.msra.mxu0 0.0
  %1683 = vmatprep.subr.mxu0 0.0
  %1684 = vmatpush1.msra.mxu0 0.0
  %1685 = vmatprep.subr.mxu0 0.0
  %1686 = vmatpush1.msra.mxu0 0.0
  %1687 = vmatprep.subr.mxu0 0.0
  %1688 = vmatpush1.msra.mxu0 0.0
  %1689 = vmatprep.mubr.f32.mxu0 0.0
  %v1690 = vand.u32 %v1123, 4294901760
  %v1691 = vsub.f32 %v1123, %v1690
  %v1692 = vand.u32 %v1691, 4294901760
  %v1693 = vsub.f32 %v1691, %v1692
  %v1694 = vand.u32 %v1693, 4294901760
  %1695 = vmatmul.mubr.f32.gmra.mrb[0].mxu0 %v1694
  %v1696 = vpop.f32.mrb[0].mxu0
  %v1697 = vadd.f32 %v1115, %v1696
  %v1698 = vpop.f32.mrb[0].mxu0
  %1699 = vmatprep.mubr.f32.mxu0 0.0
  %v1700 = vand.u32 %v1126, 4294901760
  %v1701 = vsub.f32 %v1126, %v1700
  %v1702 = vand.u32 %v1701, 4294901760
  %v1703 = vsub.f32 %v1701, %v1702
  %v1704 = vand.u32 %v1703, 4294901760
  %1705 = vmatmul.mubr.f32.gmra.mrb[0].mxu0 %v1704
  %v1706 = vpop.f32.mrb[0].mxu0
  %v1707 = vadd.f32 %v1120, %v1706
  %v1708 = vpop.f32.mrb[0].mxu0
  %1709 = vdwg.mxu0
  %1710 = vmatprep.subr.mxu0 0.0
  %v1711 = vand.u32 %v1622, 4294901760
  %v1712 = vsub.f32 %v1622, %v1711
  %v1713 = vand.u32 %v1712, 4294901760
  %v1714 = vsub.f32 %v1712, %v1713
  %v1715 = vand.u32 %v1714, 4294901760
  %1716 = vmatpush1.msra.mxu0 %v1715
  %1717 = vmatprep.subr.mxu0 0.0
  %1718 = vmatpush1.msra.mxu0 0.0
  %1719 = vmatprep.subr.mxu0 0.0
  %1720 = vmatpush1.msra.mxu0 0.0
  %1721 = vmatprep.subr.mxu0 0.0
  %1722 = vmatpush1.msra.mxu0 0.0
  %1723 = vmatprep.subr.mxu0 0.0
  %1724 = vmatpush1.msra.mxu0 0.0
  %1725 = vmatprep.subr.mxu0 0.0
  %1726 = vmatpush1.msra.mxu0 0.0
  %1727 = vmatprep.subr.mxu0 0.0
  %1728 = vmatpush1.msra.mxu0 0.0
  %1729 = vmatprep.subr.mxu0 0.0
  %1730 = vmatpush1.msra.mxu0 0.0
  %1731 = vmatprep.subr.mxu0 0.0
  %1732 = vmatpush1.msra.mxu0 0.0
  %1733 = vmatprep.subr.mxu0 0.0
  %1734 = vmatpush1.msra.mxu0 0.0
  %1735 = vmatprep.subr.mxu0 0.0
  %1736 = vmatpush1.msra.mxu0 0.0
  %1737 = vmatprep.subr.mxu0 0.0
  %1738 = vmatpush1.msra.mxu0 0.0
  %1739 = vmatprep.subr.mxu0 0.0
  %1740 = vmatpush1.msra.mxu0 0.0
  %1741 = vmatprep.subr.mxu0 0.0
  %1742 = vmatpush1.msra.mxu0 0.0
  %1743 = vmatprep.subr.mxu0 0.0
  %1744 = vmatpush1.msra.mxu0 0.0
  %1745 = vmatprep.subr.mxu0 0.0
  %1746 = vmatpush1.msra.mxu0 0.0
  %1747 = vmatprep.subr.mxu0 0.0
  %1748 = vmatpush1.msra.mxu0 0.0
  %1749 = vmatprep.subr.mxu0 0.0
  %1750 = vmatpush1.msra.mxu0 0.0
  %1751 = vmatprep.subr.mxu0 0.0
  %1752 = vmatpush1.msra.mxu0 0.0
  %1753 = vmatprep.subr.mxu0 0.0
  %1754 = vmatpush1.msra.mxu0 0.0
  %1755 = vmatprep.subr.mxu0 0.0
  %1756 = vmatpush1.msra.mxu0 0.0
  %1757 = vmatprep.subr.mxu0 0.0
  %1758 = vmatpush1.msra.mxu0 0.0
  %1759 = vmatprep.subr.mxu0 0.0
  %1760 = vmatpush1.msra.mxu0 0.0
  %1761 = vmatprep.subr.mxu0 0.0
  %1762 = vmatpush1.msra.mxu0 0.0
  %1763 = vmatprep.subr.mxu0 0.0
  %1764 = vmatpush1.msra.mxu0 0.0
  %1765 = vmatprep.subr.mxu0 0.0
  %1766 = vmatpush1.msra.mxu0 0.0
  %1767 = vmatprep.subr.mxu0 0.0
  %1768 = vmatpush1.msra.mxu0 0.0
  %1769 = vmatprep.subr.mxu0 0.0
  %1770 = vmatpush1.msra.mxu0 0.0
  %1771 = vmatprep.subr.mxu0 0.0
  %1772 = vmatpush1.msra.mxu0 0.0
  %1773 = vmatprep.subr.mxu0 0.0
  %1774 = vmatpush1.msra.mxu0 0.0
  %1775 = vmatprep.subr.mxu0 0.0
  %1776 = vmatpush1.msra.mxu0 0.0
  %1777 = vmatprep.subr.mxu0 0.0
  %1778 = vmatpush1.msra.mxu0 0.0
  %1779 = vmatprep.mubr.f32.mxu0 0.0
  %v1780 = vand.u32 %v1123, 4294901760
  %1781 = vmatmul.mubr.f32.gmra.mrb[0].mxu0 %v1780
  %v1782 = vpop.f32.mrb[0].mxu0
  %v1783 = vadd.f32 %v1697, %v1782
  %v1784 = vpop.f32.mrb[0].mxu0
  %1785 = vmatprep.mubr.f32.mxu0 0.0
  %v1786 = vand.u32 %v1126, 4294901760
  %1787 = vmatmul.mubr.f32.gmra.mrb[0].mxu0 %v1786
  %v1788 = vpop.f32.mrb[0].mxu0
  %v1789 = vadd.f32 %v1707, %v1788
  %v1790 = vpop.f32.mrb[0].mxu0
  %1791 = vdwg.mxu0
  %1792 = vmatprep.subr.mxu0 0.0
  %v1793 = vand.u32 %v1622, 4294901760
  %v1794 = vsub.f32 %v1622, %v1793
  %1795 = vmatpush1.msra.mxu0 %v1794
  %1796 = vmatprep.subr.mxu0 0.0
  %1797 = vmatpush1.msra.mxu0 0.0
  %1798 = vmatprep.subr.mxu0 0.0
  %1799 = vmatpush1.msra.mxu0 0.0
  %1800 = vmatprep.subr.mxu0 0.0
  %1801 = vmatpush1.msra.mxu0 0.0
  %1802 = vmatprep.subr.mxu0 0.0
  %1803 = vmatpush1.msra.mxu0 0.0
  %1804 = vmatprep.subr.mxu0 0.0
  %1805 = vmatpush1.msra.mxu0 0.0
  %1806 = vmatprep.subr.mxu0 0.0
  %1807 = vmatpush1.msra.mxu0 0.0
  %1808 = vmatprep.subr.mxu0 0.0
  %1809 = vmatpush1.msra.mxu0 0.0
  %1810 = vmatprep.subr.mxu0 0.0
  %1811 = vmatpush1.msra.mxu0 0.0
  %1812 = vmatprep.subr.mxu0 0.0
  %1813 = vmatpush1.msra.mxu0 0.0
  %1814 = vmatprep.subr.mxu0 0.0
  %1815 = vmatpush1.msra.mxu0 0.0
  %1816 = vmatprep.subr.mxu0 0.0
  %1817 = vmatpush1.msra.mxu0 0.0
  %1818 = vmatprep.subr.mxu0 0.0
  %1819 = vmatpush1.msra.mxu0 0.0
  %1820 = vmatprep.subr.mxu0 0.0
  %1821 = vmatpush1.msra.mxu0 0.0
  %1822 = vmatprep.subr.mxu0 0.0
  %1823 = vmatpush1.msra.mxu0 0.0
  %1824 = vmatprep.subr.mxu0 0.0
  %1825 = vmatpush1.msra.mxu0 0.0
  %1826 = vmatprep.subr.mxu0 0.0
  %1827 = vmatpush1.msra.mxu0 0.0
  %1828 = vmatprep.subr.mxu0 0.0
  %1829 = vmatpush1.msra.mxu0 0.0
  %1830 = vmatprep.subr.mxu0 0.0
  %1831 = vmatpush1.msra.mxu0 0.0
  %1832 = vmatprep.subr.mxu0 0.0
  %1833 = vmatpush1.msra.mxu0 0.0
  %1834 = vmatprep.subr.mxu0 0.0
  %1835 = vmatpush1.msra.mxu0 0.0
  %1836 = vmatprep.subr.mxu0 0.0
  %1837 = vmatpush1.msra.mxu0 0.0
  %1838 = vmatprep.subr.mxu0 0.0
  %1839 = vmatpush1.msra.mxu0 0.0
  %1840 = vmatprep.subr.mxu0 0.0
  %1841 = vmatpush1.msra.mxu0 0.0
  %1842 = vmatprep.subr.mxu0 0.0
  %1843 = vmatpush1.msra.mxu0 0.0
  %1844 = vmatprep.subr.mxu0 0.0
  %1845 = vmatpush1.msra.mxu0 0.0
  %1846 = vmatprep.subr.mxu0 0.0
  %1847 = vmatpush1.msra.mxu0 0.0
  %1848 = vmatprep.subr.mxu0 0.0
  %1849 = vmatpush1.msra.mxu0 0.0
  %1850 = vmatprep.subr.mxu0 0.0
  %1851 = vmatpush1.msra.mxu0 0.0
  %1852 = vmatprep.subr.mxu0 0.0
  %1853 = vmatpush1.msra.mxu0 0.0
  %1854 = vmatprep.subr.mxu0 0.0
  %1855 = vmatpush1.msra.mxu0 0.0
  %1856 = vmatprep.subr.mxu0 0.0
  %1857 = vmatpush1.msra.mxu0 0.0
  %1858 = vmatprep.mubr.f32.mxu0 0.0
  %v1859 = vand.u32 %v1123, 4294901760
  %v1860 = vsub.f32 %v1123, %v1859
  %1861 = vmatmul.mubr.f32.gmra.mrb[0].mxu0 %v1860
  %v1862 = vpop.f32.mrb[0].mxu0
  %v1863 = vadd.f32 %v1783, %v1862
  %v1864 = vpop.f32.mrb[0].mxu0
  %1865 = vmatprep.mubr.f32.mxu0 0.0
  %v1866 = vand.u32 %v1126, 4294901760
  %v1867 = vsub.f32 %v1126, %v1866
  %1868 = vmatmul.mubr.f32.gmra.mrb[0].mxu0 %v1867
  %v1869 = vpop.f32.mrb[0].mxu0
  %v1870 = vadd.f32 %v1789, %v1869
  %v1871 = vpop.f32.mrb[0].mxu0
  %1872 = vdwg.mxu0
  %1873 = vmatprep.subr.mxu0 0.0
  %v1874 = vand.u32 %v1622, 4294901760
  %1875 = vmatpush1.msra.mxu0 %v1874
  %1876 = vmatprep.subr.mxu0 0.0
  %1877 = vmatpush1.msra.mxu0 0.0
  %1878 = vmatprep.subr.mxu0 0.0
  %1879 = vmatpush1.msra.mxu0 0.0
  %1880 = vmatprep.subr.mxu0 0.0
  %1881 = vmatpush1.msra.mxu0 0.0
  %1882 = vmatprep.subr.mxu0 0.0
  %1883 = vmatpush1.msra.mxu0 0.0
  %1884 = vmatprep.subr.mxu0 0.0
  %1885 = vmatpush1.msra.mxu0 0.0
  %1886 = vmatprep.subr.mxu0 0.0
  %1887 = vmatpush1.msra.mxu0 0.0
  %1888 = vmatprep.subr.mxu0 0.0
  %1889 = vmatpush1.msra.mxu0 0.0
  %1890 = vmatprep.subr.mxu0 0.0
  %1891 = vmatpush1.msra.mxu0 0.0
  %1892 = vmatprep.subr.mxu0 0.0
  %1893 = vmatpush1.msra.mxu0 0.0
  %1894 = vmatprep.subr.mxu0 0.0
  %1895 = vmatpush1.msra.mxu0 0.0
  %1896 = vmatprep.subr.mxu0 0.0
  %1897 = vmatpush1.msra.mxu0 0.0
  %1898 = vmatprep.subr.mxu0 0.0
  %1899 = vmatpush1.msra.mxu0 0.0
  %1900 = vmatprep.subr.mxu0 0.0
  %1901 = vmatpush1.msra.mxu0 0.0
  %1902 = vmatprep.subr.mxu0 0.0
  %1903 = vmatpush1.msra.mxu0 0.0
  %1904 = vmatprep.subr.mxu0 0.0
  %1905 = vmatpush1.msra.mxu0 0.0
  %1906 = vmatprep.subr.mxu0 0.0
  %1907 = vmatpush1.msra.mxu0 0.0
  %1908 = vmatprep.subr.mxu0 0.0
  %1909 = vmatpush1.msra.mxu0 0.0
  %1910 = vmatprep.subr.mxu0 0.0
  %1911 = vmatpush1.msra.mxu0 0.0
  %1912 = vmatprep.subr.mxu0 0.0
  %1913 = vmatpush1.msra.mxu0 0.0
  %1914 = vmatprep.subr.mxu0 0.0
  %1915 = vmatpush1.msra.mxu0 0.0
  %1916 = vmatprep.subr.mxu0 0.0
  %1917 = vmatpush1.msra.mxu0 0.0
  %1918 = vmatprep.subr.mxu0 0.0
  %1919 = vmatpush1.msra.mxu0 0.0
  %1920 = vmatprep.subr.mxu0 0.0
  %1921 = vmatpush1.msra.mxu0 0.0
  %1922 = vmatprep.subr.mxu0 0.0
  %1923 = vmatpush1.msra.mxu0 0.0
  %1924 = vmatprep.subr.mxu0 0.0
  %1925 = vmatpush1.msra.mxu0 0.0
  %1926 = vmatprep.subr.mxu0 0.0
  %1927 = vmatpush1.msra.mxu0 0.0
  %1928 = vmatprep.subr.mxu0 0.0
  %1929 = vmatpush1.msra.mxu0 0.0
  %1930 = vmatprep.subr.mxu0 0.0
  %1931 = vmatpush1.msra.mxu0 0.0
  %1932 = vmatprep.subr.mxu0 0.0
  %1933 = vmatpush1.msra.mxu0 0.0
  %1934 = vmatprep.subr.mxu0 0.0
  %1935 = vmatpush1.msra.mxu0 0.0
  %1936 = vmatprep.subr.mxu0 0.0
  %1937 = vmatpush1.msra.mxu0 0.0
  %1938 = vmatprep.mubr.f32.mxu0 0.0
  %v1939 = vand.u32 %v1123, 4294901760
  %v1940 = vsub.f32 %v1123, %v1939
  %v1941 = vand.u32 %v1940, 4294901760
  %1942 = vmatmul.mubr.f32.gmra.mrb[0].mxu0 %v1941
  %v1943 = vpop.f32.mrb[0].mxu0
  %v1944 = vadd.f32 %v1863, %v1943
  %v1945 = vpop.f32.mrb[0].mxu0
  %1946 = vmatprep.mubr.f32.mxu0 0.0
  %v1947 = vand.u32 %v1126, 4294901760
  %v1948 = vsub.f32 %v1126, %v1947
  %v1949 = vand.u32 %v1948, 4294901760
  %1950 = vmatmul.mubr.f32.gmra.mrb[0].mxu0 %v1949
  %v1951 = vpop.f32.mrb[0].mxu0
  %v1952 = vadd.f32 %v1870, %v1951
  %v1953 = vpop.f32.mrb[0].mxu0
  %1954 = vdwg.mxu0
  %1955 = vmatprep.subr.mxu0 0.0
  %v1956 = vand.u32 %v1622, 4294901760
  %v1957 = vsub.f32 %v1622, %v1956
  %v1958 = vand.u32 %v1957, 4294901760
  %1959 = vmatpush1.msra.mxu0 %v1958
  %1960 = vmatprep.subr.mxu0 0.0
  %1961 = vmatpush1.msra.mxu0 0.0
  %1962 = vmatprep.subr.mxu0 0.0
  %1963 = vmatpush1.msra.mxu0 0.0
  %1964 = vmatprep.subr.mxu0 0.0
  %1965 = vmatpush1.msra.mxu0 0.0
  %1966 = vmatprep.subr.mxu0 0.0
  %1967 = vmatpush1.msra.mxu0 0.0
  %1968 = vmatprep.subr.mxu0 0.0
  %1969 = vmatpush1.msra.mxu0 0.0
  %1970 = vmatprep.subr.mxu0 0.0
  %1971 = vmatpush1.msra.mxu0 0.0
  %1972 = vmatprep.subr.mxu0 0.0
  %1973 = vmatpush1.msra.mxu0 0.0
  %1974 = vmatprep.subr.mxu0 0.0
  %1975 = vmatpush1.msra.mxu0 0.0
  %1976 = vmatprep.subr.mxu0 0.0
  %1977 = vmatpush1.msra.mxu0 0.0
  %1978 = vmatprep.subr.mxu0 0.0
  %1979 = vmatpush1.msra.mxu0 0.0
  %1980 = vmatprep.subr.mxu0 0.0
  %1981 = vmatpush1.msra.mxu0 0.0
  %1982 = vmatprep.subr.mxu0 0.0
  %1983 = vmatpush1.msra.mxu0 0.0
  %1984 = vmatprep.subr.mxu0 0.0
  %1985 = vmatpush1.msra.mxu0 0.0
  %1986 = vmatprep.subr.mxu0 0.0
  %1987 = vmatpush1.msra.mxu0 0.0
  %1988 = vmatprep.subr.mxu0 0.0
  %1989 = vmatpush1.msra.mxu0 0.0
  %1990 = vmatprep.subr.mxu0 0.0
  %1991 = vmatpush1.msra.mxu0 0.0
  %1992 = vmatprep.subr.mxu0 0.0
  %1993 = vmatpush1.msra.mxu0 0.0
  %1994 = vmatprep.subr.mxu0 0.0
  %1995 = vmatpush1.msra.mxu0 0.0
  %1996 = vmatprep.subr.mxu0 0.0
  %1997 = vmatpush1.msra.mxu0 0.0
  %1998 = vmatprep.subr.mxu0 0.0
  %1999 = vmatpush1.msra.mxu0 0.0
  %2000 = vmatprep.subr.mxu0 0.0
  %2001 = vmatpush1.msra.mxu0 0.0
  %2002 = vmatprep.subr.mxu0 0.0
  %2003 = vmatpush1.msra.mxu0 0.0
  %2004 = vmatprep.subr.mxu0 0.0
  %2005 = vmatpush1.msra.mxu0 0.0
  %2006 = vmatprep.subr.mxu0 0.0
  %2007 = vmatpush1.msra.mxu0 0.0
  %2008 = vmatprep.subr.mxu0 0.0
  %2009 = vmatpush1.msra.mxu0 0.0
  %2010 = vmatprep.subr.mxu0 0.0
  %2011 = vmatpush1.msra.mxu0 0.0
  %2012 = vmatprep.subr.mxu0 0.0
  %2013 = vmatpush1.msra.mxu0 0.0
  %2014 = vmatprep.subr.mxu0 0.0
  %2015 = vmatpush1.msra.mxu0 0.0
  %2016 = vmatprep.subr.mxu0 0.0
  %2017 = vmatpush1.msra.mxu0 0.0
  %2018 = vmatprep.subr.mxu0 0.0
  %2019 = vmatpush1.msra.mxu0 0.0
  %2020 = vmatprep.subr.mxu0 0.0
  %2021 = vmatpush1.msra.mxu0 0.0
  %2022 = vmatprep.mubr.f32.mxu0 0.0
  %v2023 = vand.u32 %v1123, 4294901760
  %2024 = vmatmul.mubr.f32.gmra.mrb[0].mxu0 %v2023
  %v2025 = vpop.f32.mrb[0].mxu0
  %v2026 = vadd.f32 %v1944, %v2025
  %v2027 = vpop.f32.mrb[0].mxu0
  %2028 = vmatprep.mubr.f32.mxu0 0.0
  %v2029 = vand.u32 %v1126, 4294901760
  %2030 = vmatmul.mubr.f32.gmra.mrb[0].mxu0 %v2029
  %v2031 = vpop.f32.mrb[0].mxu0
  %v2032 = vadd.f32 %v1952, %v2031
  %v2033 = vpop.f32.mrb[0].mxu0
  %2034 = vdwg.mxu0
  %2035 = vmatprep.subr.mxu0 0.0
  %v2036 = vand.u32 %v1622, 4294901760
  %2037 = vmatpush1.msra.mxu0 %v2036
  %2038 = vmatprep.subr.mxu0 0.0
  %2039 = vmatpush1.msra.mxu0 0.0
  %2040 = vmatprep.subr.mxu0 0.0
  %2041 = vmatpush1.msra.mxu0 0.0
  %2042 = vmatprep.subr.mxu0 0.0
  %2043 = vmatpush1.msra.mxu0 0.0
  %2044 = vmatprep.subr.mxu0 0.0
  %2045 = vmatpush1.msra.mxu0 0.0
  %2046 = vmatprep.subr.mxu0 0.0
  %2047 = vmatpush1.msra.mxu0 0.0
  %2048 = vmatprep.subr.mxu0 0.0
  %2049 = vmatpush1.msra.mxu0 0.0
  %2050 = vmatprep.subr.mxu0 0.0
  %2051 = vmatpush1.msra.mxu0 0.0
  %2052 = vmatprep.subr.mxu0 0.0
  %2053 = vmatpush1.msra.mxu0 0.0
  %2054 = vmatprep.subr.mxu0 0.0
  %2055 = vmatpush1.msra.mxu0 0.0
  %2056 = vmatprep.subr.mxu0 0.0
  %2057 = vmatpush1.msra.mxu0 0.0
  %2058 = vmatprep.subr.mxu0 0.0
  %2059 = vmatpush1.msra.mxu0 0.0
  %2060 = vmatprep.subr.mxu0 0.0
  %2061 = vmatpush1.msra.mxu0 0.0
  %2062 = vmatprep.subr.mxu0 0.0
  %2063 = vmatpush1.msra.mxu0 0.0
  %2064 = vmatprep.subr.mxu0 0.0
  %2065 = vmatpush1.msra.mxu0 0.0
  %2066 = vmatprep.subr.mxu0 0.0
  %2067 = vmatpush1.msra.mxu0 0.0
  %2068 = vmatprep.subr.mxu0 0.0
  %2069 = vmatpush1.msra.mxu0 0.0
  %2070 = vmatprep.subr.mxu0 0.0
  %2071 = vmatpush1.msra.mxu0 0.0
  %2072 = vmatprep.subr.mxu0 0.0
  %2073 = vmatpush1.msra.mxu0 0.0
  %2074 = vmatprep.subr.mxu0 0.0
  %2075 = vmatpush1.msra.mxu0 0.0
  %2076 = vmatprep.subr.mxu0 0.0
  %2077 = vmatpush1.msra.mxu0 0.0
  %2078 = vmatprep.subr.mxu0 0.0
  %2079 = vmatpush1.msra.mxu0 0.0
  %2080 = vmatprep.subr.mxu0 0.0
  %2081 = vmatpush1.msra.mxu0 0.0
  %2082 = vmatprep.subr.mxu0 0.0
  %2083 = vmatpush1.msra.mxu0 0.0
  %2084 = vmatprep.subr.mxu0 0.0
  %2085 = vmatpush1.msra.mxu0 0.0
  %2086 = vmatprep.subr.mxu0 0.0
  %2087 = vmatpush1.msra.mxu0 0.0
  %2088 = vmatprep.subr.mxu0 0.0
  %2089 = vmatpush1.msra.mxu0 0.0
  %2090 = vmatprep.subr.mxu0 0.0
  %2091 = vmatpush1.msra.mxu0 0.0
  %2092 = vmatprep.subr.mxu0 0.0
  %2093 = vmatpush1.msra.mxu0 0.0
  %2094 = vmatprep.subr.mxu0 0.0
  %2095 = vmatpush1.msra.mxu0 0.0
  %2096 = vmatprep.subr.mxu0 0.0
  %2097 = vmatpush1.msra.mxu0 0.0
  %2098 = vmatprep.subr.mxu0 0.0
  %2099 = vmatpush1.msra.mxu0 0.0
  %2100 = vmatprep.mubr.f32.mxu0 0.0
  %v2101 = vand.u32 %v1123, 4294901760
  %2102 = vmatmul.mubr.f32.gmra.mrb[0].mxu0 %v2101
  %v2103 = vpop.f32.mrb[0].mxu0
  %v2104 = vadd.f32 %v2026, %v2103
  %v2105 = vpop.f32.mrb[0].mxu0
  %2106 = vmatprep.mubr.f32.mxu0 0.0
  %v2107 = vand.u32 %v1126, 4294901760
  %2108 = vmatmul.mubr.f32.gmra.mrb[0].mxu0 %v2107
  %v2109 = vpop.f32.mrb[0].mxu0
  %v2110 = vadd.f32 %v2032, %v2109
  %v2111 = vpop.f32.mrb[0].mxu0
  %2112 = vdwg.mxu0
  %vm2113 = vcmask 31744
  %v2114 = vsel %vm2113, %v1612, 0.0
  %2115 = vadd.xlane.f32.xlu0 %v2114
  %v2116 = vpop.xlane.xlu0 %2115
  %v2117 = vsel %vm2113, %v1618, 0.0
  %2118 = vadd.xlane.f32.xlu0 %v2117
  %v2119 = vpop.xlane.xlu0 %2118
  %v2120 = vsel %vm2113, %v2104, 0.0
  %2121 = vadd.xlane.f32.xlu0 %v2120
  %v2122 = vpop.xlane.xlu0 %2121
  %v2123 = vsel %vm2113, %v2110, 0.0
  %2124 = vadd.xlane.f32.xlu0 %v2123
  %v2125 = vpop.xlane.xlu0 %2124
  %v2126 = vxor.u32 %v2116, 2147483648
  %v2127 = vxor.u32 %v2119, 2147483648
  %v2128 = vxor.u32 %v2122, 2147483648
  %v2129 = vxor.u32 %v2125, 2147483648
  %v2130 = vmul.f32 %v2126, 1.442695
  %v2131 = vpow.pop %v2130
  %v2132 = vmul.f32 %v2127, 1.442695
  %v2133 = vpow.pop %v2132
  %v2134 = vmul.f32 %v2128, 1.442695
  %v2135 = vpow.pop %v2134
  %v2136 = vmul.f32 %v2129, 1.442695
  %v2137 = vpow.pop %v2136
  %v2138 = vadd.f32 %v2131, 1.0
  %v2139 = vadd.f32 %v2133, 1.0
  %v2140 = vadd.f32 %v2135, 1.0
  %v2141 = vadd.f32 %v2137, 1.0
  %v2142 = vrcp.pop %v2138
  %v2143 = vmul.f32 1.0, %v2142
  %v2144 = vrcp.pop %v2139
  %v2145 = vmul.f32 1.0, %v2144
  %v2146 = vrcp.pop %v2140
  %v2147 = vmul.f32 1.0, %v2146
  %v2148 = vrcp.pop %v2141
  %v2149 = vmul.f32 1.0, %v2148
  %v2150 = vmul.f32 %v29, %v2143
  %v2151 = vmul.f32 %v30, %v2143
  %v2152 = vmul.f32 %v31, %v2145
  %v2153 = vmul.f32 %v32, %v2145
  %v2154 = vmul.f32 %v33, %v2147
  %v2155 = vmul.f32 %v34, %v2147
  %v2156 = vmul.f32 %v35, %v2149
  %v2157 = vmul.f32 %v36, %v2149
  %v2158 = vmax.f32 %v2150, %v2152
  %v2159 = vrot.slane %v2158, 4
  %v2160 = vmax.f32 %v2158, %v2159
  %v2161 = vrot.slane %v2160, 2
  %v2162 = vmax.f32 %v2160, %v2161
  %v2163 = vrot.slane %v2162, 1
  %v2164 = vmax.f32 %v2162, %v2163
  %v2165 = vmax.f32 %v2151, %v2153
  %v2166 = vrot.slane %v2165, 4
  %v2167 = vmax.f32 %v2165, %v2166
  %v2168 = vrot.slane %v2167, 2
  %v2169 = vmax.f32 %v2167, %v2168
  %v2170 = vrot.slane %v2169, 1
  %v2171 = vmax.f32 %v2169, %v2170
  %v2172 = vmax.f32 %v2154, %v2156
  %v2173 = vrot.slane %v2172, 4
  %v2174 = vmax.f32 %v2172, %v2173
  %v2175 = vrot.slane %v2174, 2
  %v2176 = vmax.f32 %v2174, %v2175
  %v2177 = vrot.slane %v2176, 1
  %v2178 = vmax.f32 %v2176, %v2177
  %v2179 = vmax.f32 %v2155, %v2157
  %v2180 = vrot.slane %v2179, 4
  %v2181 = vmax.f32 %v2179, %v2180
  %v2182 = vrot.slane %v2181, 2
  %v2183 = vmax.f32 %v2181, %v2182
  %v2184 = vrot.slane %v2183, 1
  %v2185 = vmax.f32 %v2183, %v2184
  %v2186 = vadd.f32 %v2150, %v2152
  %v2187 = vrot.slane %v2186, 4
  %v2188 = vadd.f32 %v2186, %v2187
  %v2189 = vrot.slane %v2188, 2
  %v2190 = vadd.f32 %v2188, %v2189
  %v2191 = vrot.slane %v2190, 1
  %v2192 = vadd.f32 %v2190, %v2191
  %v2193 = vadd.f32 %v2151, %v2153
  %v2194 = vrot.slane %v2193, 4
  %v2195 = vadd.f32 %v2193, %v2194
  %v2196 = vrot.slane %v2195, 2
  %v2197 = vadd.f32 %v2195, %v2196
  %v2198 = vrot.slane %v2197, 1
  %v2199 = vadd.f32 %v2197, %v2198
  %v2200 = vadd.f32 %v2154, %v2156
  %v2201 = vrot.slane %v2200, 4
  %v2202 = vadd.f32 %v2200, %v2201
  %v2203 = vrot.slane %v2202, 2
  %v2204 = vadd.f32 %v2202, %v2203
  %v2205 = vrot.slane %v2204, 1
  %v2206 = vadd.f32 %v2204, %v2205
  %v2207 = vadd.f32 %v2155, %v2157
  %v2208 = vrot.slane %v2207, 4
  %v2209 = vadd.f32 %v2207, %v2208
  %v2210 = vrot.slane %v2209, 2
  %v2211 = vadd.f32 %v2209, %v2210
  %v2212 = vrot.slane %v2211, 1
  %v2213 = vadd.f32 %v2211, %v2212
  %v2214 = vrcp.pop 16.0
  %v2215 = vmul.f32 %v2192, %v2214
  %v2216 = vmul.f32 %v2199, %v2214
  %v2217 = vmul.f32 %v2206, %v2214
  %v2218 = vmul.f32 %v2213, %v2214
  %vm2219 = vcmask 1040384
  %v2220 = vsel %vm2219, %v2164, %v2215
  %v2221 = vsel %vm2219, %v2171, %v2216
  %v2222 = vsel %vm2219, %v2178, %v2217
  %v2223 = vsel %vm2219, %v2185, %v2218
  %2224 = vrot.lane.b32.xlu0 %v2220, 3
  %v2225 = vpop.permute.xlu0 %2224
  %2226 = vrot.lane.b32.xlu0 %v2222, 3
  %v2227 = vpop.permute.xlu0 %2226
  %2228 = vrot.lane.b32.xlu0 %v2221, 3
  %v2229 = vpop.permute.xlu0 %2228
  %2230 = vrot.lane.b32.xlu0 %v2223, 3
  %v2231 = vpop.permute.xlu0 %2230
  %v2232 = vlaneseq
  %v2233 = vand.u32 %v2232, 127
  %vm2234 = vcmp.lt.s32.totalorder %v2233, 3
  %v2235 = vsel %vm2234, %v2225, %v2229
  %v2236 = vsel %vm2234, %v2227, %v2231
  %v2237 = vsel %vm2234, %v2229, %v2225
  %v2238 = vsel %vm2234, %v2231, %v2227
  %v2239 = vld [vmem:[%s6] ss:$8 sm:$0x3]
  %v2241 = vlaneseq
  %v2242 = vshrl.u32 %v2241, 7
  %v2243 = vsub.s32 0, %v2242
  %v2244 = vrot.slane %v2239, %v2243
  %v2245 = vlaneseq
  %v2246 = vshrl.u32 %v2245, 7
  %v2247 = vsub.s32 1, %v2246
  %v2248 = vrot.slane %v2239, %v2247
  %v2251 = vmul.f32 %v2237, %v2244
  %v2252 = vmul.f32 %v2235, %v2248
  %v2253 = vmul.f32 %v2238, %v2244
  %v2254 = vmul.f32 %v2236, %v2248
  %2255 = vrot.lane.b32.xlu0 %v2220, 2
  %v2256 = vpop.permute.xlu0 %2255
  %2257 = vrot.lane.b32.xlu0 %v2222, 2
  %v2258 = vpop.permute.xlu0 %2257
  %2259 = vrot.lane.b32.xlu0 %v2221, 2
  %v2260 = vpop.permute.xlu0 %2259
  %2261 = vrot.lane.b32.xlu0 %v2223, 2
  %v2262 = vpop.permute.xlu0 %2261
  %vm2263 = vcmp.lt.s32.totalorder %v2233, 2
  %v2264 = vsel %vm2263, %v2256, %v2260
  %v2265 = vsel %vm2263, %v2258, %v2262
  %v2266 = vsel %vm2263, %v2260, %v2256
  %v2267 = vsel %vm2263, %v2262, %v2258
  %s2268 = scalar_lea.vmem %s6, 1
  %v2269 = vld [vmem:[%s2268] ss:$8 sm:$0x3]
  %v2271 = vlaneseq
  %v2272 = vshrl.u32 %v2271, 7
  %v2273 = vsub.s32 0, %v2272
  %v2274 = vrot.slane %v2269, %v2273
  %v2275 = vlaneseq
  %v2276 = vshrl.u32 %v2275, 7
  %v2277 = vsub.s32 1, %v2276
  %v2278 = vrot.slane %v2269, %v2277
  %v2281 = vmul.f32 %v2266, %v2274
  %v2282 = vmul.f32 %v2264, %v2278
  %v2283 = vmul.f32 %v2267, %v2274
  %v2284 = vmul.f32 %v2265, %v2278
  %2285 = vrot.lane.b32.xlu0 %v2220, 1
  %v2286 = vpop.permute.xlu0 %2285
  %2287 = vrot.lane.b32.xlu0 %v2222, 1
  %v2288 = vpop.permute.xlu0 %2287
  %2289 = vrot.lane.b32.xlu0 %v2221, 1
  %v2290 = vpop.permute.xlu0 %2289
  %2291 = vrot.lane.b32.xlu0 %v2223, 1
  %v2292 = vpop.permute.xlu0 %2291
  %vm2293 = vcmp.lt.s32.totalorder %v2233, 1
  %v2294 = vsel %vm2293, %v2286, %v2290
  %v2295 = vsel %vm2293, %v2288, %v2292
  %v2296 = vsel %vm2293, %v2290, %v2286
  %v2297 = vsel %vm2293, %v2292, %v2288
  %s2298 = scalar_lea.vmem %s6, 2
  %v2299 = vld [vmem:[%s2298] ss:$8 sm:$0x3]
  %v2301 = vlaneseq
  %v2302 = vshrl.u32 %v2301, 7
  %v2303 = vsub.s32 0, %v2302
  %v2304 = vrot.slane %v2299, %v2303
  %v2305 = vlaneseq
  %v2306 = vshrl.u32 %v2305, 7
  %v2307 = vsub.s32 1, %v2306
  %v2308 = vrot.slane %v2299, %v2307
  %v2311 = vmul.f32 %v2296, %v2304
  %v2312 = vmul.f32 %v2294, %v2308
  %v2313 = vmul.f32 %v2297, %v2304
  %v2314 = vmul.f32 %v2295, %v2308
  %s2315 = scalar_lea.vmem %s6, 3
  %v2316 = vld [vmem:[%s2315] ss:$8 sm:$0x3]
  %v2318 = vlaneseq
  %v2319 = vshrl.u32 %v2318, 7
  %v2320 = vsub.s32 0, %v2319
  %v2321 = vrot.slane %v2316, %v2320
  %v2322 = vlaneseq
  %v2323 = vshrl.u32 %v2322, 7
  %v2324 = vsub.s32 1, %v2323
  %v2325 = vrot.slane %v2316, %v2324
  %v2328 = vmul.f32 %v2220, %v2321
  %v2329 = vmul.f32 %v2221, %v2325
  %v2330 = vmul.f32 %v2222, %v2321
  %v2331 = vmul.f32 %v2223, %v2325
  %2332 = vrot.lane.b32.xlu0 %v2220, 127
  %v2333 = vpop.permute.xlu0 %2332
  %2334 = vrot.lane.b32.xlu0 %v2222, 127
  %v2335 = vpop.permute.xlu0 %2334
  %2336 = vrot.lane.b32.xlu0 %v2221, 127
  %v2337 = vpop.permute.xlu0 %2336
  %2338 = vrot.lane.b32.xlu0 %v2223, 127
  %v2339 = vpop.permute.xlu0 %2338
  %vm2340 = vcmp.lt.s32.totalorder %v2233, 127
  %v2341 = vsel %vm2340, %v2333, %v2337
  %v2342 = vsel %vm2340, %v2335, %v2339
  %v2343 = vsel %vm2340, %v2337, %v2333
  %v2344 = vsel %vm2340, %v2339, %v2335
  %s2345 = scalar_lea.vmem %s6, 4
  %v2346 = vld [vmem:[%s2345] ss:$8 sm:$0x3]
  %v2348 = vlaneseq
  %v2349 = vshrl.u32 %v2348, 7
  %v2350 = vsub.s32 0, %v2349
  %v2351 = vrot.slane %v2346, %v2350
  %v2352 = vlaneseq
  %v2353 = vshrl.u32 %v2352, 7
  %v2354 = vsub.s32 1, %v2353
  %v2355 = vrot.slane %v2346, %v2354
  %v2358 = vmul.f32 %v2341, %v2351
  %v2359 = vmul.f32 %v2343, %v2355
  %v2360 = vmul.f32 %v2342, %v2351
  %v2361 = vmul.f32 %v2344, %v2355
  %2362 = vrot.lane.b32.xlu0 %v2220, 126
  %v2363 = vpop.permute.xlu0 %2362
  %2364 = vrot.lane.b32.xlu0 %v2222, 126
  %v2365 = vpop.permute.xlu0 %2364
  %2366 = vrot.lane.b32.xlu0 %v2221, 126
  %v2367 = vpop.permute.xlu0 %2366
  %2368 = vrot.lane.b32.xlu0 %v2223, 126
  %v2369 = vpop.permute.xlu0 %2368
  %vm2370 = vcmp.lt.s32.totalorder %v2233, 126
  %v2371 = vsel %vm2370, %v2363, %v2367
  %v2372 = vsel %vm2370, %v2365, %v2369
  %v2373 = vsel %vm2370, %v2367, %v2363
  %v2374 = vsel %vm2370, %v2369, %v2365
  %s2375 = scalar_lea.vmem %s6, 5
  %v2376 = vld [vmem:[%s2375] ss:$8 sm:$0x3]
  %v2378 = vlaneseq
  %v2379 = vshrl.u32 %v2378, 7
  %v2380 = vsub.s32 0, %v2379
  %v2381 = vrot.slane %v2376, %v2380
  %v2382 = vlaneseq
  %v2383 = vshrl.u32 %v2382, 7
  %v2384 = vsub.s32 1, %v2383
  %v2385 = vrot.slane %v2376, %v2384
  %v2388 = vmul.f32 %v2371, %v2381
  %v2389 = vmul.f32 %v2373, %v2385
  %v2390 = vmul.f32 %v2372, %v2381
  %v2391 = vmul.f32 %v2374, %v2385
  %2392 = vrot.lane.b32.xlu0 %v2220, 125
  %v2393 = vpop.permute.xlu0 %2392
  %2394 = vrot.lane.b32.xlu0 %v2222, 125
  %v2395 = vpop.permute.xlu0 %2394
  %2396 = vrot.lane.b32.xlu0 %v2221, 125
  %v2397 = vpop.permute.xlu0 %2396
  %2398 = vrot.lane.b32.xlu0 %v2223, 125
  %v2399 = vpop.permute.xlu0 %2398
  %vm2400 = vcmp.lt.s32.totalorder %v2233, 125
  %v2401 = vsel %vm2400, %v2393, %v2397
  %v2402 = vsel %vm2400, %v2395, %v2399
  %v2403 = vsel %vm2400, %v2397, %v2393
  %v2404 = vsel %vm2400, %v2399, %v2395
  %s2405 = scalar_lea.vmem %s6, 6
  %v2406 = vld [vmem:[%s2405] ss:$8 sm:$0x3]
  %v2408 = vlaneseq
  %v2409 = vshrl.u32 %v2408, 7
  %v2410 = vsub.s32 0, %v2409
  %v2411 = vrot.slane %v2406, %v2410
  %v2412 = vlaneseq
  %v2413 = vshrl.u32 %v2412, 7
  %v2414 = vsub.s32 1, %v2413
  %v2415 = vrot.slane %v2406, %v2414
  %v2418 = vmul.f32 %v2401, %v2411
  %v2419 = vmul.f32 %v2403, %v2415
  %v2420 = vmul.f32 %v2402, %v2411
  %v2421 = vmul.f32 %v2404, %v2415
  %v2426 = vrot.slane %v2281, 6
  %v2427 = vrot.slane %v2282, 6
  %v2428 = vrot.slane %v2283, 6
  %v2429 = vrot.slane %v2284, 6
  %v2438 = vrot.slane %v2311, 4
  %v2439 = vrot.slane %v2312, 4
  %v2440 = vrot.slane %v2313, 4
  %v2441 = vrot.slane %v2314, 4
  %v2450 = vrot.slane %v2328, 2
  %v2451 = vrot.slane %v2329, 2
  %v2452 = vrot.slane %v2330, 2
  %v2453 = vrot.slane %v2331, 2
  %v2462 = vrot.slane %v2388, 6
  %v2463 = vrot.slane %v2389, 6
  %v2464 = vrot.slane %v2390, 6
  %v2465 = vrot.slane %v2391, 6
  %v2474 = vrot.slane %v2418, 4
  %v2475 = vrot.slane %v2419, 4
  %v2476 = vrot.slane %v2420, 4
  %v2477 = vrot.slane %v2421, 4
  %v2482 = vsel %vm1128, %v2251, %v2426
  %v2483 = vsel %vm1128, %v2252, %v2427
  %v2484 = vsel %vm1128, %v2253, %v2428
  %v2485 = vsel %vm1128, %v2254, %v2429
  %vm2486 = vcmask 1043456
  %v2487 = vsel %vm2486, %v2482, %v2438
  %v2488 = vsel %vm2486, %v2483, %v2439
  %v2489 = vsel %vm2486, %v2484, %v2440
  %v2490 = vsel %vm2486, %v2485, %v2441
  %vm2491 = vcmask 1045504
  %v2492 = vsel %vm2491, %v2487, %v2450
  %v2493 = vsel %vm2491, %v2488, %v2451
  %v2494 = vsel %vm2491, %v2489, %v2452
  %v2495 = vsel %vm2491, %v2490, %v2453
  %v2496 = vsel %vm1128, %v2358, %v2462
  %v2497 = vsel %vm1128, %v2359, %v2463
  %v2498 = vsel %vm1128, %v2360, %v2464
  %v2499 = vsel %vm1128, %v2361, %v2465
  %v2500 = vsel %vm2486, %v2496, %v2474
  %v2501 = vsel %vm2486, %v2497, %v2475
  %v2502 = vsel %vm2486, %v2498, %v2476
  %v2503 = vsel %vm2486, %v2499, %v2477
  %v2504 = vld [vmem:[%s5] sm:$0x7f]
  %vm2505 = vcmask 113664
  %v2507 = vsel %vm2505, %v2504, 0
  %v2510 = vsel %vm2491, %v2500, 0
  %v2513 = vsel %vm2491, %v2501, 0
  %v2515 = vand.u32 %v2493, 4294901760
  %2516 = vmatprep.subr.mxu0 %v2515
  %v2517 = vand.u32 %v2492, 4294901760
  %2518 = vmatpush1.msra.mxu0 %v2517
  %v2519 = vand.u32 %v2513, 4294901760
  %2520 = vmatprep.subr.mxu0 %v2519
  %v2521 = vand.u32 %v2510, 4294901760
  %2522 = vmatpush1.msra.mxu0 %v2521
  %2523 = vmatprep.subr.mxu0 0.0
  %2524 = vmatpush1.msra.mxu0 0.0
  %2525 = vmatprep.subr.mxu0 0.0
  %2526 = vmatpush1.msra.mxu0 0.0
  %2527 = vmatprep.subr.mxu0 0.0
  %2528 = vmatpush1.msra.mxu0 0.0
  %2529 = vmatprep.subr.mxu0 0.0
  %2530 = vmatpush1.msra.mxu0 0.0
  %2531 = vmatprep.subr.mxu0 0.0
  %2532 = vmatpush1.msra.mxu0 0.0
  %2533 = vmatprep.subr.mxu0 0.0
  %2534 = vmatpush1.msra.mxu0 0.0
  %2535 = vmatprep.subr.mxu0 0.0
  %2536 = vmatpush1.msra.mxu0 0.0
  %2537 = vmatprep.subr.mxu0 0.0
  %2538 = vmatpush1.msra.mxu0 0.0
  %2539 = vmatprep.subr.mxu0 0.0
  %2540 = vmatpush1.msra.mxu0 0.0
  %2541 = vmatprep.subr.mxu0 0.0
  %2542 = vmatpush1.msra.mxu0 0.0
  %2543 = vmatprep.subr.mxu0 0.0
  %2544 = vmatpush1.msra.mxu0 0.0
  %2545 = vmatprep.subr.mxu0 0.0
  %2546 = vmatpush1.msra.mxu0 0.0
  %2547 = vmatprep.subr.mxu0 0.0
  %2548 = vmatpush1.msra.mxu0 0.0
  %2549 = vmatprep.subr.mxu0 0.0
  %2550 = vmatpush1.msra.mxu0 0.0
  %2551 = vmatprep.subr.mxu0 0.0
  %2552 = vmatpush1.msra.mxu0 0.0
  %2553 = vmatprep.subr.mxu0 0.0
  %2554 = vmatpush1.msra.mxu0 0.0
  %2555 = vmatprep.subr.mxu0 0.0
  %2556 = vmatpush1.msra.mxu0 0.0
  %2557 = vmatprep.subr.mxu0 0.0
  %2558 = vmatpush1.msra.mxu0 0.0
  %2559 = vmatprep.subr.mxu0 0.0
  %2560 = vmatpush1.msra.mxu0 0.0
  %2561 = vmatprep.subr.mxu0 0.0
  %2562 = vmatpush1.msra.mxu0 0.0
  %2563 = vmatprep.subr.mxu0 0.0
  %2564 = vmatpush1.msra.mxu0 0.0
  %2565 = vmatprep.subr.mxu0 0.0
  %2566 = vmatpush1.msra.mxu0 0.0
  %2567 = vmatprep.subr.mxu0 0.0
  %2568 = vmatpush1.msra.mxu0 0.0
  %2569 = vmatprep.subr.mxu0 0.0
  %2570 = vmatpush1.msra.mxu0 0.0
  %2571 = vmatprep.subr.mxu0 0.0
  %2572 = vmatpush1.msra.mxu0 0.0
  %2573 = vmatprep.subr.mxu0 0.0
  %2574 = vmatpush1.msra.mxu0 0.0
  %2575 = vmatprep.subr.mxu0 0.0
  %2576 = vmatpush1.msra.mxu0 0.0
  %2577 = vmatprep.subr.mxu0 0.0
  %2578 = vmatpush1.msra.mxu0 0.0
  %2579 = vmatprep.subr.mxu0 0.0
  %2580 = vmatpush1.msra.mxu0 0.0
  %2581 = vmatprep.subr.mxu0 0.0
  %2582 = vmatpush1.msra.mxu0 0.0
  %2583 = vmatprep.mubr.f32.mxu0 0.0
  %v2584 = vand.u32 %v2507, 4294901760
  %v2585 = vsub.f32 %v2507, %v2584
  %v2586 = vand.u32 %v2585, 4294901760
  %v2587 = vsub.f32 %v2585, %v2586
  %v2588 = vand.u32 %v2587, 4294901760
  %2589 = vmatmul.mubr.f32.gmra.mrb[0].mxu0 %v2588
  %v2590 = vpop.f32.mrb[0].mxu0
  %v2591 = vadd.f32 0.0, %v2590
  %v2592 = vpop.f32.mrb[0].mxu0
  %v2593 = vadd.f32 0.0, %v2592
  %2594 = vdwg.mxu0
  %v2595 = vand.u32 %v2493, 4294901760
  %v2596 = vsub.f32 %v2493, %v2595
  %v2597 = vand.u32 %v2596, 4294901760
  %v2598 = vsub.f32 %v2596, %v2597
  %v2599 = vand.u32 %v2598, 4294901760
  %2600 = vmatprep.subr.mxu0 %v2599
  %v2601 = vand.u32 %v2492, 4294901760
  %v2602 = vsub.f32 %v2492, %v2601
  %v2603 = vand.u32 %v2602, 4294901760
  %v2604 = vsub.f32 %v2602, %v2603
  %v2605 = vand.u32 %v2604, 4294901760
  %2606 = vmatpush1.msra.mxu0 %v2605
  %v2607 = vand.u32 %v2513, 4294901760
  %v2608 = vsub.f32 %v2513, %v2607
  %v2609 = vand.u32 %v2608, 4294901760
  %v2610 = vsub.f32 %v2608, %v2609
  %v2611 = vand.u32 %v2610, 4294901760
  %2612 = vmatprep.subr.mxu0 %v2611
  %v2613 = vand.u32 %v2510, 4294901760
  %v2614 = vsub.f32 %v2510, %v2613
  %v2615 = vand.u32 %v2614, 4294901760
  %v2616 = vsub.f32 %v2614, %v2615
  %v2617 = vand.u32 %v2616, 4294901760
  %2618 = vmatpush1.msra.mxu0 %v2617
  %2619 = vmatprep.subr.mxu0 0.0
  %2620 = vmatpush1.msra.mxu0 0.0
  %2621 = vmatprep.subr.mxu0 0.0
  %2622 = vmatpush1.msra.mxu0 0.0
  %2623 = vmatprep.subr.mxu0 0.0
  %2624 = vmatpush1.msra.mxu0 0.0
  %2625 = vmatprep.subr.mxu0 0.0
  %2626 = vmatpush1.msra.mxu0 0.0
  %2627 = vmatprep.subr.mxu0 0.0
  %2628 = vmatpush1.msra.mxu0 0.0
  %2629 = vmatprep.subr.mxu0 0.0
  %2630 = vmatpush1.msra.mxu0 0.0
  %2631 = vmatprep.subr.mxu0 0.0
  %2632 = vmatpush1.msra.mxu0 0.0
  %2633 = vmatprep.subr.mxu0 0.0
  %2634 = vmatpush1.msra.mxu0 0.0
  %2635 = vmatprep.subr.mxu0 0.0
  %2636 = vmatpush1.msra.mxu0 0.0
  %2637 = vmatprep.subr.mxu0 0.0
  %2638 = vmatpush1.msra.mxu0 0.0
  %2639 = vmatprep.subr.mxu0 0.0
  %2640 = vmatpush1.msra.mxu0 0.0
  %2641 = vmatprep.subr.mxu0 0.0
  %2642 = vmatpush1.msra.mxu0 0.0
  %2643 = vmatprep.subr.mxu0 0.0
  %2644 = vmatpush1.msra.mxu0 0.0
  %2645 = vmatprep.subr.mxu0 0.0
  %2646 = vmatpush1.msra.mxu0 0.0
  %2647 = vmatprep.subr.mxu0 0.0
  %2648 = vmatpush1.msra.mxu0 0.0
  %2649 = vmatprep.subr.mxu0 0.0
  %2650 = vmatpush1.msra.mxu0 0.0
  %2651 = vmatprep.subr.mxu0 0.0
  %2652 = vmatpush1.msra.mxu0 0.0
  %2653 = vmatprep.subr.mxu0 0.0
  %2654 = vmatpush1.msra.mxu0 0.0
  %2655 = vmatprep.subr.mxu0 0.0
  %2656 = vmatpush1.msra.mxu0 0.0
  %2657 = vmatprep.subr.mxu0 0.0
  %2658 = vmatpush1.msra.mxu0 0.0
  %2659 = vmatprep.subr.mxu0 0.0
  %2660 = vmatpush1.msra.mxu0 0.0
  %2661 = vmatprep.subr.mxu0 0.0
  %2662 = vmatpush1.msra.mxu0 0.0
  %2663 = vmatprep.subr.mxu0 0.0
  %2664 = vmatpush1.msra.mxu0 0.0
  %2665 = vmatprep.subr.mxu0 0.0
  %2666 = vmatpush1.msra.mxu0 0.0
  %2667 = vmatprep.subr.mxu0 0.0
  %2668 = vmatpush1.msra.mxu0 0.0
  %2669 = vmatprep.subr.mxu0 0.0
  %2670 = vmatpush1.msra.mxu0 0.0
  %2671 = vmatprep.subr.mxu0 0.0
  %2672 = vmatpush1.msra.mxu0 0.0
  %2673 = vmatprep.subr.mxu0 0.0
  %2674 = vmatpush1.msra.mxu0 0.0
  %2675 = vmatprep.subr.mxu0 0.0
  %2676 = vmatpush1.msra.mxu0 0.0
  %2677 = vmatprep.subr.mxu0 0.0
  %2678 = vmatpush1.msra.mxu0 0.0
  %2679 = vmatprep.mubr.f32.mxu0 0.0
  %v2680 = vand.u32 %v2507, 4294901760
  %2681 = vmatmul.mubr.f32.gmra.mrb[0].mxu0 %v2680
  %v2682 = vpop.f32.mrb[0].mxu0
  %v2683 = vadd.f32 %v2591, %v2682
  %v2684 = vpop.f32.mrb[0].mxu0
  %v2685 = vadd.f32 %v2593, %v2684
  %2686 = vdwg.mxu0
  %v2687 = vand.u32 %v2493, 4294901760
  %v2688 = vsub.f32 %v2493, %v2687
  %2689 = vmatprep.subr.mxu0 %v2688
  %v2690 = vand.u32 %v2492, 4294901760
  %v2691 = vsub.f32 %v2492, %v2690
  %2692 = vmatpush1.msra.mxu0 %v2691
  %v2693 = vand.u32 %v2513, 4294901760
  %v2694 = vsub.f32 %v2513, %v2693
  %2695 = vmatprep.subr.mxu0 %v2694
  %v2696 = vand.u32 %v2510, 4294901760
  %v2697 = vsub.f32 %v2510, %v2696
  %2698 = vmatpush1.msra.mxu0 %v2697
  %2699 = vmatprep.subr.mxu0 0.0
  %2700 = vmatpush1.msra.mxu0 0.0
  %2701 = vmatprep.subr.mxu0 0.0
  %2702 = vmatpush1.msra.mxu0 0.0
  %2703 = vmatprep.subr.mxu0 0.0
  %2704 = vmatpush1.msra.mxu0 0.0
  %2705 = vmatprep.subr.mxu0 0.0
  %2706 = vmatpush1.msra.mxu0 0.0
  %2707 = vmatprep.subr.mxu0 0.0
  %2708 = vmatpush1.msra.mxu0 0.0
  %2709 = vmatprep.subr.mxu0 0.0
  %2710 = vmatpush1.msra.mxu0 0.0
  %2711 = vmatprep.subr.mxu0 0.0
  %2712 = vmatpush1.msra.mxu0 0.0
  %2713 = vmatprep.subr.mxu0 0.0
  %2714 = vmatpush1.msra.mxu0 0.0
  %2715 = vmatprep.subr.mxu0 0.0
  %2716 = vmatpush1.msra.mxu0 0.0
  %2717 = vmatprep.subr.mxu0 0.0
  %2718 = vmatpush1.msra.mxu0 0.0
  %2719 = vmatprep.subr.mxu0 0.0
  %2720 = vmatpush1.msra.mxu0 0.0
  %2721 = vmatprep.subr.mxu0 0.0
  %2722 = vmatpush1.msra.mxu0 0.0
  %2723 = vmatprep.subr.mxu0 0.0
  %2724 = vmatpush1.msra.mxu0 0.0
  %2725 = vmatprep.subr.mxu0 0.0
  %2726 = vmatpush1.msra.mxu0 0.0
  %2727 = vmatprep.subr.mxu0 0.0
  %2728 = vmatpush1.msra.mxu0 0.0
  %2729 = vmatprep.subr.mxu0 0.0
  %2730 = vmatpush1.msra.mxu0 0.0
  %2731 = vmatprep.subr.mxu0 0.0
  %2732 = vmatpush1.msra.mxu0 0.0
  %2733 = vmatprep.subr.mxu0 0.0
  %2734 = vmatpush1.msra.mxu0 0.0
  %2735 = vmatprep.subr.mxu0 0.0
  %2736 = vmatpush1.msra.mxu0 0.0
  %2737 = vmatprep.subr.mxu0 0.0
  %2738 = vmatpush1.msra.mxu0 0.0
  %2739 = vmatprep.subr.mxu0 0.0
  %2740 = vmatpush1.msra.mxu0 0.0
  %2741 = vmatprep.subr.mxu0 0.0
  %2742 = vmatpush1.msra.mxu0 0.0
  %2743 = vmatprep.subr.mxu0 0.0
  %2744 = vmatpush1.msra.mxu0 0.0
  %2745 = vmatprep.subr.mxu0 0.0
  %2746 = vmatpush1.msra.mxu0 0.0
  %2747 = vmatprep.subr.mxu0 0.0
  %2748 = vmatpush1.msra.mxu0 0.0
  %2749 = vmatprep.subr.mxu0 0.0
  %2750 = vmatpush1.msra.mxu0 0.0
  %2751 = vmatprep.subr.mxu0 0.0
  %2752 = vmatpush1.msra.mxu0 0.0
  %2753 = vmatprep.subr.mxu0 0.0
  %2754 = vmatpush1.msra.mxu0 0.0
  %2755 = vmatprep.subr.mxu0 0.0
  %2756 = vmatpush1.msra.mxu0 0.0
  %2757 = vmatprep.subr.mxu0 0.0
  %2758 = vmatpush1.msra.mxu0 0.0
  %2759 = vmatprep.mubr.f32.mxu0 0.0
  %v2760 = vand.u32 %v2507, 4294901760
  %v2761 = vsub.f32 %v2507, %v2760
  %2762 = vmatmul.mubr.f32.gmra.mrb[0].mxu0 %v2761
  %v2763 = vpop.f32.mrb[0].mxu0
  %v2764 = vadd.f32 %v2683, %v2763
  %v2765 = vpop.f32.mrb[0].mxu0
  %v2766 = vadd.f32 %v2685, %v2765
  %2767 = vdwg.mxu0
  %v2768 = vand.u32 %v2493, 4294901760
  %2769 = vmatprep.subr.mxu0 %v2768
  %v2770 = vand.u32 %v2492, 4294901760
  %2771 = vmatpush1.msra.mxu0 %v2770
  %v2772 = vand.u32 %v2513, 4294901760
  %2773 = vmatprep.subr.mxu0 %v2772
  %v2774 = vand.u32 %v2510, 4294901760
  %2775 = vmatpush1.msra.mxu0 %v2774
  %2776 = vmatprep.subr.mxu0 0.0
  %2777 = vmatpush1.msra.mxu0 0.0
  %2778 = vmatprep.subr.mxu0 0.0
  %2779 = vmatpush1.msra.mxu0 0.0
  %2780 = vmatprep.subr.mxu0 0.0
  %2781 = vmatpush1.msra.mxu0 0.0
  %2782 = vmatprep.subr.mxu0 0.0
  %2783 = vmatpush1.msra.mxu0 0.0
  %2784 = vmatprep.subr.mxu0 0.0
  %2785 = vmatpush1.msra.mxu0 0.0
  %2786 = vmatprep.subr.mxu0 0.0
  %2787 = vmatpush1.msra.mxu0 0.0
  %2788 = vmatprep.subr.mxu0 0.0
  %2789 = vmatpush1.msra.mxu0 0.0
  %2790 = vmatprep.subr.mxu0 0.0
  %2791 = vmatpush1.msra.mxu0 0.0
  %2792 = vmatprep.subr.mxu0 0.0
  %2793 = vmatpush1.msra.mxu0 0.0
  %2794 = vmatprep.subr.mxu0 0.0
  %2795 = vmatpush1.msra.mxu0 0.0
  %2796 = vmatprep.subr.mxu0 0.0
  %2797 = vmatpush1.msra.mxu0 0.0
  %2798 = vmatprep.subr.mxu0 0.0
  %2799 = vmatpush1.msra.mxu0 0.0
  %2800 = vmatprep.subr.mxu0 0.0
  %2801 = vmatpush1.msra.mxu0 0.0
  %2802 = vmatprep.subr.mxu0 0.0
  %2803 = vmatpush1.msra.mxu0 0.0
  %2804 = vmatprep.subr.mxu0 0.0
  %2805 = vmatpush1.msra.mxu0 0.0
  %2806 = vmatprep.subr.mxu0 0.0
  %2807 = vmatpush1.msra.mxu0 0.0
  %2808 = vmatprep.subr.mxu0 0.0
  %2809 = vmatpush1.msra.mxu0 0.0
  %2810 = vmatprep.subr.mxu0 0.0
  %2811 = vmatpush1.msra.mxu0 0.0
  %2812 = vmatprep.subr.mxu0 0.0
  %2813 = vmatpush1.msra.mxu0 0.0
  %2814 = vmatprep.subr.mxu0 0.0
  %2815 = vmatpush1.msra.mxu0 0.0
  %2816 = vmatprep.subr.mxu0 0.0
  %2817 = vmatpush1.msra.mxu0 0.0
  %2818 = vmatprep.subr.mxu0 0.0
  %2819 = vmatpush1.msra.mxu0 0.0
  %2820 = vmatprep.subr.mxu0 0.0
  %2821 = vmatpush1.msra.mxu0 0.0
  %2822 = vmatprep.subr.mxu0 0.0
  %2823 = vmatpush1.msra.mxu0 0.0
  %2824 = vmatprep.subr.mxu0 0.0
  %2825 = vmatpush1.msra.mxu0 0.0
  %2826 = vmatprep.subr.mxu0 0.0
  %2827 = vmatpush1.msra.mxu0 0.0
  %2828 = vmatprep.subr.mxu0 0.0
  %2829 = vmatpush1.msra.mxu0 0.0
  %2830 = vmatprep.subr.mxu0 0.0
  %2831 = vmatpush1.msra.mxu0 0.0
  %2832 = vmatprep.subr.mxu0 0.0
  %2833 = vmatpush1.msra.mxu0 0.0
  %2834 = vmatprep.subr.mxu0 0.0
  %2835 = vmatpush1.msra.mxu0 0.0
  %2836 = vmatprep.mubr.f32.mxu0 0.0
  %v2837 = vand.u32 %v2507, 4294901760
  %v2838 = vsub.f32 %v2507, %v2837
  %v2839 = vand.u32 %v2838, 4294901760
  %2840 = vmatmul.mubr.f32.gmra.mrb[0].mxu0 %v2839
  %v2841 = vpop.f32.mrb[0].mxu0
  %v2842 = vadd.f32 %v2764, %v2841
  %v2843 = vpop.f32.mrb[0].mxu0
  %v2844 = vadd.f32 %v2766, %v2843
  %2845 = vdwg.mxu0
  %v2846 = vand.u32 %v2493, 4294901760
  %v2847 = vsub.f32 %v2493, %v2846
  %v2848 = vand.u32 %v2847, 4294901760
  %2849 = vmatprep.subr.mxu0 %v2848
  %v2850 = vand.u32 %v2492, 4294901760
  %v2851 = vsub.f32 %v2492, %v2850
  %v2852 = vand.u32 %v2851, 4294901760
  %2853 = vmatpush1.msra.mxu0 %v2852
  %v2854 = vand.u32 %v2513, 4294901760
  %v2855 = vsub.f32 %v2513, %v2854
  %v2856 = vand.u32 %v2855, 4294901760
  %2857 = vmatprep.subr.mxu0 %v2856
  %v2858 = vand.u32 %v2510, 4294901760
  %v2859 = vsub.f32 %v2510, %v2858
  %v2860 = vand.u32 %v2859, 4294901760
  %2861 = vmatpush1.msra.mxu0 %v2860
  %2862 = vmatprep.subr.mxu0 0.0
  %2863 = vmatpush1.msra.mxu0 0.0
  %2864 = vmatprep.subr.mxu0 0.0
  %2865 = vmatpush1.msra.mxu0 0.0
  %2866 = vmatprep.subr.mxu0 0.0
  %2867 = vmatpush1.msra.mxu0 0.0
  %2868 = vmatprep.subr.mxu0 0.0
  %2869 = vmatpush1.msra.mxu0 0.0
  %2870 = vmatprep.subr.mxu0 0.0
  %2871 = vmatpush1.msra.mxu0 0.0
  %2872 = vmatprep.subr.mxu0 0.0
  %2873 = vmatpush1.msra.mxu0 0.0
  %2874 = vmatprep.subr.mxu0 0.0
  %2875 = vmatpush1.msra.mxu0 0.0
  %2876 = vmatprep.subr.mxu0 0.0
  %2877 = vmatpush1.msra.mxu0 0.0
  %2878 = vmatprep.subr.mxu0 0.0
  %2879 = vmatpush1.msra.mxu0 0.0
  %2880 = vmatprep.subr.mxu0 0.0
  %2881 = vmatpush1.msra.mxu0 0.0
  %2882 = vmatprep.subr.mxu0 0.0
  %2883 = vmatpush1.msra.mxu0 0.0
  %2884 = vmatprep.subr.mxu0 0.0
  %2885 = vmatpush1.msra.mxu0 0.0
  %2886 = vmatprep.subr.mxu0 0.0
  %2887 = vmatpush1.msra.mxu0 0.0
  %2888 = vmatprep.subr.mxu0 0.0
  %2889 = vmatpush1.msra.mxu0 0.0
  %2890 = vmatprep.subr.mxu0 0.0
  %2891 = vmatpush1.msra.mxu0 0.0
  %2892 = vmatprep.subr.mxu0 0.0
  %2893 = vmatpush1.msra.mxu0 0.0
  %2894 = vmatprep.subr.mxu0 0.0
  %2895 = vmatpush1.msra.mxu0 0.0
  %2896 = vmatprep.subr.mxu0 0.0
  %2897 = vmatpush1.msra.mxu0 0.0
  %2898 = vmatprep.subr.mxu0 0.0
  %2899 = vmatpush1.msra.mxu0 0.0
  %2900 = vmatprep.subr.mxu0 0.0
  %2901 = vmatpush1.msra.mxu0 0.0
  %2902 = vmatprep.subr.mxu0 0.0
  %2903 = vmatpush1.msra.mxu0 0.0
  %2904 = vmatprep.subr.mxu0 0.0
  %2905 = vmatpush1.msra.mxu0 0.0
  %2906 = vmatprep.subr.mxu0 0.0
  %2907 = vmatpush1.msra.mxu0 0.0
  %2908 = vmatprep.subr.mxu0 0.0
  %2909 = vmatpush1.msra.mxu0 0.0
  %2910 = vmatprep.subr.mxu0 0.0
  %2911 = vmatpush1.msra.mxu0 0.0
  %2912 = vmatprep.subr.mxu0 0.0
  %2913 = vmatpush1.msra.mxu0 0.0
  %2914 = vmatprep.subr.mxu0 0.0
  %2915 = vmatpush1.msra.mxu0 0.0
  %2916 = vmatprep.subr.mxu0 0.0
  %2917 = vmatpush1.msra.mxu0 0.0
  %2918 = vmatprep.subr.mxu0 0.0
  %2919 = vmatpush1.msra.mxu0 0.0
  %2920 = vmatprep.subr.mxu0 0.0
  %2921 = vmatpush1.msra.mxu0 0.0
  %2922 = vmatprep.mubr.f32.mxu0 0.0
  %v2923 = vand.u32 %v2507, 4294901760
  %2924 = vmatmul.mubr.f32.gmra.mrb[0].mxu0 %v2923
  %v2925 = vpop.f32.mrb[0].mxu0
  %v2926 = vadd.f32 %v2842, %v2925
  %v2927 = vpop.f32.mrb[0].mxu0
  %v2928 = vadd.f32 %v2844, %v2927
  %2929 = vdwg.mxu0
  %v2930 = vand.u32 %v2493, 4294901760
  %2931 = vmatprep.subr.mxu0 %v2930
  %v2932 = vand.u32 %v2492, 4294901760
  %2933 = vmatpush1.msra.mxu0 %v2932
  %v2934 = vand.u32 %v2513, 4294901760
  %2935 = vmatprep.subr.mxu0 %v2934
  %v2936 = vand.u32 %v2510, 4294901760
  %2937 = vmatpush1.msra.mxu0 %v2936
  %2938 = vmatprep.subr.mxu0 0.0
  %2939 = vmatpush1.msra.mxu0 0.0
  %2940 = vmatprep.subr.mxu0 0.0
  %2941 = vmatpush1.msra.mxu0 0.0
  %2942 = vmatprep.subr.mxu0 0.0
  %2943 = vmatpush1.msra.mxu0 0.0
  %2944 = vmatprep.subr.mxu0 0.0
  %2945 = vmatpush1.msra.mxu0 0.0
  %2946 = vmatprep.subr.mxu0 0.0
  %2947 = vmatpush1.msra.mxu0 0.0
  %2948 = vmatprep.subr.mxu0 0.0
  %2949 = vmatpush1.msra.mxu0 0.0
  %2950 = vmatprep.subr.mxu0 0.0
  %2951 = vmatpush1.msra.mxu0 0.0
  %2952 = vmatprep.subr.mxu0 0.0
  %2953 = vmatpush1.msra.mxu0 0.0
  %2954 = vmatprep.subr.mxu0 0.0
  %2955 = vmatpush1.msra.mxu0 0.0
  %2956 = vmatprep.subr.mxu0 0.0
  %2957 = vmatpush1.msra.mxu0 0.0
  %2958 = vmatprep.subr.mxu0 0.0
  %2959 = vmatpush1.msra.mxu0 0.0
  %2960 = vmatprep.subr.mxu0 0.0
  %2961 = vmatpush1.msra.mxu0 0.0
  %2962 = vmatprep.subr.mxu0 0.0
  %2963 = vmatpush1.msra.mxu0 0.0
  %2964 = vmatprep.subr.mxu0 0.0
  %2965 = vmatpush1.msra.mxu0 0.0
  %2966 = vmatprep.subr.mxu0 0.0
  %2967 = vmatpush1.msra.mxu0 0.0
  %2968 = vmatprep.subr.mxu0 0.0
  %2969 = vmatpush1.msra.mxu0 0.0
  %2970 = vmatprep.subr.mxu0 0.0
  %2971 = vmatpush1.msra.mxu0 0.0
  %2972 = vmatprep.subr.mxu0 0.0
  %2973 = vmatpush1.msra.mxu0 0.0
  %2974 = vmatprep.subr.mxu0 0.0
  %2975 = vmatpush1.msra.mxu0 0.0
  %2976 = vmatprep.subr.mxu0 0.0
  %2977 = vmatpush1.msra.mxu0 0.0
  %2978 = vmatprep.subr.mxu0 0.0
  %2979 = vmatpush1.msra.mxu0 0.0
  %2980 = vmatprep.subr.mxu0 0.0
  %2981 = vmatpush1.msra.mxu0 0.0
  %2982 = vmatprep.subr.mxu0 0.0
  %2983 = vmatpush1.msra.mxu0 0.0
  %2984 = vmatprep.subr.mxu0 0.0
  %2985 = vmatpush1.msra.mxu0 0.0
  %2986 = vmatprep.subr.mxu0 0.0
  %2987 = vmatpush1.msra.mxu0 0.0
  %2988 = vmatprep.subr.mxu0 0.0
  %2989 = vmatpush1.msra.mxu0 0.0
  %2990 = vmatprep.subr.mxu0 0.0
  %2991 = vmatpush1.msra.mxu0 0.0
  %2992 = vmatprep.subr.mxu0 0.0
  %2993 = vmatpush1.msra.mxu0 0.0
  %2994 = vmatprep.subr.mxu0 0.0
  %2995 = vmatpush1.msra.mxu0 0.0
  %2996 = vmatprep.subr.mxu0 0.0
  %2997 = vmatpush1.msra.mxu0 0.0
  %2998 = vmatprep.mubr.f32.mxu0 0.0
  %v2999 = vand.u32 %v2507, 4294901760
  %3000 = vmatmul.mubr.f32.gmra.mrb[0].mxu0 %v2999
  %v3001 = vpop.f32.mrb[0].mxu0
  %v3002 = vadd.f32 %v2926, %v3001
  %v3003 = vpop.f32.mrb[0].mxu0
  %v3004 = vadd.f32 %v2928, %v3003
  %3005 = vdwg.mxu0
  %v3007 = vsel %vm2491, %v2502, 0
  %v3010 = vsel %vm2491, %v2503, 0
  %v3012 = vand.u32 %v2495, 4294901760
  %3013 = vmatprep.subr.mxu0 %v3012
  %v3014 = vand.u32 %v2494, 4294901760
  %3015 = vmatpush1.msra.mxu0 %v3014
  %v3016 = vand.u32 %v3010, 4294901760
  %3017 = vmatprep.subr.mxu0 %v3016
  %v3018 = vand.u32 %v3007, 4294901760
  %3019 = vmatpush1.msra.mxu0 %v3018
  %3020 = vmatprep.subr.mxu0 0.0
  %3021 = vmatpush1.msra.mxu0 0.0
  %3022 = vmatprep.subr.mxu0 0.0
  %3023 = vmatpush1.msra.mxu0 0.0
  %3024 = vmatprep.subr.mxu0 0.0
  %3025 = vmatpush1.msra.mxu0 0.0
  %3026 = vmatprep.subr.mxu0 0.0
  %3027 = vmatpush1.msra.mxu0 0.0
  %3028 = vmatprep.subr.mxu0 0.0
  %3029 = vmatpush1.msra.mxu0 0.0
  %3030 = vmatprep.subr.mxu0 0.0
  %3031 = vmatpush1.msra.mxu0 0.0
  %3032 = vmatprep.subr.mxu0 0.0
  %3033 = vmatpush1.msra.mxu0 0.0
  %3034 = vmatprep.subr.mxu0 0.0
  %3035 = vmatpush1.msra.mxu0 0.0
  %3036 = vmatprep.subr.mxu0 0.0
  %3037 = vmatpush1.msra.mxu0 0.0
  %3038 = vmatprep.subr.mxu0 0.0
  %3039 = vmatpush1.msra.mxu0 0.0
  %3040 = vmatprep.subr.mxu0 0.0
  %3041 = vmatpush1.msra.mxu0 0.0
  %3042 = vmatprep.subr.mxu0 0.0
  %3043 = vmatpush1.msra.mxu0 0.0
  %3044 = vmatprep.subr.mxu0 0.0
  %3045 = vmatpush1.msra.mxu0 0.0
  %3046 = vmatprep.subr.mxu0 0.0
  %3047 = vmatpush1.msra.mxu0 0.0
  %3048 = vmatprep.subr.mxu0 0.0
  %3049 = vmatpush1.msra.mxu0 0.0
  %3050 = vmatprep.subr.mxu0 0.0
  %3051 = vmatpush1.msra.mxu0 0.0
  %3052 = vmatprep.subr.mxu0 0.0
  %3053 = vmatpush1.msra.mxu0 0.0
  %3054 = vmatprep.subr.mxu0 0.0
  %3055 = vmatpush1.msra.mxu0 0.0
  %3056 = vmatprep.subr.mxu0 0.0
  %3057 = vmatpush1.msra.mxu0 0.0
  %3058 = vmatprep.subr.mxu0 0.0
  %3059 = vmatpush1.msra.mxu0 0.0
  %3060 = vmatprep.subr.mxu0 0.0
  %3061 = vmatpush1.msra.mxu0 0.0
  %3062 = vmatprep.subr.mxu0 0.0
  %3063 = vmatpush1.msra.mxu0 0.0
  %3064 = vmatprep.subr.mxu0 0.0
  %3065 = vmatpush1.msra.mxu0 0.0
  %3066 = vmatprep.subr.mxu0 0.0
  %3067 = vmatpush1.msra.mxu0 0.0
  %3068 = vmatprep.subr.mxu0 0.0
  %3069 = vmatpush1.msra.mxu0 0.0
  %3070 = vmatprep.subr.mxu0 0.0
  %3071 = vmatpush1.msra.mxu0 0.0
  %3072 = vmatprep.subr.mxu0 0.0
  %3073 = vmatpush1.msra.mxu0 0.0
  %3074 = vmatprep.subr.mxu0 0.0
  %3075 = vmatpush1.msra.mxu0 0.0
  %3076 = vmatprep.subr.mxu0 0.0
  %3077 = vmatpush1.msra.mxu0 0.0
  %3078 = vmatprep.subr.mxu0 0.0
  %3079 = vmatpush1.msra.mxu0 0.0
  %3080 = vmatprep.mubr.f32.mxu0 0.0
  %v3081 = vand.u32 %v2507, 4294901760
  %v3082 = vsub.f32 %v2507, %v3081
  %v3083 = vand.u32 %v3082, 4294901760
  %v3084 = vsub.f32 %v3082, %v3083
  %v3085 = vand.u32 %v3084, 4294901760
  %3086 = vmatmul.mubr.f32.gmra.mrb[0].mxu0 %v3085
  %v3087 = vpop.f32.mrb[0].mxu0
  %v3088 = vadd.f32 0.0, %v3087
  %v3089 = vpop.f32.mrb[0].mxu0
  %v3090 = vadd.f32 0.0, %v3089
  %3091 = vdwg.mxu0
  %v3092 = vand.u32 %v2495, 4294901760
  %v3093 = vsub.f32 %v2495, %v3092
  %v3094 = vand.u32 %v3093, 4294901760
  %v3095 = vsub.f32 %v3093, %v3094
  %v3096 = vand.u32 %v3095, 4294901760
  %3097 = vmatprep.subr.mxu0 %v3096
  %v3098 = vand.u32 %v2494, 4294901760
  %v3099 = vsub.f32 %v2494, %v3098
  %v3100 = vand.u32 %v3099, 4294901760
  %v3101 = vsub.f32 %v3099, %v3100
  %v3102 = vand.u32 %v3101, 4294901760
  %3103 = vmatpush1.msra.mxu0 %v3102
  %v3104 = vand.u32 %v3010, 4294901760
  %v3105 = vsub.f32 %v3010, %v3104
  %v3106 = vand.u32 %v3105, 4294901760
  %v3107 = vsub.f32 %v3105, %v3106
  %v3108 = vand.u32 %v3107, 4294901760
  %3109 = vmatprep.subr.mxu0 %v3108
  %v3110 = vand.u32 %v3007, 4294901760
  %v3111 = vsub.f32 %v3007, %v3110
  %v3112 = vand.u32 %v3111, 4294901760
  %v3113 = vsub.f32 %v3111, %v3112
  %v3114 = vand.u32 %v3113, 4294901760
  %3115 = vmatpush1.msra.mxu0 %v3114
  %3116 = vmatprep.subr.mxu0 0.0
  %3117 = vmatpush1.msra.mxu0 0.0
  %3118 = vmatprep.subr.mxu0 0.0
  %3119 = vmatpush1.msra.mxu0 0.0
  %3120 = vmatprep.subr.mxu0 0.0
  %3121 = vmatpush1.msra.mxu0 0.0
  %3122 = vmatprep.subr.mxu0 0.0
  %3123 = vmatpush1.msra.mxu0 0.0
  %3124 = vmatprep.subr.mxu0 0.0
  %3125 = vmatpush1.msra.mxu0 0.0
  %3126 = vmatprep.subr.mxu0 0.0
  %3127 = vmatpush1.msra.mxu0 0.0
  %3128 = vmatprep.subr.mxu0 0.0
  %3129 = vmatpush1.msra.mxu0 0.0
  %3130 = vmatprep.subr.mxu0 0.0
  %3131 = vmatpush1.msra.mxu0 0.0
  %3132 = vmatprep.subr.mxu0 0.0
  %3133 = vmatpush1.msra.mxu0 0.0
  %3134 = vmatprep.subr.mxu0 0.0
  %3135 = vmatpush1.msra.mxu0 0.0
  %3136 = vmatprep.subr.mxu0 0.0
  %3137 = vmatpush1.msra.mxu0 0.0
  %3138 = vmatprep.subr.mxu0 0.0
  %3139 = vmatpush1.msra.mxu0 0.0
  %3140 = vmatprep.subr.mxu0 0.0
  %3141 = vmatpush1.msra.mxu0 0.0
  %3142 = vmatprep.subr.mxu0 0.0
  %3143 = vmatpush1.msra.mxu0 0.0
  %3144 = vmatprep.subr.mxu0 0.0
  %3145 = vmatpush1.msra.mxu0 0.0
  %3146 = vmatprep.subr.mxu0 0.0
  %3147 = vmatpush1.msra.mxu0 0.0
  %3148 = vmatprep.subr.mxu0 0.0
  %3149 = vmatpush1.msra.mxu0 0.0
  %3150 = vmatprep.subr.mxu0 0.0
  %3151 = vmatpush1.msra.mxu0 0.0
  %3152 = vmatprep.subr.mxu0 0.0
  %3153 = vmatpush1.msra.mxu0 0.0
  %3154 = vmatprep.subr.mxu0 0.0
  %3155 = vmatpush1.msra.mxu0 0.0
  %3156 = vmatprep.subr.mxu0 0.0
  %3157 = vmatpush1.msra.mxu0 0.0
  %3158 = vmatprep.subr.mxu0 0.0
  %3159 = vmatpush1.msra.mxu0 0.0
  %3160 = vmatprep.subr.mxu0 0.0
  %3161 = vmatpush1.msra.mxu0 0.0
  %3162 = vmatprep.subr.mxu0 0.0
  %3163 = vmatpush1.msra.mxu0 0.0
  %3164 = vmatprep.subr.mxu0 0.0
  %3165 = vmatpush1.msra.mxu0 0.0
  %3166 = vmatprep.subr.mxu0 0.0
  %3167 = vmatpush1.msra.mxu0 0.0
  %3168 = vmatprep.subr.mxu0 0.0
  %3169 = vmatpush1.msra.mxu0 0.0
  %3170 = vmatprep.subr.mxu0 0.0
  %3171 = vmatpush1.msra.mxu0 0.0
  %3172 = vmatprep.subr.mxu0 0.0
  %3173 = vmatpush1.msra.mxu0 0.0
  %3174 = vmatprep.subr.mxu0 0.0
  %3175 = vmatpush1.msra.mxu0 0.0
  %3176 = vmatprep.mubr.f32.mxu0 0.0
  %v3177 = vand.u32 %v2507, 4294901760
  %3178 = vmatmul.mubr.f32.gmra.mrb[0].mxu0 %v3177
  %v3179 = vpop.f32.mrb[0].mxu0
  %v3180 = vadd.f32 %v3088, %v3179
  %v3181 = vpop.f32.mrb[0].mxu0
  %v3182 = vadd.f32 %v3090, %v3181
  %3183 = vdwg.mxu0
  %v3184 = vand.u32 %v2495, 4294901760
  %v3185 = vsub.f32 %v2495, %v3184
  %3186 = vmatprep.subr.mxu0 %v3185
  %v3187 = vand.u32 %v2494, 4294901760
  %v3188 = vsub.f32 %v2494, %v3187
  %3189 = vmatpush1.msra.mxu0 %v3188
  %v3190 = vand.u32 %v3010, 4294901760
  %v3191 = vsub.f32 %v3010, %v3190
  %3192 = vmatprep.subr.mxu0 %v3191
  %v3193 = vand.u32 %v3007, 4294901760
  %v3194 = vsub.f32 %v3007, %v3193
  %3195 = vmatpush1.msra.mxu0 %v3194
  %3196 = vmatprep.subr.mxu0 0.0
  %3197 = vmatpush1.msra.mxu0 0.0
  %3198 = vmatprep.subr.mxu0 0.0
  %3199 = vmatpush1.msra.mxu0 0.0
  %3200 = vmatprep.subr.mxu0 0.0
  %3201 = vmatpush1.msra.mxu0 0.0
  %3202 = vmatprep.subr.mxu0 0.0
  %3203 = vmatpush1.msra.mxu0 0.0
  %3204 = vmatprep.subr.mxu0 0.0
  %3205 = vmatpush1.msra.mxu0 0.0
  %3206 = vmatprep.subr.mxu0 0.0
  %3207 = vmatpush1.msra.mxu0 0.0
  %3208 = vmatprep.subr.mxu0 0.0
  %3209 = vmatpush1.msra.mxu0 0.0
  %3210 = vmatprep.subr.mxu0 0.0
  %3211 = vmatpush1.msra.mxu0 0.0
  %3212 = vmatprep.subr.mxu0 0.0
  %3213 = vmatpush1.msra.mxu0 0.0
  %3214 = vmatprep.subr.mxu0 0.0
  %3215 = vmatpush1.msra.mxu0 0.0
  %3216 = vmatprep.subr.mxu0 0.0
  %3217 = vmatpush1.msra.mxu0 0.0
  %3218 = vmatprep.subr.mxu0 0.0
  %3219 = vmatpush1.msra.mxu0 0.0
  %3220 = vmatprep.subr.mxu0 0.0
  %3221 = vmatpush1.msra.mxu0 0.0
  %3222 = vmatprep.subr.mxu0 0.0
  %3223 = vmatpush1.msra.mxu0 0.0
  %3224 = vmatprep.subr.mxu0 0.0
  %3225 = vmatpush1.msra.mxu0 0.0
  %3226 = vmatprep.subr.mxu0 0.0
  %3227 = vmatpush1.msra.mxu0 0.0
  %3228 = vmatprep.subr.mxu0 0.0
  %3229 = vmatpush1.msra.mxu0 0.0
  %3230 = vmatprep.subr.mxu0 0.0
  %3231 = vmatpush1.msra.mxu0 0.0
  %3232 = vmatprep.subr.mxu0 0.0
  %3233 = vmatpush1.msra.mxu0 0.0
  %3234 = vmatprep.subr.mxu0 0.0
  %3235 = vmatpush1.msra.mxu0 0.0
  %3236 = vmatprep.subr.mxu0 0.0
  %3237 = vmatpush1.msra.mxu0 0.0
  %3238 = vmatprep.subr.mxu0 0.0
  %3239 = vmatpush1.msra.mxu0 0.0
  %3240 = vmatprep.subr.mxu0 0.0
  %3241 = vmatpush1.msra.mxu0 0.0
  %3242 = vmatprep.subr.mxu0 0.0
  %3243 = vmatpush1.msra.mxu0 0.0
  %3244 = vmatprep.subr.mxu0 0.0
  %3245 = vmatpush1.msra.mxu0 0.0
  %3246 = vmatprep.subr.mxu0 0.0
  %3247 = vmatpush1.msra.mxu0 0.0
  %3248 = vmatprep.subr.mxu0 0.0
  %3249 = vmatpush1.msra.mxu0 0.0
  %3250 = vmatprep.subr.mxu0 0.0
  %3251 = vmatpush1.msra.mxu0 0.0
  %3252 = vmatprep.subr.mxu0 0.0
  %3253 = vmatpush1.msra.mxu0 0.0
  %3254 = vmatprep.subr.mxu0 0.0
  %3255 = vmatpush1.msra.mxu0 0.0
  %3256 = vmatprep.mubr.f32.mxu0 0.0
  %v3257 = vand.u32 %v2507, 4294901760
  %v3258 = vsub.f32 %v2507, %v3257
  %3259 = vmatmul.mubr.f32.gmra.mrb[0].mxu0 %v3258
  %v3260 = vpop.f32.mrb[0].mxu0
  %v3261 = vadd.f32 %v3180, %v3260
  %v3262 = vpop.f32.mrb[0].mxu0
  %v3263 = vadd.f32 %v3182, %v3262
  %3264 = vdwg.mxu0
  %v3265 = vand.u32 %v2495, 4294901760
  %3266 = vmatprep.subr.mxu0 %v3265
  %v3267 = vand.u32 %v2494, 4294901760
  %3268 = vmatpush1.msra.mxu0 %v3267
  %v3269 = vand.u32 %v3010, 4294901760
  %3270 = vmatprep.subr.mxu0 %v3269
  %v3271 = vand.u32 %v3007, 4294901760
  %3272 = vmatpush1.msra.mxu0 %v3271
  %3273 = vmatprep.subr.mxu0 0.0
  %3274 = vmatpush1.msra.mxu0 0.0
  %3275 = vmatprep.subr.mxu0 0.0
  %3276 = vmatpush1.msra.mxu0 0.0
  %3277 = vmatprep.subr.mxu0 0.0
  %3278 = vmatpush1.msra.mxu0 0.0
  %3279 = vmatprep.subr.mxu0 0.0
  %3280 = vmatpush1.msra.mxu0 0.0
  %3281 = vmatprep.subr.mxu0 0.0
  %3282 = vmatpush1.msra.mxu0 0.0
  %3283 = vmatprep.subr.mxu0 0.0
  %3284 = vmatpush1.msra.mxu0 0.0
  %3285 = vmatprep.subr.mxu0 0.0
  %3286 = vmatpush1.msra.mxu0 0.0
  %3287 = vmatprep.subr.mxu0 0.0
  %3288 = vmatpush1.msra.mxu0 0.0
  %3289 = vmatprep.subr.mxu0 0.0
  %3290 = vmatpush1.msra.mxu0 0.0
  %3291 = vmatprep.subr.mxu0 0.0
  %3292 = vmatpush1.msra.mxu0 0.0
  %3293 = vmatprep.subr.mxu0 0.0
  %3294 = vmatpush1.msra.mxu0 0.0
  %3295 = vmatprep.subr.mxu0 0.0
  %3296 = vmatpush1.msra.mxu0 0.0
  %3297 = vmatprep.subr.mxu0 0.0
  %3298 = vmatpush1.msra.mxu0 0.0
  %3299 = vmatprep.subr.mxu0 0.0
  %3300 = vmatpush1.msra.mxu0 0.0
  %3301 = vmatprep.subr.mxu0 0.0
  %3302 = vmatpush1.msra.mxu0 0.0
  %3303 = vmatprep.subr.mxu0 0.0
  %3304 = vmatpush1.msra.mxu0 0.0
  %3305 = vmatprep.subr.mxu0 0.0
  %3306 = vmatpush1.msra.mxu0 0.0
  %3307 = vmatprep.subr.mxu0 0.0
  %3308 = vmatpush1.msra.mxu0 0.0
  %3309 = vmatprep.subr.mxu0 0.0
  %3310 = vmatpush1.msra.mxu0 0.0
  %3311 = vmatprep.subr.mxu0 0.0
  %3312 = vmatpush1.msra.mxu0 0.0
  %3313 = vmatprep.subr.mxu0 0.0
  %3314 = vmatpush1.msra.mxu0 0.0
  %3315 = vmatprep.subr.mxu0 0.0
  %3316 = vmatpush1.msra.mxu0 0.0
  %3317 = vmatprep.subr.mxu0 0.0
  %3318 = vmatpush1.msra.mxu0 0.0
  %3319 = vmatprep.subr.mxu0 0.0
  %3320 = vmatpush1.msra.mxu0 0.0
  %3321 = vmatprep.subr.mxu0 0.0
  %3322 = vmatpush1.msra.mxu0 0.0
  %3323 = vmatprep.subr.mxu0 0.0
  %3324 = vmatpush1.msra.mxu0 0.0
  %3325 = vmatprep.subr.mxu0 0.0
  %3326 = vmatpush1.msra.mxu0 0.0
  %3327 = vmatprep.subr.mxu0 0.0
  %3328 = vmatpush1.msra.mxu0 0.0
  %3329 = vmatprep.subr.mxu0 0.0
  %3330 = vmatpush1.msra.mxu0 0.0
  %3331 = vmatprep.subr.mxu0 0.0
  %3332 = vmatpush1.msra.mxu0 0.0
  %3333 = vmatprep.mubr.f32.mxu0 0.0
  %v3334 = vand.u32 %v2507, 4294901760
  %v3335 = vsub.f32 %v2507, %v3334
  %v3336 = vand.u32 %v3335, 4294901760
  %3337 = vmatmul.mubr.f32.gmra.mrb[0].mxu0 %v3336
  %v3338 = vpop.f32.mrb[0].mxu0
  %v3339 = vadd.f32 %v3261, %v3338
  %v3340 = vpop.f32.mrb[0].mxu0
  %v3341 = vadd.f32 %v3263, %v3340
  %3342 = vdwg.mxu0
  %v3343 = vand.u32 %v2495, 4294901760
  %v3344 = vsub.f32 %v2495, %v3343
  %v3345 = vand.u32 %v3344, 4294901760
  %3346 = vmatprep.subr.mxu0 %v3345
  %v3347 = vand.u32 %v2494, 4294901760
  %v3348 = vsub.f32 %v2494, %v3347
  %v3349 = vand.u32 %v3348, 4294901760
  %3350 = vmatpush1.msra.mxu0 %v3349
  %v3351 = vand.u32 %v3010, 4294901760
  %v3352 = vsub.f32 %v3010, %v3351
  %v3353 = vand.u32 %v3352, 4294901760
  %3354 = vmatprep.subr.mxu0 %v3353
  %v3355 = vand.u32 %v3007, 4294901760
  %v3356 = vsub.f32 %v3007, %v3355
  %v3357 = vand.u32 %v3356, 4294901760
  %3358 = vmatpush1.msra.mxu0 %v3357
  %3359 = vmatprep.subr.mxu0 0.0
  %3360 = vmatpush1.msra.mxu0 0.0
  %3361 = vmatprep.subr.mxu0 0.0
  %3362 = vmatpush1.msra.mxu0 0.0
  %3363 = vmatprep.subr.mxu0 0.0
  %3364 = vmatpush1.msra.mxu0 0.0
  %3365 = vmatprep.subr.mxu0 0.0
  %3366 = vmatpush1.msra.mxu0 0.0
  %3367 = vmatprep.subr.mxu0 0.0
  %3368 = vmatpush1.msra.mxu0 0.0
  %3369 = vmatprep.subr.mxu0 0.0
  %3370 = vmatpush1.msra.mxu0 0.0
  %3371 = vmatprep.subr.mxu0 0.0
  %3372 = vmatpush1.msra.mxu0 0.0
  %3373 = vmatprep.subr.mxu0 0.0
  %3374 = vmatpush1.msra.mxu0 0.0
  %3375 = vmatprep.subr.mxu0 0.0
  %3376 = vmatpush1.msra.mxu0 0.0
  %3377 = vmatprep.subr.mxu0 0.0
  %3378 = vmatpush1.msra.mxu0 0.0
  %3379 = vmatprep.subr.mxu0 0.0
  %3380 = vmatpush1.msra.mxu0 0.0
  %3381 = vmatprep.subr.mxu0 0.0
  %3382 = vmatpush1.msra.mxu0 0.0
  %3383 = vmatprep.subr.mxu0 0.0
  %3384 = vmatpush1.msra.mxu0 0.0
  %3385 = vmatprep.subr.mxu0 0.0
  %3386 = vmatpush1.msra.mxu0 0.0
  %3387 = vmatprep.subr.mxu0 0.0
  %3388 = vmatpush1.msra.mxu0 0.0
  %3389 = vmatprep.subr.mxu0 0.0
  %3390 = vmatpush1.msra.mxu0 0.0
  %3391 = vmatprep.subr.mxu0 0.0
  %3392 = vmatpush1.msra.mxu0 0.0
  %3393 = vmatprep.subr.mxu0 0.0
  %3394 = vmatpush1.msra.mxu0 0.0
  %3395 = vmatprep.subr.mxu0 0.0
  %3396 = vmatpush1.msra.mxu0 0.0
  %3397 = vmatprep.subr.mxu0 0.0
  %3398 = vmatpush1.msra.mxu0 0.0
  %3399 = vmatprep.subr.mxu0 0.0
  %3400 = vmatpush1.msra.mxu0 0.0
  %3401 = vmatprep.subr.mxu0 0.0
  %3402 = vmatpush1.msra.mxu0 0.0
  %3403 = vmatprep.subr.mxu0 0.0
  %3404 = vmatpush1.msra.mxu0 0.0
  %3405 = vmatprep.subr.mxu0 0.0
  %3406 = vmatpush1.msra.mxu0 0.0
  %3407 = vmatprep.subr.mxu0 0.0
  %3408 = vmatpush1.msra.mxu0 0.0
  %3409 = vmatprep.subr.mxu0 0.0
  %3410 = vmatpush1.msra.mxu0 0.0
  %3411 = vmatprep.subr.mxu0 0.0
  %3412 = vmatpush1.msra.mxu0 0.0
  %3413 = vmatprep.subr.mxu0 0.0
  %3414 = vmatpush1.msra.mxu0 0.0
  %3415 = vmatprep.subr.mxu0 0.0
  %3416 = vmatpush1.msra.mxu0 0.0
  %3417 = vmatprep.subr.mxu0 0.0
  %3418 = vmatpush1.msra.mxu0 0.0
  %3419 = vmatprep.mubr.f32.mxu0 0.0
  %v3420 = vand.u32 %v2507, 4294901760
  %3421 = vmatmul.mubr.f32.gmra.mrb[0].mxu0 %v3420
  %v3422 = vpop.f32.mrb[0].mxu0
  %v3423 = vadd.f32 %v3339, %v3422
  %v3424 = vpop.f32.mrb[0].mxu0
  %v3425 = vadd.f32 %v3341, %v3424
  %3426 = vdwg.mxu0
  %v3427 = vand.u32 %v2495, 4294901760
  %3428 = vmatprep.subr.mxu0 %v3427
  %v3429 = vand.u32 %v2494, 4294901760
  %3430 = vmatpush1.msra.mxu0 %v3429
  %v3431 = vand.u32 %v3010, 4294901760
  %3432 = vmatprep.subr.mxu0 %v3431
  %v3433 = vand.u32 %v3007, 4294901760
  %3434 = vmatpush1.msra.mxu0 %v3433
  %3435 = vmatprep.subr.mxu0 0.0
  %3436 = vmatpush1.msra.mxu0 0.0
  %3437 = vmatprep.subr.mxu0 0.0
  %3438 = vmatpush1.msra.mxu0 0.0
  %3439 = vmatprep.subr.mxu0 0.0
  %3440 = vmatpush1.msra.mxu0 0.0
  %3441 = vmatprep.subr.mxu0 0.0
  %3442 = vmatpush1.msra.mxu0 0.0
  %3443 = vmatprep.subr.mxu0 0.0
  %3444 = vmatpush1.msra.mxu0 0.0
  %3445 = vmatprep.subr.mxu0 0.0
  %3446 = vmatpush1.msra.mxu0 0.0
  %3447 = vmatprep.subr.mxu0 0.0
  %3448 = vmatpush1.msra.mxu0 0.0
  %3449 = vmatprep.subr.mxu0 0.0
  %3450 = vmatpush1.msra.mxu0 0.0
  %3451 = vmatprep.subr.mxu0 0.0
  %3452 = vmatpush1.msra.mxu0 0.0
  %3453 = vmatprep.subr.mxu0 0.0
  %3454 = vmatpush1.msra.mxu0 0.0
  %3455 = vmatprep.subr.mxu0 0.0
  %3456 = vmatpush1.msra.mxu0 0.0
  %3457 = vmatprep.subr.mxu0 0.0
  %3458 = vmatpush1.msra.mxu0 0.0
  %3459 = vmatprep.subr.mxu0 0.0
  %3460 = vmatpush1.msra.mxu0 0.0
  %3461 = vmatprep.subr.mxu0 0.0
  %3462 = vmatpush1.msra.mxu0 0.0
  %3463 = vmatprep.subr.mxu0 0.0
  %3464 = vmatpush1.msra.mxu0 0.0
  %3465 = vmatprep.subr.mxu0 0.0
  %3466 = vmatpush1.msra.mxu0 0.0
  %3467 = vmatprep.subr.mxu0 0.0
  %3468 = vmatpush1.msra.mxu0 0.0
  %3469 = vmatprep.subr.mxu0 0.0
  %3470 = vmatpush1.msra.mxu0 0.0
  %3471 = vmatprep.subr.mxu0 0.0
  %3472 = vmatpush1.msra.mxu0 0.0
  %3473 = vmatprep.subr.mxu0 0.0
  %3474 = vmatpush1.msra.mxu0 0.0
  %3475 = vmatprep.subr.mxu0 0.0
  %3476 = vmatpush1.msra.mxu0 0.0
  %3477 = vmatprep.subr.mxu0 0.0
  %3478 = vmatpush1.msra.mxu0 0.0
  %3479 = vmatprep.subr.mxu0 0.0
  %3480 = vmatpush1.msra.mxu0 0.0
  %3481 = vmatprep.subr.mxu0 0.0
  %3482 = vmatpush1.msra.mxu0 0.0
  %3483 = vmatprep.subr.mxu0 0.0
  %3484 = vmatpush1.msra.mxu0 0.0
  %3485 = vmatprep.subr.mxu0 0.0
  %3486 = vmatpush1.msra.mxu0 0.0
  %3487 = vmatprep.subr.mxu0 0.0
  %3488 = vmatpush1.msra.mxu0 0.0
  %3489 = vmatprep.subr.mxu0 0.0
  %3490 = vmatpush1.msra.mxu0 0.0
  %3491 = vmatprep.subr.mxu0 0.0
  %3492 = vmatpush1.msra.mxu0 0.0
  %3493 = vmatprep.subr.mxu0 0.0
  %3494 = vmatpush1.msra.mxu0 0.0
  %3495 = vmatprep.mubr.f32.mxu0 0.0
  %v3496 = vand.u32 %v2507, 4294901760
  %3497 = vmatmul.mubr.f32.gmra.mrb[0].mxu0 %v3496
  %v3498 = vpop.f32.mrb[0].mxu0
  %v3499 = vadd.f32 %v3423, %v3498
  %v3500 = vpop.f32.mrb[0].mxu0
  %v3501 = vadd.f32 %v3425, %v3500
  %3502 = vdwg.mxu0
  %3503 = vrot.lane.b32.xlu0 %v3002, 48
  %v3504 = vpop.permute.xlu0 %3503
  %3505 = vrot.lane.b32.xlu0 %v3499, 48
  %v3506 = vpop.permute.xlu0 %3505
  %3507 = vrot.lane.b32.xlu0 %v3004, 48
  %v3508 = vpop.permute.xlu0 %3507
  %3509 = vrot.lane.b32.xlu0 %v3501, 48
  %v3510 = vpop.permute.xlu0 %3509
  %vm3511 = vcmp.lt.s32.totalorder %v2233, 48
  %v3512 = vsel %vm3511, %v3504, %v3508
  %v3513 = vsel %vm3511, %v3506, %v3510
  %v3514 = vsel %vm3511, %v3508, %v3504
  %v3515 = vsel %vm3511, %v3510, %v3506
  %v3516 = vld [vmem:[%s7] ss:$8 sm:$0x3]
  %v3518 = vlaneseq
  %v3519 = vshrl.u32 %v3518, 7
  %v3520 = vsub.s32 0, %v3519
  %v3521 = vrot.slane %v3516, %v3520
  %v3522 = vlaneseq
  %v3523 = vshrl.u32 %v3522, 7
  %v3524 = vsub.s32 1, %v3523
  %v3525 = vrot.slane %v3516, %v3524
  %v3528 = vmul.f32 %v3514, %v3521
  %v3529 = vmul.f32 %v3512, %v3525
  %v3530 = vmul.f32 %v3515, %v3521
  %v3531 = vmul.f32 %v3513, %v3525
  %v3532 = vadd.f32 %v3528, 0.0
  %v3533 = vadd.f32 %v3529, 0.0
  %v3534 = vadd.f32 %v3530, 0.0
  %v3535 = vadd.f32 %v3531, 0.0
  %v3540 = vrot.slane %v3002, 1
  %v3541 = vrot.slane %v3004, 1
  %v3542 = vrot.slane %v3499, 1
  %v3543 = vrot.slane %v3501, 1
  %3548 = vrot.lane.b32.xlu0 %v3540, 32
  %v3549 = vpop.permute.xlu0 %3548
  %3550 = vrot.lane.b32.xlu0 %v3542, 32
  %v3551 = vpop.permute.xlu0 %3550
  %3552 = vrot.lane.b32.xlu0 %v3541, 32
  %v3553 = vpop.permute.xlu0 %3552
  %3554 = vrot.lane.b32.xlu0 %v3543, 32
  %v3555 = vpop.permute.xlu0 %3554
  %vm3556 = vcmp.lt.s32.totalorder %v2233, 32
  %v3557 = vsel %vm3556, %v3549, %v3553
  %v3558 = vsel %vm3556, %v3551, %v3555
  %v3559 = vsel %vm3556, %v3553, %v3549
  %v3560 = vsel %vm3556, %v3555, %v3551
  %s3561 = scalar_lea.vmem %s7, 1
  %v3562 = vld [vmem:[%s3561] ss:$8 sm:$0x3]
  %v3564 = vlaneseq
  %v3565 = vshrl.u32 %v3564, 7
  %v3566 = vsub.s32 0, %v3565
  %v3567 = vrot.slane %v3562, %v3566
  %v3568 = vlaneseq
  %v3569 = vshrl.u32 %v3568, 7
  %v3570 = vsub.s32 1, %v3569
  %v3571 = vrot.slane %v3562, %v3570
  %v3574 = vmul.f32 %v3559, %v3567
  %v3575 = vmul.f32 %v3557, %v3571
  %v3576 = vmul.f32 %v3560, %v3567
  %v3577 = vmul.f32 %v3558, %v3571
  %v3578 = vadd.f32 %v3532, %v3574
  %v3579 = vadd.f32 %v3533, %v3575
  %v3580 = vadd.f32 %v3534, %v3576
  %v3581 = vadd.f32 %v3535, %v3577
  %v3582 = vrot.slane %v3002, 2
  %v3583 = vrot.slane %v3004, 2
  %v3584 = vrot.slane %v3499, 2
  %v3585 = vrot.slane %v3501, 2
  %3590 = vrot.lane.b32.xlu0 %v3582, 16
  %v3591 = vpop.permute.xlu0 %3590
  %3592 = vrot.lane.b32.xlu0 %v3584, 16
  %v3593 = vpop.permute.xlu0 %3592
  %3594 = vrot.lane.b32.xlu0 %v3583, 16
  %v3595 = vpop.permute.xlu0 %3594
  %3596 = vrot.lane.b32.xlu0 %v3585, 16
  %v3597 = vpop.permute.xlu0 %3596
  %vm3598 = vcmp.lt.s32.totalorder %v2233, 16
  %v3599 = vsel %vm3598, %v3591, %v3595
  %v3600 = vsel %vm3598, %v3593, %v3597
  %v3601 = vsel %vm3598, %v3595, %v3591
  %v3602 = vsel %vm3598, %v3597, %v3593
  %s3603 = scalar_lea.vmem %s7, 2
  %v3604 = vld [vmem:[%s3603] ss:$8 sm:$0x3]
  %v3606 = vlaneseq
  %v3607 = vshrl.u32 %v3606, 7
  %v3608 = vsub.s32 0, %v3607
  %v3609 = vrot.slane %v3604, %v3608
  %v3610 = vlaneseq
  %v3611 = vshrl.u32 %v3610, 7
  %v3612 = vsub.s32 1, %v3611
  %v3613 = vrot.slane %v3604, %v3612
  %v3616 = vmul.f32 %v3601, %v3609
  %v3617 = vmul.f32 %v3599, %v3613
  %v3618 = vmul.f32 %v3602, %v3609
  %v3619 = vmul.f32 %v3600, %v3613
  %v3620 = vadd.f32 %v3578, %v3616
  %v3621 = vadd.f32 %v3579, %v3617
  %v3622 = vadd.f32 %v3580, %v3618
  %v3623 = vadd.f32 %v3581, %v3619
  %s3624 = scalar_lea.vmem %s7, 3
  %v3625 = vld [vmem:[%s3624] ss:$8 sm:$0x3]
  %v3627 = vlaneseq
  %v3628 = vshrl.u32 %v3627, 7
  %v3629 = vsub.s32 0, %v3628
  %v3630 = vrot.slane %v3625, %v3629
  %v3631 = vlaneseq
  %v3632 = vshrl.u32 %v3631, 7
  %v3633 = vsub.s32 1, %v3632
  %v3634 = vrot.slane %v3625, %v3633
  %v3637 = vmul.f32 %v3002, %v3630
  %v3638 = vmul.f32 %v3004, %v3634
  %v3639 = vmul.f32 %v3499, %v3630
  %v3640 = vmul.f32 %v3501, %v3634
  %v3645 = vrot.slane %v3637, 3
  %v3646 = vrot.slane %v3638, 3
  %v3647 = vrot.slane %v3639, 3
  %v3648 = vrot.slane %v3640, 3
  %v3653 = vadd.f32 %v3620, %v3645
  %v3654 = vadd.f32 %v3621, %v3646
  %v3655 = vadd.f32 %v3622, %v3647
  %v3656 = vadd.f32 %v3623, %v3648
  %v3657 = vrot.slane %v3002, 4
  %v3658 = vrot.slane %v3004, 4
  %v3659 = vrot.slane %v3499, 4
  %v3660 = vrot.slane %v3501, 4
  %3665 = vrot.lane.b32.xlu0 %v3657, 112
  %v3666 = vpop.permute.xlu0 %3665
  %3667 = vrot.lane.b32.xlu0 %v3659, 112
  %v3668 = vpop.permute.xlu0 %3667
  %3669 = vrot.lane.b32.xlu0 %v3658, 112
  %v3670 = vpop.permute.xlu0 %3669
  %3671 = vrot.lane.b32.xlu0 %v3660, 112
  %v3672 = vpop.permute.xlu0 %3671
  %vm3673 = vcmp.lt.s32.totalorder %v2233, 112
  %v3674 = vsel %vm3673, %v3666, %v3670
  %v3675 = vsel %vm3673, %v3668, %v3672
  %v3676 = vsel %vm3673, %v3670, %v3666
  %v3677 = vsel %vm3673, %v3672, %v3668
  %s3678 = scalar_lea.vmem %s7, 4
  %v3679 = vld [vmem:[%s3678] ss:$8 sm:$0x3]
  %v3681 = vlaneseq
  %v3682 = vshrl.u32 %v3681, 7
  %v3683 = vsub.s32 0, %v3682
  %v3684 = vrot.slane %v3679, %v3683
  %v3685 = vlaneseq
  %v3686 = vshrl.u32 %v3685, 7
  %v3687 = vsub.s32 1, %v3686
  %v3688 = vrot.slane %v3679, %v3687
  %v3691 = vmul.f32 %v3674, %v3684
  %v3692 = vmul.f32 %v3676, %v3688
  %v3693 = vmul.f32 %v3675, %v3684
  %v3694 = vmul.f32 %v3677, %v3688
  %v3695 = vadd.f32 %v3653, %v3691
  %v3696 = vadd.f32 %v3654, %v3692
  %v3697 = vadd.f32 %v3655, %v3693
  %v3698 = vadd.f32 %v3656, %v3694
  %v3699 = vrot.slane %v3002, 5
  %v3700 = vrot.slane %v3004, 5
  %v3701 = vrot.slane %v3499, 5
  %v3702 = vrot.slane %v3501, 5
  %3707 = vrot.lane.b32.xlu0 %v3699, 96
  %v3708 = vpop.permute.xlu0 %3707
  %3709 = vrot.lane.b32.xlu0 %v3701, 96
  %v3710 = vpop.permute.xlu0 %3709
  %3711 = vrot.lane.b32.xlu0 %v3700, 96
  %v3712 = vpop.permute.xlu0 %3711
  %3713 = vrot.lane.b32.xlu0 %v3702, 96
  %v3714 = vpop.permute.xlu0 %3713
  %vm3715 = vcmp.lt.s32.totalorder %v2233, 96
  %v3716 = vsel %vm3715, %v3708, %v3712
  %v3717 = vsel %vm3715, %v3710, %v3714
  %v3718 = vsel %vm3715, %v3712, %v3708
  %v3719 = vsel %vm3715, %v3714, %v3710
  %s3720 = scalar_lea.vmem %s7, 5
  %v3721 = vld [vmem:[%s3720] ss:$8 sm:$0x3]
  %v3723 = vlaneseq
  %v3724 = vshrl.u32 %v3723, 7
  %v3725 = vsub.s32 0, %v3724
  %v3726 = vrot.slane %v3721, %v3725
  %v3727 = vlaneseq
  %v3728 = vshrl.u32 %v3727, 7
  %v3729 = vsub.s32 1, %v3728
  %v3730 = vrot.slane %v3721, %v3729
  %v3733 = vmul.f32 %v3716, %v3726
  %v3734 = vmul.f32 %v3718, %v3730
  %v3735 = vmul.f32 %v3717, %v3726
  %v3736 = vmul.f32 %v3719, %v3730
  %v3737 = vadd.f32 %v3695, %v3733
  %v3738 = vadd.f32 %v3696, %v3734
  %v3739 = vadd.f32 %v3697, %v3735
  %v3740 = vadd.f32 %v3698, %v3736
  %v3741 = vrot.slane %v3002, 6
  %v3742 = vrot.slane %v3004, 6
  %v3743 = vrot.slane %v3499, 6
  %v3744 = vrot.slane %v3501, 6
  %3749 = vrot.lane.b32.xlu0 %v3741, 80
  %v3750 = vpop.permute.xlu0 %3749
  %3751 = vrot.lane.b32.xlu0 %v3743, 80
  %v3752 = vpop.permute.xlu0 %3751
  %3753 = vrot.lane.b32.xlu0 %v3742, 80
  %v3754 = vpop.permute.xlu0 %3753
  %3755 = vrot.lane.b32.xlu0 %v3744, 80
  %v3756 = vpop.permute.xlu0 %3755
  %vm3757 = vcmp.lt.s32.totalorder %v2233, 80
  %v3758 = vsel %vm3757, %v3750, %v3754
  %v3759 = vsel %vm3757, %v3752, %v3756
  %v3760 = vsel %vm3757, %v3754, %v3750
  %v3761 = vsel %vm3757, %v3756, %v3752
  %s3762 = scalar_lea.vmem %s7, 6
  %v3763 = vld [vmem:[%s3762] ss:$8 sm:$0x3]
  %v3765 = vlaneseq
  %v3766 = vshrl.u32 %v3765, 7
  %v3767 = vsub.s32 0, %v3766
  %v3768 = vrot.slane %v3763, %v3767
  %v3769 = vlaneseq
  %v3770 = vshrl.u32 %v3769, 7
  %v3771 = vsub.s32 1, %v3770
  %v3772 = vrot.slane %v3763, %v3771
  %v3775 = vmul.f32 %v3758, %v3768
  %v3776 = vmul.f32 %v3760, %v3772
  %v3777 = vmul.f32 %v3759, %v3768
  %v3778 = vmul.f32 %v3761, %v3772
  %v3779 = vadd.f32 %v3737, %v3775
  %v3780 = vadd.f32 %v3738, %v3776
  %v3781 = vadd.f32 %v3739, %v3777
  %v3782 = vadd.f32 %v3740, %v3778
  %v3783 = vmul.f32 %v3779, 0.999995
  %v3784 = vmul.f32 %v3780, 0.999995
  %v3785 = vmul.f32 %v3781, 0.999995
  %v3786 = vmul.f32 %v3782, 0.999995
  %v3787 = vxor.u32 %v3783, 2147483648
  %v3788 = vxor.u32 %v3784, 2147483648
  %v3789 = vxor.u32 %v3785, 2147483648
  %v3790 = vxor.u32 %v3786, 2147483648
  %v3791 = vmul.f32 %v3787, 1.442695
  %v3792 = vpow.pop %v3791
  %v3793 = vmul.f32 %v3788, 1.442695
  %v3794 = vpow.pop %v3793
  %v3795 = vmul.f32 %v3789, 1.442695
  %v3796 = vpow.pop %v3795
  %v3797 = vmul.f32 %v3790, 1.442695
  %v3798 = vpow.pop %v3797
  %v3799 = vadd.f32 %v3792, 1.0
  %v3800 = vadd.f32 %v3794, 1.0
  %v3801 = vadd.f32 %v3796, 1.0
  %v3802 = vadd.f32 %v3798, 1.0
  %v3803 = vrcp.pop %v3799
  %v3804 = vmul.f32 1.0, %v3803
  %v3805 = vrcp.pop %v3800
  %v3806 = vmul.f32 1.0, %v3805
  %v3807 = vrcp.pop %v3801
  %v3808 = vmul.f32 1.0, %v3807
  %v3809 = vrcp.pop %v3802
  %v3810 = vmul.f32 1.0, %v3809
  %v3811 = vlaneseq
  %v3812 = vshrl.u32 %v3811, 7
  %v3813 = vsub.s32 0, %v3812
  %v3814 = vrot.slane %v3804, %v3813
  %v3815 = vlaneseq
  %v3816 = vshrl.u32 %v3815, 7
  %v3817 = vsub.s32 0, %v3816
  %v3818 = vrot.slane %v3806, %v3817
  %v3819 = vlaneseq
  %v3820 = vshrl.u32 %v3819, 7
  %v3821 = vsub.s32 0, %v3820
  %v3822 = vrot.slane %v3808, %v3821
  %v3823 = vlaneseq
  %v3824 = vshrl.u32 %v3823, 7
  %v3825 = vsub.s32 0, %v3824
  %v3826 = vrot.slane %v3810, %v3825
  %v3827 = vmul.f32 %v2150, %v3814
  %v3828 = vmul.f32 %v2151, %v3818
  %v3829 = vmul.f32 %v2152, %v3814
  %v3830 = vmul.f32 %v2153, %v3818
  %v3831 = vmul.f32 %v2154, %v3822
  %v3832 = vmul.f32 %v2155, %v3826
  %v3833 = vmul.f32 %v2156, %v3822
  %v3834 = vmul.f32 %v2157, %v3826
  %3835 = vst [vmem:[%s8] sm:$0xff] %v3827
  %3836 = vst [vmem:[%s8 + $0x8] sm:$0xff] %v3828
  %3837 = vst [vmem:[%s8 + $0x10] sm:$0xff] %v3829
  %3838 = vst [vmem:[%s8 + $0x18] sm:$0xff] %v3830
  %3839 = vst [vmem:[%s8 + $0x20] sm:$0xff] %v3831
  %3840 = vst [vmem:[%s8 + $0x28] sm:$0xff] %v3832
  %3841 = vst [vmem:[%s8 + $0x30] sm:$0xff] %v3833
  %3842 = vst [vmem:[%s8 + $0x38] sm:$0xff] %v3834
  // Predicated region
  $region34: #{cbam_forward.1} parent=0 // pred_check
    _
  $region35: #{cbam_forward.1} parent=0 // pred_check_branch
    %3844 = sbr.rel (0) target = $region37
  $region36: #{cbam_forward.1} parent=0 // pred_region
    _
  $region37: #{cbam_forward.1} parent=0 // pred_fallthru
    _
  // Predicated region
  $region38: #{cbam_forward.1} parent=0 // pred_check
    _
  $region39: #{cbam_forward.1} parent=0 // pred_check_branch
    %3846 = sbr.rel (0) target = $region41
  $region40: #{cbam_forward.1} parent=0 // pred_region
    _
  $region41: #{cbam_forward.1} parent=0 // pred_fallthru
    _

</llo_original>
